<compile_context>
chip_gen: v5e
topology: v5e:2x2
jax: 0.10.0
libtpu: 0.0.40
codegen_flags: <defaults>
</compile_context>

<pallas_src>
import functools

import jax
import jax.numpy as jnp
import numpy as np
from jax.experimental import pallas as pl
from jax.experimental.pallas import tpu as pltpu

EMB = 64
EPS = 1e-5          # torch.nn.LayerNorm default eps
MAX_TM = 512        # largest row tile (512x128 f32 block = 256 KiB; VMEM is not a constraint)
BF16 = jnp.bfloat16


# ----------------------------------------------------------------------------
# in-kernel helpers
# ----------------------------------------------------------------------------
def _ln(x, g, b):
    mu = jnp.mean(x, axis=-1, keepdims=True)
    var = jnp.mean((x - mu) ** 2, axis=-1, keepdims=True)
    return (x - mu) * jax.lax.rsqrt(var + EPS) * g + b


def _dot(a, w):
    # bf16 x bf16 on the MXU, f32 accumulation.
    return jnp.dot(a, w, preferred_element_type=jnp.float32)


# ----------------------------------------------------------------------------
# Pallas kernels
# ----------------------------------------------------------------------------
def embed_kernel(x_ref, g_ref, be_ref, w1_ref, b1_ref, w2_ref, b2_ref, o_ref):
    # LayerNorm(F) -> Linear(F,64) -> ReLU -> Linear(64,64) -> ReLU    (bf16 out)
    h = _ln(x_ref[...].astype(jnp.float32), g_ref[...], be_ref[...])
    h = jnp.maximum(_dot(h.astype(BF16), w1_ref[...]) + b1_ref[...], 0.0)
    h = jnp.maximum(_dot(h.astype(BF16), w2_ref[...]) + b2_ref[...], 0.0)
    o_ref[...] = h.astype(o_ref.dtype)


def message_kernel(ts_ref, w_ts_ref, bl_ref, fg_ref, fb_ref, wf_ref, bf_ref, o_ref):
    # ts_ref: lane-dense (TM,128) bf16 = [tgt | src];  w_ts: (128,64) = [wl ; wr]
    # bl_ref already contains the folded edge contribution: bl + LN1(e)*we = bl + b_e*we
    pre = _dot(ts_ref[...], w_ts_ref[...]) + bl_ref[...]
    h = jnp.maximum(_ln(pre, fg_ref[...], fb_ref[...]), 0.0)
    o_ref[...] = (_dot(h.astype(BF16), wf_ref[...]) + bf_ref[...]).astype(o_ref.dtype)


def conv_out_kernel(agg_ref, right_ref, pg_ref, pb_ref, w1_ref, b1_ref, w2_ref,
                    b2_ref, o_ref):
    # output_module( cat[ LayerNorm(agg), right ] ) with a single K=128 matmul
    p = _ln(agg_ref[...], pg_ref[...], pb_ref[...])
    x = jnp.concatenate([p, right_ref[...].astype(jnp.float32)], axis=-1).astype(BF16)
    h = jnp.maximum(_dot(x, w1_ref[...]) + b1_ref[...], 0.0)
    o_ref[...] = (_dot(h.astype(BF16), w2_ref[...]) + b2_ref[...]).astype(o_ref.dtype)


def conv_out_head_kernel(agg_ref, right_ref, pg_ref, pb_ref, w1_ref, b1_ref,
                         w2_ref, b2_ref, hw1_ref, hb1_ref, o_ref):
    # Last conv layer fused with the scoring head's hidden Linear(64,64)+ReLU.
    p = _ln(agg_ref[...], pg_ref[...], pb_ref[...])
    x = jnp.concatenate([p, right_ref[...].astype(jnp.float32)], axis=-1).astype(BF16)
    h = jnp.maximum(_dot(x, w1_ref[...]) + b1_ref[...], 0.0)
    v = _dot(h.astype(BF16), w2_ref[...]) + b2_ref[...]
    hh = jnp.maximum(_dot(v.astype(BF16), hw1_ref[...]) + hb1_ref[...], 0.0)
    o_ref[...] = hh.astype(o_ref.dtype)


# ----------------------------------------------------------------------------
# generic row-tiled pallas_call wrapper
# ----------------------------------------------------------------------------
def _choose_tm(n):
    # Big tiles amortize the ~0.35us/step overhead; keep >=2 steps for megacore
    # (v7x) whenever the row count allows.  tm is a multiple of 16 (bf16 sublanes).
    if n >= 2 * MAX_TM:
        return MAX_TM
    half = (n + 1) // 2
    tm = ((half + 15) // 16) * 16
    return max(16, min(MAX_TM, tm))


def _pad_rows(x, tm):
    n = x.shape[0]
    npad = ((n + tm - 1) // tm) * tm
    if npad != n:
        x = jnp.pad(x, [(0, npad - n)] + [(0, 0)] * (x.ndim - 1))
    return x


def _row_call(kernel, row_inputs, weight_inputs, out_dim, out_dtype):
    n = row_inputs[0].shape[0]
    tm = _choose_tm(n)
    padded = [_pad_rows(r, tm) for r in row_inputs]
    npad = padded[0].shape[0]

    in_specs = [pl.BlockSpec((tm, r.shape[1]), lambda i: (i, 0)) for r in padded]
    # Weights are grid-invariant full blocks (constant index_map -> stay resident,
    # no re-issued DMA across grid steps).
    in_specs += [pl.BlockSpec(w.shape, lambda i: (0, 0)) for w in weight_inputs]

    out = pl.pallas_call(
        kernel,
        out_shape=jax.ShapeDtypeStruct((npad, out_dim), out_dtype),
        grid_spec=pltpu.PrefetchScalarGridSpec(
            num_scalar_prefetch=0,
            grid=(npad // tm,),
            in_specs=in_specs,
            out_specs=pl.BlockSpec((tm, out_dim), lambda i: (i, 0)),
        ),
        compiler_params=pltpu.CompilerParams(dimension_semantics=("parallel",)),
    )(*padded, *weight_inputs)
    return out[:n]


# ----------------------------------------------------------------------------
# parameter preparation (one-time folds / stacks / bf16 casts)
# ----------------------------------------------------------------------------
def _prepare(params):
    def _bf(w):
        return w.astype(BF16)

    prep = {}
    for name in ("cons_emb", "var_emb"):
        p = params[name]
        prep[name] = dict(g=p["g"], b=p["b"], w1=_bf(p["w1"]), b1=p["b1"],
                          w2=_bf(p["w2"]), b2=p["b2"])

    # LayerNorm over a width-1 feature is identically its bias (x - mean == 0),
    # exactly as in the torch module -> fold edge_embedding through the
    # (bias-free) feature_module_edge Linear into a constant bias term.
    e_b = params["edge_emb"]["b"]                       # (1, 1)

    for name in ("conv_v_to_c", "conv_c_to_v", "conv_v_to_c2", "conv_c_to_v2"):
        p = params[name]
        prep[name] = dict(
            w_ts=_bf(jnp.concatenate([p["wl"], p["wr"]], axis=0)),   # (128, 64)
            bl_eff=p["bl"] + e_b * p["we"],                          # (1, 64) f32
            fg=p["fg"], fb=p["fb"], wf=_bf(p["wf"]), bf=p["bf"],
            pg=p["pg"], pb=p["pb"],
            w1=_bf(jnp.concatenate([p["w1a"], p["w1b"]], axis=0)),   # (128, 64)
            b1=p["b1"], w2=_bf(p["w2"]), b2=p["b2"])

    prep["out"] = dict(w1=_bf(params["out"]["w1"]), b1=params["out"]["b1"],
                       w2=_bf(params["out"]["w2"]))
    return prep


# ----------------------------------------------------------------------------
# model pieces (Pallas path)
# ----------------------------------------------------------------------------
def embed(p, x):
    return _row_call(embed_kernel, [x],
                     [p["g"], p["b"], p["w1"], p["b1"], p["w2"], p["b2"]],
                     EMB, BF16)


def bipartite_conv(p, left, edge_idx, right, head=None):
    # edge_idx: (2, E) int32; row 0 indexes `left` (source j), row 1 indexes
    # `right` (target i).  left/right are bf16 (N, 64).
    src = jnp.take(left, edge_idx[0], axis=0)            # glue: gather (bf16)
    tgt = jnp.take(right, edge_idx[1], axis=0)           # glue: gather (bf16)
    ts = jnp.concatenate([tgt, src], axis=-1)            # lane-dense (E, 128) bf16
    msgs = _row_call(
        message_kernel, [ts],
        [p["w_ts"], p["bl_eff"], p["fg"], p["fb"], p["wf"], p["bf"]],
        EMB, BF16)
    # glue: scatter-add aggregation ('add' MessagePassing), accumulated in f32
    agg = jax.ops.segment_sum(msgs.astype(jnp.float32), edge_idx[1],
                              num_segments=right.shape[0])
    if head is None:
        return _row_call(
            conv_out_kernel, [agg, right],
            [p["pg"], p["pb"], p["w1"], p["b1"], p["w2"], p["b2"]],
            EMB, BF16)
    return _row_call(
        conv_out_head_kernel, [agg, right],
        [p["pg"], p["pb"], p["w1"], p["b1"], p["w2"], p["b2"],
         head["w1"], head["b1"]],
        EMB, BF16)


def gnn_forward(params, constraint_features, edge_indices, edge_features,
                variable_features):
    prep = _prepare(params)
    # edge_features only enter the module through LayerNorm(1), which always
    # returns its bias -> folded into bl_eff above (identical math).
    del edge_features
    rev = jnp.stack([edge_indices[1], edge_indices[0]], axis=0)
    c = embed(prep["cons_emb"], constraint_features)
    v = embed(prep["var_emb"], variable_features)
    c = bipartite_conv(prep["conv_v_to_c"], v, rev, c)
    v = bipartite_conv(prep["conv_c_to_v"], c, edge_indices, v)
    c = bipartite_conv(prep["conv_v_to_c2"], v, rev, c)
    hh = bipartite_conv(prep["conv_c_to_v2"], c, edge_indices, v, head=prep["out"])
    # Final Linear(64, 1, bias=False) in plain JAX: trivially cheap and avoids a
    # lane-1 (masked vst) kernel output.
    out = jnp.dot(hh, prep["out"]["w2"], preferred_element_type=jnp.float32)
    return out[:, 0]   # squeeze(-1)


# ----------------------------------------------------------------------------
# pure-JAX reference (mirrors the PyTorch module structure; applies the same
# bf16 casts at the points where operands enter the 64/128-wide matmuls)
# ----------------------------------------------------------------------------
def ref_ln(x, g, b):
    mu = x.mean(-1, keepdims=True)
    var = ((x - mu) ** 2).mean(-1, keepdims=True)
    return (x - mu) / jnp.sqrt(var + EPS) * g + b


def _rdot(a, w):
    return jnp.dot(a.astype(BF16), w.astype(BF16), preferred_element_type=jnp.float32)


def ref_embed(p, x):
    h = ref_ln(x, p["g"], p["b"])
    h = jnp.maximum(_rdot(h, p["w1"]) + p["b1"], 0.0)
    h = jnp.maximum(_rdot(h, p["w2"]) + p["b2"], 0.0)
    return h.astype(BF16)


def ref_conv(p, left, ei, ef_ln, right, head=None):
    src = left[ei[0]]
    tgt = right[ei[1]]
    pre = (_rdot(tgt, p["wl"]) + p["bl"] + ef_ln @ p["we"] + _rdot(src, p["wr"]))
    msg = (_rdot(jnp.maximum(ref_ln(pre, p["fg"], p["fb"]), 0.0), p["wf"])
           + p["bf"]).astype(BF16)
    agg = jax.ops.segment_sum(msg.astype(jnp.float32), ei[1],
                              num_segments=right.shape[0])
    pc = ref_ln(agg, p["pg"], p["pb"])
    h = jnp.maximum(_rdot(pc, p["w1a"]) + _rdot(right, p["w1b"]) + p["b1"], 0.0)
    out = _rdot(h, p["w2"]) + p["b2"]
    if head is None:
        return out.astype(BF16)
    return jnp.maximum(_rdot(out, head["w1"]) + head["b1"], 0.0).astype(BF16)


def ref_forward(params, cons, ei, ef, var):
    rev = jnp.stack([ei[1], ei[0]], axis=0)
    c = ref_embed(params["cons_emb"], cons)
    ef_ln = ref_ln(ef, params["edge_emb"]["g"], params["edge_emb"]["b"])
    v = ref_embed(params["var_emb"], var)
    c = ref_conv(params["conv_v_to_c"], v, rev, ef_ln, c)
    v = ref_conv(params["conv_c_to_v"], c, ei, ef_ln, v)
    c = ref_conv(params["conv_v_to_c2"], v, rev, ef_ln, c)
    hh = ref_conv(params["conv_c_to_v2"], c, ei, ef_ln, v, head=params["out"])
    return jnp.dot(hh, params["out"]["w2"].astype(BF16),
                   preferred_element_type=jnp.float32)[:, 0]


# ----------------------------------------------------------------------------
# deterministic parameter construction (torch-like layout: W is (in, out))
# ----------------------------------------------------------------------------
def _init_params(key):
    ks = iter(jax.random.split(key, 128))

    def w(shape, scale=0.1):
        return (scale * jax.random.normal(next(ks), shape)).astype(jnp.float32)

    def emb_block(fin):
        return dict(g=1.0 + w((1, fin)), b=w((1, fin)),
                    w1=w((fin, EMB)), b1=w((1, EMB)),
                    w2=w((EMB, EMB)), b2=w((1, EMB)))

    def conv_block():
        return dict(wl=w((EMB, EMB)), bl=w((1, EMB)),
                    we=w((1, EMB)), wr=w((EMB, EMB)),
                    fg=1.0 + w((1, EMB)), fb=w((1, EMB)),
                    wf=w((EMB, EMB)), bf=w((1, EMB)),
                    pg=1.0 + w((1, EMB)), pb=w((1, EMB)),
                    # Linear(2*emb, emb) split into the two 64-wide input halves
                    w1a=w((EMB, EMB)), w1b=w((EMB, EMB)), b1=w((1, EMB)),
                    w2=w((EMB, EMB)), b2=w((1, EMB)))

    return dict(
        cons_emb=emb_block(4),
        edge_emb=dict(g=1.0 + w((1, 1)), b=w((1, 1))),
        var_emb=emb_block(18),
        conv_v_to_c=conv_block(),
        conv_c_to_v=conv_block(),
        conv_v_to_c2=conv_block(),
        conv_c_to_v2=conv_block(),
        out=dict(w1=w((EMB, EMB)), b1=w((1, EMB)), w2=w((EMB, 1))),
    )


# ----------------------------------------------------------------------------
if __name__ == "__main__":
    key = jax.random.PRNGKey(0)
    k_p, k_c, k_v, k_e, k_i0, k_i1 = jax.random.split(key, 6)

    n_cons, n_vars, n_edges = 50, 70, 200
    cons_nfeats, var_nfeats = 4, 18

    params = _init_params(k_p)

    constraint_features = jax.random.normal(k_c, (n_cons, cons_nfeats), jnp.float32)
    variable_features = jax.random.normal(k_v, (n_vars, var_nfeats), jnp.float32)
    edge_features = jax.random.normal(k_e, (n_edges, 1), jnp.float32)
    edge_indices = jnp.stack([
        jax.random.randint(k_i0, (n_edges,), 0, n_cons, dtype=jnp.int32),
        jax.random.randint(k_i1, (n_edges,), 0, n_vars, dtype=jnp.int32),
    ], axis=0)

    fwd = jax.jit(functools.partial(gnn_forward, params))
    out = fwd(constraint_features, edge_indices, edge_features, variable_features)
    out = jax.block_until_ready(out)

    ref = ref_forward(params, constraint_features, edge_indices, edge_features,
                      variable_features)
    np.testing.assert_allclose(np.asarray(out), np.asarray(ref),
                               rtol=1e-2, atol=1e-2)
    assert out.shape == (n_vars,)

    print("KERNEL_OK")
</pallas_src>

<mosaic_0001>
module attributes {stable_mosaic.version = 11 : i64} {
  func.func @embed_kernel(%arg0: i32, %arg1: memref<32x4xf32, #tpu.memory_space<vmem>>, %arg2: memref<1x4xf32, #tpu.memory_space<vmem>>, %arg3: memref<1x4xf32, #tpu.memory_space<vmem>>, %arg4: memref<4x64xbf16, #tpu.memory_space<vmem>>, %arg5: memref<1x64xf32, #tpu.memory_space<vmem>>, %arg6: memref<64x64xbf16, #tpu.memory_space<vmem>>, %arg7: memref<1x64xf32, #tpu.memory_space<vmem>>, %arg8: memref<32x64xbf16, #tpu.memory_space<vmem>>) attributes {dimension_semantics = [#tpu.dimension_semantics<parallel>], iteration_bounds = array<i64: 2>, scalar_prefetch = 0 : i64, scratch_operands = 0 : i64, tpu.core_type = #tpu.core_type<tc>, window_params = [{transform_indices = @transform_0, window_bounds = array<i64: 32, 4>}, {pipeline_mode = #tpu.pipeline_mode<synchronous>, transform_indices = @transform_1, window_bounds = array<i64: 1, 4>}, {pipeline_mode = #tpu.pipeline_mode<synchronous>, transform_indices = @transform_2, window_bounds = array<i64: 1, 4>}, {pipeline_mode = #tpu.pipeline_mode<synchronous>, transform_indices = @transform_3, window_bounds = array<i64: 4, 64>}, {pipeline_mode = #tpu.pipeline_mode<synchronous>, transform_indices = @transform_4, window_bounds = array<i64: 1, 64>}, {pipeline_mode = #tpu.pipeline_mode<synchronous>, transform_indices = @transform_5, window_bounds = array<i64: 64, 64>}, {pipeline_mode = #tpu.pipeline_mode<synchronous>, transform_indices = @transform_6, window_bounds = array<i64: 1, 64>}, {transform_indices = @transform_7, window_bounds = array<i64: 32, 64>}]} {
    %c0 = arith.constant 0 : index
    %c0_0 = arith.constant 0 : index
    %0 = vector.load %arg1[%c0, %c0_0] : memref<32x4xf32, #tpu.memory_space<vmem>>, vector<32x4xf32>
    %c0_1 = arith.constant 0 : index
    %c0_2 = arith.constant 0 : index
    %1 = vector.load %arg2[%c0_1, %c0_2] : memref<1x4xf32, #tpu.memory_space<vmem>>, vector<1x4xf32>
    %c0_3 = arith.constant 0 : index
    %c0_4 = arith.constant 0 : index
    %2 = vector.load %arg3[%c0_3, %c0_4] : memref<1x4xf32, #tpu.memory_space<vmem>>, vector<1x4xf32>
    %cst = arith.constant dense<0.000000e+00> : vector<32xf32>
    %3 = vector.multi_reduction <add>, %0, %cst [1] : vector<32x4xf32> to vector<32xf32>
    %4 = vector.shape_cast %3 : vector<32xf32> to vector<32x1xf32>
    %cst_5 = arith.constant 4.000000e+00 : f32
    %5 = vector.broadcast %cst_5 : f32 to vector<32x1xf32>
    %6 = arith.divf %4, %5 : vector<32x1xf32>
    %7 = vector.broadcast %6 : vector<32x1xf32> to vector<32x4xf32>
    %8 = arith.subf %0, %7 : vector<32x4xf32>
    %9 = arith.mulf %8, %8 : vector<32x4xf32>
    %cst_6 = arith.constant dense<0.000000e+00> : vector<32xf32>
    %10 = vector.multi_reduction <add>, %9, %cst_6 [1] : vector<32x4xf32> to vector<32xf32>
    %11 = vector.shape_cast %10 : vector<32xf32> to vector<32x1xf32>
    %cst_7 = arith.constant 4.000000e+00 : f32
    %12 = vector.broadcast %cst_7 : f32 to vector<32x1xf32>
    %13 = arith.divf %11, %12 : vector<32x1xf32>
    %14 = vector.broadcast %6 : vector<32x1xf32> to vector<32x4xf32>
    %15 = arith.subf %0, %14 : vector<32x4xf32>
    %cst_8 = arith.constant 9.99999974E-6 : f32
    %16 = vector.broadcast %cst_8 : f32 to vector<32x1xf32>
    %17 = arith.addf %13, %16 : vector<32x1xf32>
    %18 = math.rsqrt %17 : vector<32x1xf32>
    %19 = vector.broadcast %18 : vector<32x1xf32> to vector<32x4xf32>
    %20 = arith.mulf %15, %19 : vector<32x4xf32>
    %21 = vector.broadcast %1 : vector<1x4xf32> to vector<32x4xf32>
    %22 = arith.mulf %20, %21 : vector<32x4xf32>
    %23 = vector.broadcast %2 : vector<1x4xf32> to vector<32x4xf32>
    %24 = arith.addf %22, %23 : vector<32x4xf32>
    %25 = arith.truncf %24 : vector<32x4xf32> to vector<32x4xbf16>
    %c0_9 = arith.constant 0 : index
    %c0_10 = arith.constant 0 : index
    %26 = vector.load %arg4[%c0_9, %c0_10] : memref<4x64xbf16, #tpu.memory_space<vmem>>, vector<4x64xbf16>
    %cst_11 = arith.constant dense<0.000000e+00> : vector<32x64xf32>
    %27 = tpu.matmul %25, %26, %cst_11 {dimension_numbers = #tpu.dot_dimension_numbers<[1], [0], [0], [1], [0, 0, 1, 1], [], []>} : vector<32x4xbf16>, vector<4x64xbf16>, vector<32x64xf32> -> vector<32x64xf32>
    %c0_12 = arith.constant 0 : index
    %c0_13 = arith.constant 0 : index
    %28 = vector.load %arg5[%c0_12, %c0_13] : memref<1x64xf32, #tpu.memory_space<vmem>>, vector<1x64xf32>
    %29 = vector.broadcast %28 : vector<1x64xf32> to vector<32x64xf32>
    %30 = arith.addf %27, %29 : vector<32x64xf32>
    %cst_14 = arith.constant 0.000000e+00 : f32
    %31 = vector.broadcast %cst_14 : f32 to vector<32x64xf32>
    %32 = arith.maximumf %30, %31 : vector<32x64xf32>
    %33 = arith.truncf %32 : vector<32x64xf32> to vector<32x64xbf16>
    %c0_15 = arith.constant 0 : index
    %c0_16 = arith.constant 0 : index
    %34 = vector.load %arg6[%c0_15, %c0_16] : memref<64x64xbf16, #tpu.memory_space<vmem>>, vector<64x64xbf16>
    %cst_17 = arith.constant dense<0.000000e+00> : vector<32x64xf32>
    %35 = tpu.matmul %33, %34, %cst_17 {dimension_numbers = #tpu.dot_dimension_numbers<[1], [0], [0], [1], [0, 0, 1, 1], [], []>} : vector<32x64xbf16>, vector<64x64xbf16>, vector<32x64xf32> -> vector<32x64xf32>
    %c0_18 = arith.constant 0 : index
    %c0_19 = arith.constant 0 : index
    %36 = vector.load %arg7[%c0_18, %c0_19] : memref<1x64xf32, #tpu.memory_space<vmem>>, vector<1x64xf32>
    %37 = vector.broadcast %36 : vector<1x64xf32> to vector<32x64xf32>
    %38 = arith.addf %35, %37 : vector<32x64xf32>
    %cst_20 = arith.constant 0.000000e+00 : f32
    %39 = vector.broadcast %cst_20 : f32 to vector<32x64xf32>
    %40 = arith.maximumf %38, %39 : vector<32x64xf32>
    %41 = arith.truncf %40 : vector<32x64xf32> to vector<32x64xbf16>
    %c0_21 = arith.constant 0 : index
    %c0_22 = arith.constant 0 : index
    %42 = vector.load %arg8[%c0_21, %c0_22] : memref<32x64xbf16, #tpu.memory_space<vmem>>, vector<32x64xbf16>
    tpu.vector_store %arg8[%c0_21, %c0_22], %41 {strides = array<i32>} : memref<32x64xbf16, #tpu.memory_space<vmem>>, vector<32x64xbf16>,
    return
  }
  func.func @transform_0(%arg0: i32) -> (i32, i32) {
    %c0_i32 = arith.constant 0 : i32
    %c0_i32_0 = arith.constant 0 : i32
    return %arg0, %c0_i32 : i32, i32
  }
  func.func @transform_1(%arg0: i32) -> (i32, i32) {
    %c0_i32 = arith.constant 0 : i32
    %c0_i32_0 = arith.constant 0 : i32
    %c0_i32_1 = arith.constant 0 : i32
    return %c0_i32, %c0_i32_0 : i32, i32
  }
  func.func @transform_2(%arg0: i32) -> (i32, i32) {
    %c0_i32 = arith.constant 0 : i32
    %c0_i32_0 = arith.constant 0 : i32
    %c0_i32_1 = arith.constant 0 : i32
    return %c0_i32, %c0_i32_0 : i32, i32
  }
  func.func @transform_3(%arg0: i32) -> (i32, i32) {
    %c0_i32 = arith.constant 0 : i32
    %c0_i32_0 = arith.constant 0 : i32
    %c0_i32_1 = arith.constant 0 : i32
    return %c0_i32, %c0_i32_0 : i32, i32
  }
  func.func @transform_4(%arg0: i32) -> (i32, i32) {
    %c0_i32 = arith.constant 0 : i32
    %c0_i32_0 = arith.constant 0 : i32
    %c0_i32_1 = arith.constant 0 : i32
    return %c0_i32, %c0_i32_0 : i32, i32
  }
  func.func @transform_5(%arg0: i32) -> (i32, i32) {
    %c0_i32 = arith.constant 0 : i32
    %c0_i32_0 = arith.constant 0 : i32
    %c0_i32_1 = arith.constant 0 : i32
    return %c0_i32, %c0_i32_0 : i32, i32
  }
  func.func @transform_6(%arg0: i32) -> (i32, i32) {
    %c0_i32 = arith.constant 0 : i32
    %c0_i32_0 = arith.constant 0 : i32
    %c0_i32_1 = arith.constant 0 : i32
    return %c0_i32, %c0_i32_0 : i32, i32
  }
  func.func @transform_7(%arg0: i32) -> (i32, i32) {
    %c0_i32 = arith.constant 0 : i32
    %c0_i32_0 = arith.constant 0 : i32
    return %arg0, %c0_i32 : i32, i32
  }
}

module attributes {stable_mosaic.version = 11 : i64} {
  func.func @embed_kernel(%arg0: i32, %arg1: memref<48x18xf32, #tpu.memory_space<vmem>>, %arg2: memref<1x18xf32, #tpu.memory_space<vmem>>, %arg3: memref<1x18xf32, #tpu.memory_space<vmem>>, %arg4: memref<18x64xbf16, #tpu.memory_space<vmem>>, %arg5: memref<1x64xf32, #tpu.memory_space<vmem>>, %arg6: memref<64x64xbf16, #tpu.memory_space<vmem>>, %arg7: memref<1x64xf32, #tpu.memory_space<vmem>>, %arg8: memref<48x64xbf16, #tpu.memory_space<vmem>>) attributes {dimension_semantics = [#tpu.dimension_semantics<parallel>], iteration_bounds = array<i64: 2>, scalar_prefetch = 0 : i64, scratch_operands = 0 : i64, tpu.core_type = #tpu.core_type<tc>, window_params = [{transform_indices = @transform_0, window_bounds = array<i64: 48, 18>}, {pipeline_mode = #tpu.pipeline_mode<synchronous>, transform_indices = @transform_1, window_bounds = array<i64: 1, 18>}, {pipeline_mode = #tpu.pipeline_mode<synchronous>, transform_indices = @transform_2, window_bounds = array<i64: 1, 18>}, {pipeline_mode = #tpu.pipeline_mode<synchronous>, transform_indices = @transform_3, window_bounds = array<i64: 18, 64>}, {pipeline_mode = #tpu.pipeline_mode<synchronous>, transform_indices = @transform_4, window_bounds = array<i64: 1, 64>}, {pipeline_mode = #tpu.pipeline_mode<synchronous>, transform_indices = @transform_5, window_bounds = array<i64: 64, 64>}, {pipeline_mode = #tpu.pipeline_mode<synchronous>, transform_indices = @transform_6, window_bounds = array<i64: 1, 64>}, {transform_indices = @transform_7, window_bounds = array<i64: 48, 64>}]} {
    %c0 = arith.constant 0 : index
    %c0_0 = arith.constant 0 : index
    %0 = vector.load %arg1[%c0, %c0_0] : memref<48x18xf32, #tpu.memory_space<vmem>>, vector<48x18xf32>
    %c0_1 = arith.constant 0 : index
    %c0_2 = arith.constant 0 : index
    %1 = vector.load %arg2[%c0_1, %c0_2] : memref<1x18xf32, #tpu.memory_space<vmem>>, vector<1x18xf32>
    %c0_3 = arith.constant 0 : index
    %c0_4 = arith.constant 0 : index
    %2 = vector.load %arg3[%c0_3, %c0_4] : memref<1x18xf32, #tpu.memory_space<vmem>>, vector<1x18xf32>
    %cst = arith.constant dense<0.000000e+00> : vector<48xf32>
    %3 = vector.multi_reduction <add>, %0, %cst [1] : vector<48x18xf32> to vector<48xf32>
    %4 = vector.shape_cast %3 : vector<48xf32> to vector<48x1xf32>
    %cst_5 = arith.constant 1.800000e+01 : f32
    %5 = vector.broadcast %cst_5 : f32 to vector<48x1xf32>
    %6 = arith.divf %4, %5 : vector<48x1xf32>
    %7 = vector.broadcast %6 : vector<48x1xf32> to vector<48x18xf32>
    %8 = arith.subf %0, %7 : vector<48x18xf32>
    %9 = arith.mulf %8, %8 : vector<48x18xf32>
    %cst_6 = arith.constant dense<0.000000e+00> : vector<48xf32>
    %10 = vector.multi_reduction <add>, %9, %cst_6 [1] : vector<48x18xf32> to vector<48xf32>
    %11 = vector.shape_cast %10 : vector<48xf32> to vector<48x1xf32>
    %cst_7 = arith.constant 1.800000e+01 : f32
    %12 = vector.broadcast %cst_7 : f32 to vector<48x1xf32>
    %13 = arith.divf %11, %12 : vector<48x1xf32>
    %14 = vector.broadcast %6 : vector<48x1xf32> to vector<48x18xf32>
    %15 = arith.subf %0, %14 : vector<48x18xf32>
    %cst_8 = arith.constant 9.99999974E-6 : f32
    %16 = vector.broadcast %cst_8 : f32 to vector<48x1xf32>
    %17 = arith.addf %13, %16 : vector<48x1xf32>
    %18 = math.rsqrt %17 : vector<48x1xf32>
    %19 = vector.broadcast %18 : vector<48x1xf32> to vector<48x18xf32>
    %20 = arith.mulf %15, %19 : vector<48x18xf32>
    %21 = vector.broadcast %1 : vector<1x18xf32> to vector<48x18xf32>
    %22 = arith.mulf %20, %21 : vector<48x18xf32>
    %23 = vector.broadcast %2 : vector<1x18xf32> to vector<48x18xf32>
    %24 = arith.addf %22, %23 : vector<48x18xf32>
    %25 = arith.truncf %24 : vector<48x18xf32> to vector<48x18xbf16>
    %c0_9 = arith.constant 0 : index
    %c0_10 = arith.constant 0 : index
    %26 = vector.load %arg4[%c0_9, %c0_10] : memref<18x64xbf16, #tpu.memory_space<vmem>>, vector<18x64xbf16>
    %cst_11 = arith.constant dense<0.000000e+00> : vector<48x64xf32>
    %27 = tpu.matmul %25, %26, %cst_11 {dimension_numbers = #tpu.dot_dimension_numbers<[1], [0], [0], [1], [0, 0, 1, 1], [], []>} : vector<48x18xbf16>, vector<18x64xbf16>, vector<48x64xf32> -> vector<48x64xf32>
    %c0_12 = arith.constant 0 : index
    %c0_13 = arith.constant 0 : index
    %28 = vector.load %arg5[%c0_12, %c0_13] : memref<1x64xf32, #tpu.memory_space<vmem>>, vector<1x64xf32>
    %29 = vector.broadcast %28 : vector<1x64xf32> to vector<48x64xf32>
    %30 = arith.addf %27, %29 : vector<48x64xf32>
    %cst_14 = arith.constant 0.000000e+00 : f32
    %31 = vector.broadcast %cst_14 : f32 to vector<48x64xf32>
    %32 = arith.maximumf %30, %31 : vector<48x64xf32>
    %33 = arith.truncf %32 : vector<48x64xf32> to vector<48x64xbf16>
    %c0_15 = arith.constant 0 : index
    %c0_16 = arith.constant 0 : index
    %34 = vector.load %arg6[%c0_15, %c0_16] : memref<64x64xbf16, #tpu.memory_space<vmem>>, vector<64x64xbf16>
    %cst_17 = arith.constant dense<0.000000e+00> : vector<48x64xf32>
    %35 = tpu.matmul %33, %34, %cst_17 {dimension_numbers = #tpu.dot_dimension_numbers<[1], [0], [0], [1], [0, 0, 1, 1], [], []>} : vector<48x64xbf16>, vector<64x64xbf16>, vector<48x64xf32> -> vector<48x64xf32>
    %c0_18 = arith.constant 0 : index
    %c0_19 = arith.constant 0 : index
    %36 = vector.load %arg7[%c0_18, %c0_19] : memref<1x64xf32, #tpu.memory_space<vmem>>, vector<1x64xf32>
    %37 = vector.broadcast %36 : vector<1x64xf32> to vector<48x64xf32>
    %38 = arith.addf %35, %37 : vector<48x64xf32>
    %cst_20 = arith.constant 0.000000e+00 : f32
    %39 = vector.broadcast %cst_20 : f32 to vector<48x64xf32>
    %40 = arith.maximumf %38, %39 : vector<48x64xf32>
    %41 = arith.truncf %40 : vector<48x64xf32> to vector<48x64xbf16>
    %c0_21 = arith.constant 0 : index
    %c0_22 = arith.constant 0 : index
    %42 = vector.load %arg8[%c0_21, %c0_22] : memref<48x64xbf16, #tpu.memory_space<vmem>>, vector<48x64xbf16>
    tpu.vector_store %arg8[%c0_21, %c0_22], %41 {strides = array<i32>} : memref<48x64xbf16, #tpu.memory_space<vmem>>, vector<48x64xbf16>,
    return
  }
  func.func @transform_0(%arg0: i32) -> (i32, i32) {
    %c0_i32 = arith.constant 0 : i32
    %c0_i32_0 = arith.constant 0 : i32
    return %arg0, %c0_i32 : i32, i32
  }
  func.func @transform_1(%arg0: i32) -> (i32, i32) {
    %c0_i32 = arith.constant 0 : i32
    %c0_i32_0 = arith.constant 0 : i32
    %c0_i32_1 = arith.constant 0 : i32
    return %c0_i32, %c0_i32_0 : i32, i32
  }
  func.func @transform_2(%arg0: i32) -> (i32, i32) {
    %c0_i32 = arith.constant 0 : i32
    %c0_i32_0 = arith.constant 0 : i32
    %c0_i32_1 = arith.constant 0 : i32
    return %c0_i32, %c0_i32_0 : i32, i32
  }
  func.func @transform_3(%arg0: i32) -> (i32, i32) {
    %c0_i32 = arith.constant 0 : i32
    %c0_i32_0 = arith.constant 0 : i32
    %c0_i32_1 = arith.constant 0 : i32
    return %c0_i32, %c0_i32_0 : i32, i32
  }
  func.func @transform_4(%arg0: i32) -> (i32, i32) {
    %c0_i32 = arith.constant 0 : i32
    %c0_i32_0 = arith.constant 0 : i32
    %c0_i32_1 = arith.constant 0 : i32
    return %c0_i32, %c0_i32_0 : i32, i32
  }
  func.func @transform_5(%arg0: i32) -> (i32, i32) {
    %c0_i32 = arith.constant 0 : i32
    %c0_i32_0 = arith.constant 0 : i32
    %c0_i32_1 = arith.constant 0 : i32
    return %c0_i32, %c0_i32_0 : i32, i32
  }
  func.func @transform_6(%arg0: i32) -> (i32, i32) {
    %c0_i32 = arith.constant 0 : i32
    %c0_i32_0 = arith.constant 0 : i32
    %c0_i32_1 = arith.constant 0 : i32
    return %c0_i32, %c0_i32_0 : i32, i32
  }
  func.func @transform_7(%arg0: i32) -> (i32, i32) {
    %c0_i32 = arith.constant 0 : i32
    %c0_i32_0 = arith.constant 0 : i32
    return %arg0, %c0_i32 : i32, i32
  }
}

module attributes {stable_mosaic.version = 11 : i64} {
  func.func @message_kernel(%arg0: i32, %arg1: memref<112x128xbf16, #tpu.memory_space<vmem>>, %arg2: memref<128x64xbf16, #tpu.memory_space<vmem>>, %arg3: memref<1x64xf32, #tpu.memory_space<vmem>>, %arg4: memref<1x64xf32, #tpu.memory_space<vmem>>, %arg5: memref<1x64xf32, #tpu.memory_space<vmem>>, %arg6: memref<64x64xbf16, #tpu.memory_space<vmem>>, %arg7: memref<1x64xf32, #tpu.memory_space<vmem>>, %arg8: memref<112x64xbf16, #tpu.memory_space<vmem>>) attributes {dimension_semantics = [#tpu.dimension_semantics<parallel>], iteration_bounds = array<i64: 2>, scalar_prefetch = 0 : i64, scratch_operands = 0 : i64, tpu.core_type = #tpu.core_type<tc>, window_params = [{transform_indices = @transform_0, window_bounds = array<i64: 112, 128>}, {pipeline_mode = #tpu.pipeline_mode<synchronous>, transform_indices = @transform_1, window_bounds = array<i64: 128, 64>}, {pipeline_mode = #tpu.pipeline_mode<synchronous>, transform_indices = @transform_2, window_bounds = array<i64: 1, 64>}, {pipeline_mode = #tpu.pipeline_mode<synchronous>, transform_indices = @transform_3, window_bounds = array<i64: 1, 64>}, {pipeline_mode = #tpu.pipeline_mode<synchronous>, transform_indices = @transform_4, window_bounds = array<i64: 1, 64>}, {pipeline_mode = #tpu.pipeline_mode<synchronous>, transform_indices = @transform_5, window_bounds = array<i64: 64, 64>}, {pipeline_mode = #tpu.pipeline_mode<synchronous>, transform_indices = @transform_6, window_bounds = array<i64: 1, 64>}, {transform_indices = @transform_7, window_bounds = array<i64: 112, 64>}]} {
    %c0 = arith.constant 0 : index
    %c0_0 = arith.constant 0 : index
    %0 = vector.load %arg1[%c0, %c0_0] : memref<112x128xbf16, #tpu.memory_space<vmem>>, vector<112x128xbf16>
    %c0_1 = arith.constant 0 : index
    %c0_2 = arith.constant 0 : index
    %1 = vector.load %arg2[%c0_1, %c0_2] : memref<128x64xbf16, #tpu.memory_space<vmem>>, vector<128x64xbf16>
    %cst = arith.constant dense<0.000000e+00> : vector<112x64xf32>
    %2 = tpu.matmul %0, %1, %cst {dimension_numbers = #tpu.dot_dimension_numbers<[1], [0], [0], [1], [0, 0, 1, 1], [], []>} : vector<112x128xbf16>, vector<128x64xbf16>, vector<112x64xf32> -> vector<112x64xf32>
    %c0_3 = arith.constant 0 : index
    %c0_4 = arith.constant 0 : index
    %3 = vector.load %arg3[%c0_3, %c0_4] : memref<1x64xf32, #tpu.memory_space<vmem>>, vector<1x64xf32>
    %4 = vector.broadcast %3 : vector<1x64xf32> to vector<112x64xf32>
    %5 = arith.addf %2, %4 : vector<112x64xf32>
    %c0_5 = arith.constant 0 : index
    %c0_6 = arith.constant 0 : index
    %6 = vector.load %arg4[%c0_5, %c0_6] : memref<1x64xf32, #tpu.memory_space<vmem>>, vector<1x64xf32>
    %c0_7 = arith.constant 0 : index
    %c0_8 = arith.constant 0 : index
    %7 = vector.load %arg5[%c0_7, %c0_8] : memref<1x64xf32, #tpu.memory_space<vmem>>, vector<1x64xf32>
    %cst_9 = arith.constant dense<0.000000e+00> : vector<112xf32>
    %8 = vector.multi_reduction <add>, %5, %cst_9 [1] : vector<112x64xf32> to vector<112xf32>
    %9 = vector.shape_cast %8 : vector<112xf32> to vector<112x1xf32>
    %cst_10 = arith.constant 6.400000e+01 : f32
    %10 = vector.broadcast %cst_10 : f32 to vector<112x1xf32>
    %11 = arith.divf %9, %10 : vector<112x1xf32>
    %12 = vector.broadcast %11 : vector<112x1xf32> to vector<112x64xf32>
    %13 = arith.subf %5, %12 : vector<112x64xf32>
    %14 = arith.mulf %13, %13 : vector<112x64xf32>
    %cst_11 = arith.constant dense<0.000000e+00> : vector<112xf32>
    %15 = vector.multi_reduction <add>, %14, %cst_11 [1] : vector<112x64xf32> to vector<112xf32>
    %16 = vector.shape_cast %15 : vector<112xf32> to vector<112x1xf32>
    %cst_12 = arith.constant 6.400000e+01 : f32
    %17 = vector.broadcast %cst_12 : f32 to vector<112x1xf32>
    %18 = arith.divf %16, %17 : vector<112x1xf32>
    %19 = vector.broadcast %11 : vector<112x1xf32> to vector<112x64xf32>
    %20 = arith.subf %5, %19 : vector<112x64xf32>
    %cst_13 = arith.constant 9.99999974E-6 : f32
    %21 = vector.broadcast %cst_13 : f32 to vector<112x1xf32>
    %22 = arith.addf %18, %21 : vector<112x1xf32>
    %23 = math.rsqrt %22 : vector<112x1xf32>
    %24 = vector.broadcast %23 : vector<112x1xf32> to vector<112x64xf32>
    %25 = arith.mulf %20, %24 : vector<112x64xf32>
    %26 = vector.broadcast %6 : vector<1x64xf32> to vector<112x64xf32>
    %27 = arith.mulf %25, %26 : vector<112x64xf32>
    %28 = vector.broadcast %7 : vector<1x64xf32> to vector<112x64xf32>
    %29 = arith.addf %27, %28 : vector<112x64xf32>
    %cst_14 = arith.constant 0.000000e+00 : f32
    %30 = vector.broadcast %cst_14 : f32 to vector<112x64xf32>
    %31 = arith.maximumf %29, %30 : vector<112x64xf32>
    %32 = arith.truncf %31 : vector<112x64xf32> to vector<112x64xbf16>
    %c0_15 = arith.constant 0 : index
    %c0_16 = arith.constant 0 : index
    %33 = vector.load %arg6[%c0_15, %c0_16] : memref<64x64xbf16, #tpu.memory_space<vmem>>, vector<64x64xbf16>
    %cst_17 = arith.constant dense<0.000000e+00> : vector<112x64xf32>
    %34 = tpu.matmul %32, %33, %cst_17 {dimension_numbers = #tpu.dot_dimension_numbers<[1], [0], [0], [1], [0, 0, 1, 1], [], []>} : vector<112x64xbf16>, vector<64x64xbf16>, vector<112x64xf32> -> vector<112x64xf32>
    %c0_18 = arith.constant 0 : index
    %c0_19 = arith.constant 0 : index
    %35 = vector.load %arg7[%c0_18, %c0_19] : memref<1x64xf32, #tpu.memory_space<vmem>>, vector<1x64xf32>
    %36 = vector.broadcast %35 : vector<1x64xf32> to vector<112x64xf32>
    %37 = arith.addf %34, %36 : vector<112x64xf32>
    %38 = arith.truncf %37 : vector<112x64xf32> to vector<112x64xbf16>
    %c0_20 = arith.constant 0 : index
    %c0_21 = arith.constant 0 : index
    %39 = vector.load %arg8[%c0_20, %c0_21] : memref<112x64xbf16, #tpu.memory_space<vmem>>, vector<112x64xbf16>
    tpu.vector_store %arg8[%c0_20, %c0_21], %38 {strides = array<i32>} : memref<112x64xbf16, #tpu.memory_space<vmem>>, vector<112x64xbf16>,
    return
  }
  func.func @transform_0(%arg0: i32) -> (i32, i32) {
    %c0_i32 = arith.constant 0 : i32
    %c0_i32_0 = arith.constant 0 : i32
    return %arg0, %c0_i32 : i32, i32
  }
  func.func @transform_1(%arg0: i32) -> (i32, i32) {
    %c0_i32 = arith.constant 0 : i32
    %c0_i32_0 = arith.constant 0 : i32
    %c0_i32_1 = arith.constant 0 : i32
    return %c0_i32, %c0_i32_0 : i32, i32
  }
  func.func @transform_2(%arg0: i32) -> (i32, i32) {
    %c0_i32 = arith.constant 0 : i32
    %c0_i32_0 = arith.constant 0 : i32
    %c0_i32_1 = arith.constant 0 : i32
    return %c0_i32, %c0_i32_0 : i32, i32
  }
  func.func @transform_3(%arg0: i32) -> (i32, i32) {
    %c0_i32 = arith.constant 0 : i32
    %c0_i32_0 = arith.constant 0 : i32
    %c0_i32_1 = arith.constant 0 : i32
    return %c0_i32, %c0_i32_0 : i32, i32
  }
  func.func @transform_4(%arg0: i32) -> (i32, i32) {
    %c0_i32 = arith.constant 0 : i32
    %c0_i32_0 = arith.constant 0 : i32
    %c0_i32_1 = arith.constant 0 : i32
    return %c0_i32, %c0_i32_0 : i32, i32
  }
  func.func @transform_5(%arg0: i32) -> (i32, i32) {
    %c0_i32 = arith.constant 0 : i32
    %c0_i32_0 = arith.constant 0 : i32
    %c0_i32_1 = arith.constant 0 : i32
    return %c0_i32, %c0_i32_0 : i32, i32
  }
  func.func @transform_6(%arg0: i32) -> (i32, i32) {
    %c0_i32 = arith.constant 0 : i32
    %c0_i32_0 = arith.constant 0 : i32
    %c0_i32_1 = arith.constant 0 : i32
    return %c0_i32, %c0_i32_0 : i32, i32
  }
  func.func @transform_7(%arg0: i32) -> (i32, i32) {
    %c0_i32 = arith.constant 0 : i32
    %c0_i32_0 = arith.constant 0 : i32
    return %arg0, %c0_i32 : i32, i32
  }
}

module attributes {stable_mosaic.version = 11 : i64} {
  func.func @conv_out_kernel(%arg0: i32, %arg1: memref<32x64xf32, #tpu.memory_space<vmem>>, %arg2: memref<32x64xbf16, #tpu.memory_space<vmem>>, %arg3: memref<1x64xf32, #tpu.memory_space<vmem>>, %arg4: memref<1x64xf32, #tpu.memory_space<vmem>>, %arg5: memref<128x64xbf16, #tpu.memory_space<vmem>>, %arg6: memref<1x64xf32, #tpu.memory_space<vmem>>, %arg7: memref<64x64xbf16, #tpu.memory_space<vmem>>, %arg8: memref<1x64xf32, #tpu.memory_space<vmem>>, %arg9: memref<32x64xbf16, #tpu.memory_space<vmem>>) attributes {dimension_semantics = [#tpu.dimension_semantics<parallel>], iteration_bounds = array<i64: 2>, scalar_prefetch = 0 : i64, scratch_operands = 0 : i64, tpu.core_type = #tpu.core_type<tc>, window_params = [{transform_indices = @transform_0, window_bounds = array<i64: 32, 64>}, {transform_indices = @transform_1, window_bounds = array<i64: 32, 64>}, {pipeline_mode = #tpu.pipeline_mode<synchronous>, transform_indices = @transform_2, window_bounds = array<i64: 1, 64>}, {pipeline_mode = #tpu.pipeline_mode<synchronous>, transform_indices = @transform_3, window_bounds = array<i64: 1, 64>}, {pipeline_mode = #tpu.pipeline_mode<synchronous>, transform_indices = @transform_4, window_bounds = array<i64: 128, 64>}, {pipeline_mode = #tpu.pipeline_mode<synchronous>, transform_indices = @transform_5, window_bounds = array<i64: 1, 64>}, {pipeline_mode = #tpu.pipeline_mode<synchronous>, transform_indices = @transform_6, window_bounds = array<i64: 64, 64>}, {pipeline_mode = #tpu.pipeline_mode<synchronous>, transform_indices = @transform_7, window_bounds = array<i64: 1, 64>}, {transform_indices = @transform_8, window_bounds = array<i64: 32, 64>}]} {
    %c0 = arith.constant 0 : index
    %c0_0 = arith.constant 0 : index
    %0 = vector.load %arg1[%c0, %c0_0] : memref<32x64xf32, #tpu.memory_space<vmem>>, vector<32x64xf32>
    %c0_1 = arith.constant 0 : index
    %c0_2 = arith.constant 0 : index
    %1 = vector.load %arg3[%c0_1, %c0_2] : memref<1x64xf32, #tpu.memory_space<vmem>>, vector<1x64xf32>
    %c0_3 = arith.constant 0 : index
    %c0_4 = arith.constant 0 : index
    %2 = vector.load %arg4[%c0_3, %c0_4] : memref<1x64xf32, #tpu.memory_space<vmem>>, vector<1x64xf32>
    %cst = arith.constant dense<0.000000e+00> : vector<32xf32>
    %3 = vector.multi_reduction <add>, %0, %cst [1] : vector<32x64xf32> to vector<32xf32>
    %4 = vector.shape_cast %3 : vector<32xf32> to vector<32x1xf32>
    %cst_5 = arith.constant 6.400000e+01 : f32
    %5 = vector.broadcast %cst_5 : f32 to vector<32x1xf32>
    %6 = arith.divf %4, %5 : vector<32x1xf32>
    %7 = vector.broadcast %6 : vector<32x1xf32> to vector<32x64xf32>
    %8 = arith.subf %0, %7 : vector<32x64xf32>
    %9 = arith.mulf %8, %8 : vector<32x64xf32>
    %cst_6 = arith.constant dense<0.000000e+00> : vector<32xf32>
    %10 = vector.multi_reduction <add>, %9, %cst_6 [1] : vector<32x64xf32> to vector<32xf32>
    %11 = vector.shape_cast %10 : vector<32xf32> to vector<32x1xf32>
    %cst_7 = arith.constant 6.400000e+01 : f32
    %12 = vector.broadcast %cst_7 : f32 to vector<32x1xf32>
    %13 = arith.divf %11, %12 : vector<32x1xf32>
    %14 = vector.broadcast %6 : vector<32x1xf32> to vector<32x64xf32>
    %15 = arith.subf %0, %14 : vector<32x64xf32>
    %cst_8 = arith.constant 9.99999974E-6 : f32
    %16 = vector.broadcast %cst_8 : f32 to vector<32x1xf32>
    %17 = arith.addf %13, %16 : vector<32x1xf32>
    %18 = math.rsqrt %17 : vector<32x1xf32>
    %19 = vector.broadcast %18 : vector<32x1xf32> to vector<32x64xf32>
    %20 = arith.mulf %15, %19 : vector<32x64xf32>
    %21 = vector.broadcast %1 : vector<1x64xf32> to vector<32x64xf32>
    %22 = arith.mulf %20, %21 : vector<32x64xf32>
    %23 = vector.broadcast %2 : vector<1x64xf32> to vector<32x64xf32>
    %24 = arith.addf %22, %23 : vector<32x64xf32>
    %c0_9 = arith.constant 0 : index
    %c0_10 = arith.constant 0 : index
    %25 = vector.load %arg2[%c0_9, %c0_10] : memref<32x64xbf16, #tpu.memory_space<vmem>>, vector<32x64xbf16>
    %26 = arith.extf %25 : vector<32x64xbf16> to vector<32x64xf32>
    %27 = tpu.concatenate %24, %26 in 1 : vector<32x64xf32>, vector<32x64xf32> -> vector<32x128xf32>
    %28 = arith.truncf %27 : vector<32x128xf32> to vector<32x128xbf16>
    %c0_11 = arith.constant 0 : index
    %c0_12 = arith.constant 0 : index
    %29 = vector.load %arg5[%c0_11, %c0_12] : memref<128x64xbf16, #tpu.memory_space<vmem>>, vector<128x64xbf16>
    %cst_13 = arith.constant dense<0.000000e+00> : vector<32x64xf32>
    %30 = tpu.matmul %28, %29, %cst_13 {dimension_numbers = #tpu.dot_dimension_numbers<[1], [0], [0], [1], [0, 0, 1, 1], [], []>} : vector<32x128xbf16>, vector<128x64xbf16>, vector<32x64xf32> -> vector<32x64xf32>
    %c0_14 = arith.constant 0 : index
    %c0_15 = arith.constant 0 : index
    %31 = vector.load %arg6[%c0_14, %c0_15] : memref<1x64xf32, #tpu.memory_space<vmem>>, vector<1x64xf32>
    %32 = vector.broadcast %31 : vector<1x64xf32> to vector<32x64xf32>
    %33 = arith.addf %30, %32 : vector<32x64xf32>
    %cst_16 = arith.constant 0.000000e+00 : f32
    %34 = vector.broadcast %cst_16 : f32 to vector<32x64xf32>
    %35 = arith.maximumf %33, %34 : vector<32x64xf32>
    %36 = arith.truncf %35 : vector<32x64xf32> to vector<32x64xbf16>
    %c0_17 = arith.constant 0 : index
    %c0_18 = arith.constant 0 : index
    %37 = vector.load %arg7[%c0_17, %c0_18] : memref<64x64xbf16, #tpu.memory_space<vmem>>, vector<64x64xbf16>
    %cst_19 = arith.constant dense<0.000000e+00> : vector<32x64xf32>
    %38 = tpu.matmul %36, %37, %cst_19 {dimension_numbers = #tpu.dot_dimension_numbers<[1], [0], [0], [1], [0, 0, 1, 1], [], []>} : vector<32x64xbf16>, vector<64x64xbf16>, vector<32x64xf32> -> vector<32x64xf32>
    %c0_20 = arith.constant 0 : index
    %c0_21 = arith.constant 0 : index
    %39 = vector.load %arg8[%c0_20, %c0_21] : memref<1x64xf32, #tpu.memory_space<vmem>>, vector<1x64xf32>
    %40 = vector.broadcast %39 : vector<1x64xf32> to vector<32x64xf32>
    %41 = arith.addf %38, %40 : vector<32x64xf32>
    %42 = arith.truncf %41 : vector<32x64xf32> to vector<32x64xbf16>
    %c0_22 = arith.constant 0 : index
    %c0_23 = arith.constant 0 : index
    %43 = vector.load %arg9[%c0_22, %c0_23] : memref<32x64xbf16, #tpu.memory_space<vmem>>, vector<32x64xbf16>
    tpu.vector_store %arg9[%c0_22, %c0_23], %42 {strides = array<i32>} : memref<32x64xbf16, #tpu.memory_space<vmem>>, vector<32x64xbf16>,
    return
  }
  func.func @transform_0(%arg0: i32) -> (i32, i32) {
    %c0_i32 = arith.constant 0 : i32
    %c0_i32_0 = arith.constant 0 : i32
    return %arg0, %c0_i32 : i32, i32
  }
  func.func @transform_1(%arg0: i32) -> (i32, i32) {
    %c0_i32 = arith.constant 0 : i32
    %c0_i32_0 = arith.constant 0 : i32
    return %arg0, %c0_i32 : i32, i32
  }
  func.func @transform_2(%arg0: i32) -> (i32, i32) {
    %c0_i32 = arith.constant 0 : i32
    %c0_i32_0 = arith.constant 0 : i32
    %c0_i32_1 = arith.constant 0 : i32
    return %c0_i32, %c0_i32_0 : i32, i32
  }
  func.func @transform_3(%arg0: i32) -> (i32, i32) {
    %c0_i32 = arith.constant 0 : i32
    %c0_i32_0 = arith.constant 0 : i32
    %c0_i32_1 = arith.constant 0 : i32
    return %c0_i32, %c0_i32_0 : i32, i32
  }
  func.func @transform_4(%arg0: i32) -> (i32, i32) {
    %c0_i32 = arith.constant 0 : i32
    %c0_i32_0 = arith.constant 0 : i32
    %c0_i32_1 = arith.constant 0 : i32
    return %c0_i32, %c0_i32_0 : i32, i32
  }
  func.func @transform_5(%arg0: i32) -> (i32, i32) {
    %c0_i32 = arith.constant 0 : i32
    %c0_i32_0 = arith.constant 0 : i32
    %c0_i32_1 = arith.constant 0 : i32
    return %c0_i32, %c0_i32_0 : i32, i32
  }
  func.func @transform_6(%arg0: i32) -> (i32, i32) {
    %c0_i32 = arith.constant 0 : i32
    %c0_i32_0 = arith.constant 0 : i32
    %c0_i32_1 = arith.constant 0 : i32
    return %c0_i32, %c0_i32_0 : i32, i32
  }
  func.func @transform_7(%arg0: i32) -> (i32, i32) {
    %c0_i32 = arith.constant 0 : i32
    %c0_i32_0 = arith.constant 0 : i32
    %c0_i32_1 = arith.constant 0 : i32
    return %c0_i32, %c0_i32_0 : i32, i32
  }
  func.func @transform_8(%arg0: i32) -> (i32, i32) {
    %c0_i32 = arith.constant 0 : i32
    %c0_i32_0 = arith.constant 0 : i32
    return %arg0, %c0_i32 : i32, i32
  }
}

module attributes {stable_mosaic.version = 11 : i64} {
  func.func @conv_out_kernel(%arg0: i32, %arg1: memref<48x64xf32, #tpu.memory_space<vmem>>, %arg2: memref<48x64xbf16, #tpu.memory_space<vmem>>, %arg3: memref<1x64xf32, #tpu.memory_space<vmem>>, %arg4: memref<1x64xf32, #tpu.memory_space<vmem>>, %arg5: memref<128x64xbf16, #tpu.memory_space<vmem>>, %arg6: memref<1x64xf32, #tpu.memory_space<vmem>>, %arg7: memref<64x64xbf16, #tpu.memory_space<vmem>>, %arg8: memref<1x64xf32, #tpu.memory_space<vmem>>, %arg9: memref<48x64xbf16, #tpu.memory_space<vmem>>) attributes {dimension_semantics = [#tpu.dimension_semantics<parallel>], iteration_bounds = array<i64: 2>, scalar_prefetch = 0 : i64, scratch_operands = 0 : i64, tpu.core_type = #tpu.core_type<tc>, window_params = [{transform_indices = @transform_0, window_bounds = array<i64: 48, 64>}, {transform_indices = @transform_1, window_bounds = array<i64: 48, 64>}, {pipeline_mode = #tpu.pipeline_mode<synchronous>, transform_indices = @transform_2, window_bounds = array<i64: 1, 64>}, {pipeline_mode = #tpu.pipeline_mode<synchronous>, transform_indices = @transform_3, window_bounds = array<i64: 1, 64>}, {pipeline_mode = #tpu.pipeline_mode<synchronous>, transform_indices = @transform_4, window_bounds = array<i64: 128, 64>}, {pipeline_mode = #tpu.pipeline_mode<synchronous>, transform_indices = @transform_5, window_bounds = array<i64: 1, 64>}, {pipeline_mode = #tpu.pipeline_mode<synchronous>, transform_indices = @transform_6, window_bounds = array<i64: 64, 64>}, {pipeline_mode = #tpu.pipeline_mode<synchronous>, transform_indices = @transform_7, window_bounds = array<i64: 1, 64>}, {transform_indices = @transform_8, window_bounds = array<i64: 48, 64>}]} {
    %c0 = arith.constant 0 : index
    %c0_0 = arith.constant 0 : index
    %0 = vector.load %arg1[%c0, %c0_0] : memref<48x64xf32, #tpu.memory_space<vmem>>, vector<48x64xf32>
    %c0_1 = arith.constant 0 : index
    %c0_2 = arith.constant 0 : index
    %1 = vector.load %arg3[%c0_1, %c0_2] : memref<1x64xf32, #tpu.memory_space<vmem>>, vector<1x64xf32>
    %c0_3 = arith.constant 0 : index
    %c0_4 = arith.constant 0 : index
    %2 = vector.load %arg4[%c0_3, %c0_4] : memref<1x64xf32, #tpu.memory_space<vmem>>, vector<1x64xf32>
    %cst = arith.constant dense<0.000000e+00> : vector<48xf32>
    %3 = vector.multi_reduction <add>, %0, %cst [1] : vector<48x64xf32> to vector<48xf32>
    %4 = vector.shape_cast %3 : vector<48xf32> to vector<48x1xf32>
    %cst_5 = arith.constant 6.400000e+01 : f32
    %5 = vector.broadcast %cst_5 : f32 to vector<48x1xf32>
    %6 = arith.divf %4, %5 : vector<48x1xf32>
    %7 = vector.broadcast %6 : vector<48x1xf32> to vector<48x64xf32>
    %8 = arith.subf %0, %7 : vector<48x64xf32>
    %9 = arith.mulf %8, %8 : vector<48x64xf32>
    %cst_6 = arith.constant dense<0.000000e+00> : vector<48xf32>
    %10 = vector.multi_reduction <add>, %9, %cst_6 [1] : vector<48x64xf32> to vector<48xf32>
    %11 = vector.shape_cast %10 : vector<48xf32> to vector<48x1xf32>
    %cst_7 = arith.constant 6.400000e+01 : f32
    %12 = vector.broadcast %cst_7 : f32 to vector<48x1xf32>
    %13 = arith.divf %11, %12 : vector<48x1xf32>
    %14 = vector.broadcast %6 : vector<48x1xf32> to vector<48x64xf32>
    %15 = arith.subf %0, %14 : vector<48x64xf32>
    %cst_8 = arith.constant 9.99999974E-6 : f32
    %16 = vector.broadcast %cst_8 : f32 to vector<48x1xf32>
    %17 = arith.addf %13, %16 : vector<48x1xf32>
    %18 = math.rsqrt %17 : vector<48x1xf32>
    %19 = vector.broadcast %18 : vector<48x1xf32> to vector<48x64xf32>
    %20 = arith.mulf %15, %19 : vector<48x64xf32>
    %21 = vector.broadcast %1 : vector<1x64xf32> to vector<48x64xf32>
    %22 = arith.mulf %20, %21 : vector<48x64xf32>
    %23 = vector.broadcast %2 : vector<1x64xf32> to vector<48x64xf32>
    %24 = arith.addf %22, %23 : vector<48x64xf32>
    %c0_9 = arith.constant 0 : index
    %c0_10 = arith.constant 0 : index
    %25 = vector.load %arg2[%c0_9, %c0_10] : memref<48x64xbf16, #tpu.memory_space<vmem>>, vector<48x64xbf16>
    %26 = arith.extf %25 : vector<48x64xbf16> to vector<48x64xf32>
    %27 = tpu.concatenate %24, %26 in 1 : vector<48x64xf32>, vector<48x64xf32> -> vector<48x128xf32>
    %28 = arith.truncf %27 : vector<48x128xf32> to vector<48x128xbf16>
    %c0_11 = arith.constant 0 : index
    %c0_12 = arith.constant 0 : index
    %29 = vector.load %arg5[%c0_11, %c0_12] : memref<128x64xbf16, #tpu.memory_space<vmem>>, vector<128x64xbf16>
    %cst_13 = arith.constant dense<0.000000e+00> : vector<48x64xf32>
    %30 = tpu.matmul %28, %29, %cst_13 {dimension_numbers = #tpu.dot_dimension_numbers<[1], [0], [0], [1], [0, 0, 1, 1], [], []>} : vector<48x128xbf16>, vector<128x64xbf16>, vector<48x64xf32> -> vector<48x64xf32>
    %c0_14 = arith.constant 0 : index
    %c0_15 = arith.constant 0 : index
    %31 = vector.load %arg6[%c0_14, %c0_15] : memref<1x64xf32, #tpu.memory_space<vmem>>, vector<1x64xf32>
    %32 = vector.broadcast %31 : vector<1x64xf32> to vector<48x64xf32>
    %33 = arith.addf %30, %32 : vector<48x64xf32>
    %cst_16 = arith.constant 0.000000e+00 : f32
    %34 = vector.broadcast %cst_16 : f32 to vector<48x64xf32>
    %35 = arith.maximumf %33, %34 : vector<48x64xf32>
    %36 = arith.truncf %35 : vector<48x64xf32> to vector<48x64xbf16>
    %c0_17 = arith.constant 0 : index
    %c0_18 = arith.constant 0 : index
    %37 = vector.load %arg7[%c0_17, %c0_18] : memref<64x64xbf16, #tpu.memory_space<vmem>>, vector<64x64xbf16>
    %cst_19 = arith.constant dense<0.000000e+00> : vector<48x64xf32>
    %38 = tpu.matmul %36, %37, %cst_19 {dimension_numbers = #tpu.dot_dimension_numbers<[1], [0], [0], [1], [0, 0, 1, 1], [], []>} : vector<48x64xbf16>, vector<64x64xbf16>, vector<48x64xf32> -> vector<48x64xf32>
    %c0_20 = arith.constant 0 : index
    %c0_21 = arith.constant 0 : index
    %39 = vector.load %arg8[%c0_20, %c0_21] : memref<1x64xf32, #tpu.memory_space<vmem>>, vector<1x64xf32>
    %40 = vector.broadcast %39 : vector<1x64xf32> to vector<48x64xf32>
    %41 = arith.addf %38, %40 : vector<48x64xf32>
    %42 = arith.truncf %41 : vector<48x64xf32> to vector<48x64xbf16>
    %c0_22 = arith.constant 0 : index
    %c0_23 = arith.constant 0 : index
    %43 = vector.load %arg9[%c0_22, %c0_23] : memref<48x64xbf16, #tpu.memory_space<vmem>>, vector<48x64xbf16>
    tpu.vector_store %arg9[%c0_22, %c0_23], %42 {strides = array<i32>} : memref<48x64xbf16, #tpu.memory_space<vmem>>, vector<48x64xbf16>,
    return
  }
  func.func @transform_0(%arg0: i32) -> (i32, i32) {
    %c0_i32 = arith.constant 0 : i32
    %c0_i32_0 = arith.constant 0 : i32
    return %arg0, %c0_i32 : i32, i32
  }
  func.func @transform_1(%arg0: i32) -> (i32, i32) {
    %c0_i32 = arith.constant 0 : i32
    %c0_i32_0 = arith.constant 0 : i32
    return %arg0, %c0_i32 : i32, i32
  }
  func.func @transform_2(%arg0: i32) -> (i32, i32) {
    %c0_i32 = arith.constant 0 : i32
    %c0_i32_0 = arith.constant 0 : i32
    %c0_i32_1 = arith.constant 0 : i32
    return %c0_i32, %c0_i32_0 : i32, i32
  }
  func.func @transform_3(%arg0: i32) -> (i32, i32) {
    %c0_i32 = arith.constant 0 : i32
    %c0_i32_0 = arith.constant 0 : i32
    %c0_i32_1 = arith.constant 0 : i32
    return %c0_i32, %c0_i32_0 : i32, i32
  }
  func.func @transform_4(%arg0: i32) -> (i32, i32) {
    %c0_i32 = arith.constant 0 : i32
    %c0_i32_0 = arith.constant 0 : i32
    %c0_i32_1 = arith.constant 0 : i32
    return %c0_i32, %c0_i32_0 : i32, i32
  }
  func.func @transform_5(%arg0: i32) -> (i32, i32) {
    %c0_i32 = arith.constant 0 : i32
    %c0_i32_0 = arith.constant 0 : i32
    %c0_i32_1 = arith.constant 0 : i32
    return %c0_i32, %c0_i32_0 : i32, i32
  }
  func.func @transform_6(%arg0: i32) -> (i32, i32) {
    %c0_i32 = arith.constant 0 : i32
    %c0_i32_0 = arith.constant 0 : i32
    %c0_i32_1 = arith.constant 0 : i32
    return %c0_i32, %c0_i32_0 : i32, i32
  }
  func.func @transform_7(%arg0: i32) -> (i32, i32) {
    %c0_i32 = arith.constant 0 : i32
    %c0_i32_0 = arith.constant 0 : i32
    %c0_i32_1 = arith.constant 0 : i32
    return %c0_i32, %c0_i32_0 : i32, i32
  }
  func.func @transform_8(%arg0: i32) -> (i32, i32) {
    %c0_i32 = arith.constant 0 : i32
    %c0_i32_0 = arith.constant 0 : i32
    return %arg0, %c0_i32 : i32, i32
  }
}

module attributes {stable_mosaic.version = 11 : i64} {
  func.func @conv_out_head_kernel(%arg0: i32, %arg1: memref<48x64xf32, #tpu.memory_space<vmem>>, %arg2: memref<48x64xbf16, #tpu.memory_space<vmem>>, %arg3: memref<1x64xf32, #tpu.memory_space<vmem>>, %arg4: memref<1x64xf32, #tpu.memory_space<vmem>>, %arg5: memref<128x64xbf16, #tpu.memory_space<vmem>>, %arg6: memref<1x64xf32, #tpu.memory_space<vmem>>, %arg7: memref<64x64xbf16, #tpu.memory_space<vmem>>, %arg8: memref<1x64xf32, #tpu.memory_space<vmem>>, %arg9: memref<64x64xbf16, #tpu.memory_space<vmem>>, %arg10: memref<1x64xf32, #tpu.memory_space<vmem>>, %arg11: memref<48x64xbf16, #tpu.memory_space<vmem>>) attributes {dimension_semantics = [#tpu.dimension_semantics<parallel>], iteration_bounds = array<i64: 2>, scalar_prefetch = 0 : i64, scratch_operands = 0 : i64, tpu.core_type = #tpu.core_type<tc>, window_params = [{transform_indices = @transform_0, window_bounds = array<i64: 48, 64>}, {transform_indices = @transform_1, window_bounds = array<i64: 48, 64>}, {pipeline_mode = #tpu.pipeline_mode<synchronous>, transform_indices = @transform_2, window_bounds = array<i64: 1, 64>}, {pipeline_mode = #tpu.pipeline_mode<synchronous>, transform_indices = @transform_3, window_bounds = array<i64: 1, 64>}, {pipeline_mode = #tpu.pipeline_mode<synchronous>, transform_indices = @transform_4, window_bounds = array<i64: 128, 64>}, {pipeline_mode = #tpu.pipeline_mode<synchronous>, transform_indices = @transform_5, window_bounds = array<i64: 1, 64>}, {pipeline_mode = #tpu.pipeline_mode<synchronous>, transform_indices = @transform_6, window_bounds = array<i64: 64, 64>}, {pipeline_mode = #tpu.pipeline_mode<synchronous>, transform_indices = @transform_7, window_bounds = array<i64: 1, 64>}, {pipeline_mode = #tpu.pipeline_mode<synchronous>, transform_indices = @transform_8, window_bounds = array<i64: 64, 64>}, {pipeline_mode = #tpu.pipeline_mode<synchronous>, transform_indices = @transform_9, window_bounds = array<i64: 1, 64>}, {transform_indices = @transform_10, window_bounds = array<i64: 48, 64>}]} {
    %c0 = arith.constant 0 : index
    %c0_0 = arith.constant 0 : index
    %0 = vector.load %arg1[%c0, %c0_0] : memref<48x64xf32, #tpu.memory_space<vmem>>, vector<48x64xf32>
    %c0_1 = arith.constant 0 : index
    %c0_2 = arith.constant 0 : index
    %1 = vector.load %arg3[%c0_1, %c0_2] : memref<1x64xf32, #tpu.memory_space<vmem>>, vector<1x64xf32>
    %c0_3 = arith.constant 0 : index
    %c0_4 = arith.constant 0 : index
    %2 = vector.load %arg4[%c0_3, %c0_4] : memref<1x64xf32, #tpu.memory_space<vmem>>, vector<1x64xf32>
    %cst = arith.constant dense<0.000000e+00> : vector<48xf32>
    %3 = vector.multi_reduction <add>, %0, %cst [1] : vector<48x64xf32> to vector<48xf32>
    %4 = vector.shape_cast %3 : vector<48xf32> to vector<48x1xf32>
    %cst_5 = arith.constant 6.400000e+01 : f32
    %5 = vector.broadcast %cst_5 : f32 to vector<48x1xf32>
    %6 = arith.divf %4, %5 : vector<48x1xf32>
    %7 = vector.broadcast %6 : vector<48x1xf32> to vector<48x64xf32>
    %8 = arith.subf %0, %7 : vector<48x64xf32>
    %9 = arith.mulf %8, %8 : vector<48x64xf32>
    %cst_6 = arith.constant dense<0.000000e+00> : vector<48xf32>
    %10 = vector.multi_reduction <add>, %9, %cst_6 [1] : vector<48x64xf32> to vector<48xf32>
    %11 = vector.shape_cast %10 : vector<48xf32> to vector<48x1xf32>
    %cst_7 = arith.constant 6.400000e+01 : f32
    %12 = vector.broadcast %cst_7 : f32 to vector<48x1xf32>
    %13 = arith.divf %11, %12 : vector<48x1xf32>
    %14 = vector.broadcast %6 : vector<48x1xf32> to vector<48x64xf32>
    %15 = arith.subf %0, %14 : vector<48x64xf32>
    %cst_8 = arith.constant 9.99999974E-6 : f32
    %16 = vector.broadcast %cst_8 : f32 to vector<48x1xf32>
    %17 = arith.addf %13, %16 : vector<48x1xf32>
    %18 = math.rsqrt %17 : vector<48x1xf32>
    %19 = vector.broadcast %18 : vector<48x1xf32> to vector<48x64xf32>
    %20 = arith.mulf %15, %19 : vector<48x64xf32>
    %21 = vector.broadcast %1 : vector<1x64xf32> to vector<48x64xf32>
    %22 = arith.mulf %20, %21 : vector<48x64xf32>
    %23 = vector.broadcast %2 : vector<1x64xf32> to vector<48x64xf32>
    %24 = arith.addf %22, %23 : vector<48x64xf32>
    %c0_9 = arith.constant 0 : index
    %c0_10 = arith.constant 0 : index
    %25 = vector.load %arg2[%c0_9, %c0_10] : memref<48x64xbf16, #tpu.memory_space<vmem>>, vector<48x64xbf16>
    %26 = arith.extf %25 : vector<48x64xbf16> to vector<48x64xf32>
    %27 = tpu.concatenate %24, %26 in 1 : vector<48x64xf32>, vector<48x64xf32> -> vector<48x128xf32>
    %28 = arith.truncf %27 : vector<48x128xf32> to vector<48x128xbf16>
    %c0_11 = arith.constant 0 : index
    %c0_12 = arith.constant 0 : index
    %29 = vector.load %arg5[%c0_11, %c0_12] : memref<128x64xbf16, #tpu.memory_space<vmem>>, vector<128x64xbf16>
    %cst_13 = arith.constant dense<0.000000e+00> : vector<48x64xf32>
    %30 = tpu.matmul %28, %29, %cst_13 {dimension_numbers = #tpu.dot_dimension_numbers<[1], [0], [0], [1], [0, 0, 1, 1], [], []>} : vector<48x128xbf16>, vector<128x64xbf16>, vector<48x64xf32> -> vector<48x64xf32>
    %c0_14 = arith.constant 0 : index
    %c0_15 = arith.constant 0 : index
    %31 = vector.load %arg6[%c0_14, %c0_15] : memref<1x64xf32, #tpu.memory_space<vmem>>, vector<1x64xf32>
    %32 = vector.broadcast %31 : vector<1x64xf32> to vector<48x64xf32>
    %33 = arith.addf %30, %32 : vector<48x64xf32>
    %cst_16 = arith.constant 0.000000e+00 : f32
    %34 = vector.broadcast %cst_16 : f32 to vector<48x64xf32>
    %35 = arith.maximumf %33, %34 : vector<48x64xf32>
    %36 = arith.truncf %35 : vector<48x64xf32> to vector<48x64xbf16>
    %c0_17 = arith.constant 0 : index
    %c0_18 = arith.constant 0 : index
    %37 = vector.load %arg7[%c0_17, %c0_18] : memref<64x64xbf16, #tpu.memory_space<vmem>>, vector<64x64xbf16>
    %cst_19 = arith.constant dense<0.000000e+00> : vector<48x64xf32>
    %38 = tpu.matmul %36, %37, %cst_19 {dimension_numbers = #tpu.dot_dimension_numbers<[1], [0], [0], [1], [0, 0, 1, 1], [], []>} : vector<48x64xbf16>, vector<64x64xbf16>, vector<48x64xf32> -> vector<48x64xf32>
    %c0_20 = arith.constant 0 : index
    %c0_21 = arith.constant 0 : index
    %39 = vector.load %arg8[%c0_20, %c0_21] : memref<1x64xf32, #tpu.memory_space<vmem>>, vector<1x64xf32>
    %40 = vector.broadcast %39 : vector<1x64xf32> to vector<48x64xf32>
    %41 = arith.addf %38, %40 : vector<48x64xf32>
    %42 = arith.truncf %41 : vector<48x64xf32> to vector<48x64xbf16>
    %c0_22 = arith.constant 0 : index
    %c0_23 = arith.constant 0 : index
    %43 = vector.load %arg9[%c0_22, %c0_23] : memref<64x64xbf16, #tpu.memory_space<vmem>>, vector<64x64xbf16>
    %cst_24 = arith.constant dense<0.000000e+00> : vector<48x64xf32>
    %44 = tpu.matmul %42, %43, %cst_24 {dimension_numbers = #tpu.dot_dimension_numbers<[1], [0], [0], [1], [0, 0, 1, 1], [], []>} : vector<48x64xbf16>, vector<64x64xbf16>, vector<48x64xf32> -> vector<48x64xf32>
    %c0_25 = arith.constant 0 : index
    %c0_26 = arith.constant 0 : index
    %45 = vector.load %arg10[%c0_25, %c0_26] : memref<1x64xf32, #tpu.memory_space<vmem>>, vector<1x64xf32>
    %46 = vector.broadcast %45 : vector<1x64xf32> to vector<48x64xf32>
    %47 = arith.addf %44, %46 : vector<48x64xf32>
    %cst_27 = arith.constant 0.000000e+00 : f32
    %48 = vector.broadcast %cst_27 : f32 to vector<48x64xf32>
    %49 = arith.maximumf %47, %48 : vector<48x64xf32>
    %50 = arith.truncf %49 : vector<48x64xf32> to vector<48x64xbf16>
    %c0_28 = arith.constant 0 : index
    %c0_29 = arith.constant 0 : index
    %51 = vector.load %arg11[%c0_28, %c0_29] : memref<48x64xbf16, #tpu.memory_space<vmem>>, vector<48x64xbf16>
    tpu.vector_store %arg11[%c0_28, %c0_29], %50 {strides = array<i32>} : memref<48x64xbf16, #tpu.memory_space<vmem>>, vector<48x64xbf16>,
    return
  }
  func.func @transform_0(%arg0: i32) -> (i32, i32) {
    %c0_i32 = arith.constant 0 : i32
    %c0_i32_0 = arith.constant 0 : i32
    return %arg0, %c0_i32 : i32, i32
  }
  func.func @transform_1(%arg0: i32) -> (i32, i32) {
    %c0_i32 = arith.constant 0 : i32
    %c0_i32_0 = arith.constant 0 : i32
    return %arg0, %c0_i32 : i32, i32
  }
  func.func @transform_2(%arg0: i32) -> (i32, i32) {
    %c0_i32 = arith.constant 0 : i32
    %c0_i32_0 = arith.constant 0 : i32
    %c0_i32_1 = arith.constant 0 : i32
    return %c0_i32, %c0_i32_0 : i32, i32
  }
  func.func @transform_3(%arg0: i32) -> (i32, i32) {
    %c0_i32 = arith.constant 0 : i32
    %c0_i32_0 = arith.constant 0 : i32
    %c0_i32_1 = arith.constant 0 : i32
    return %c0_i32, %c0_i32_0 : i32, i32
  }
  func.func @transform_4(%arg0: i32) -> (i32, i32) {
    %c0_i32 = arith.constant 0 : i32
    %c0_i32_0 = arith.constant 0 : i32
    %c0_i32_1 = arith.constant 0 : i32
    return %c0_i32, %c0_i32_0 : i32, i32
  }
  func.func @transform_5(%arg0: i32) -> (i32, i32) {
    %c0_i32 = arith.constant 0 : i32
    %c0_i32_0 = arith.constant 0 : i32
    %c0_i32_1 = arith.constant 0 : i32
    return %c0_i32, %c0_i32_0 : i32, i32
  }
  func.func @transform_6(%arg0: i32) -> (i32, i32) {
    %c0_i32 = arith.constant 0 : i32
    %c0_i32_0 = arith.constant 0 : i32
    %c0_i32_1 = arith.constant 0 : i32
    return %c0_i32, %c0_i32_0 : i32, i32
  }
  func.func @transform_7(%arg0: i32) -> (i32, i32) {
    %c0_i32 = arith.constant 0 : i32
    %c0_i32_0 = arith.constant 0 : i32
    %c0_i32_1 = arith.constant 0 : i32
    return %c0_i32, %c0_i32_0 : i32, i32
  }
  func.func @transform_8(%arg0: i32) -> (i32, i32) {
    %c0_i32 = arith.constant 0 : i32
    %c0_i32_0 = arith.constant 0 : i32
    %c0_i32_1 = arith.constant 0 : i32
    return %c0_i32, %c0_i32_0 : i32, i32
  }
  func.func @transform_9(%arg0: i32) -> (i32, i32) {
    %c0_i32 = arith.constant 0 : i32
    %c0_i32_0 = arith.constant 0 : i32
    %c0_i32_1 = arith.constant 0 : i32
    return %c0_i32, %c0_i32_0 : i32, i32
  }
  func.func @transform_10(%arg0: i32) -> (i32, i32) {
    %c0_i32 = arith.constant 0 : i32
    %c0_i32_0 = arith.constant 0 : i32
    return %arg0, %c0_i32 : i32, i32
  }
}

</mosaic_0001>

<llo_original>
// kernel: gnn_forward.10
$region0: #{gnn_forward.10}
  #allocation0 [shape = 'u32[]', space=smem, size = 0x4, offset = 0x4, fixed_abs, tag = 'smem constant byte address 0x4 - core index']
  #allocation1 [shape = 'u32[72,128]{1,0:T(1,128)}', space=vmem, size = 0x9000, scoped, tag = 'internal scratch']
  %s0 = inlined_call_operand.vmem [shape: f32[64,4], index: 0, kind: input, shape index: {}]
  %s1 = inlined_call_operand.vmem [shape: f32[1,4], index: 1, kind: input, shape index: {}]
  %s2 = inlined_call_operand.vmem [shape: f32[1,4], index: 2, kind: input, shape index: {}]
  %s3 = inlined_call_operand.vmem [shape: bf16[4,64], index: 3, kind: input, shape index: {}]
  %s4 = inlined_call_operand.vmem [shape: f32[1,64], index: 4, kind: input, shape index: {}]
  %s5 = inlined_call_operand.vmem [shape: bf16[64,64], index: 5, kind: input, shape index: {}]
  %s6 = inlined_call_operand.vmem [shape: f32[1,64], index: 6, kind: input, shape index: {}]
  %s7 = inlined_call_operand.vmem [shape: bf16[64,64], index: 7, kind: output, shape index: {}]
  %s8 = sld [smem:[#allocation0]]
  $region61: #{gnn_forward.10} parent=0
    _
  %s10 = ssub.s32 1, %s8
  %s11 = scalar_select 0, %s10, %s8
  loop: start=0, step=1, limit=4
  $region2: #{gnn_forward.10} parent=0 // loop_pre_header
    _
  $region3: #{gnn_forward.10} parent=0 // loop_header
    %s13 = sphi 0, %s17
    %p14 = scmp.ge.s32.totalorder %s13, 4
    %s23 = sphi 0, %s25
    %s26 = sphi 0, %s23
    %s27 = sphi 0, %s26
    %s43 = sphi 0, %s27
    %s47 = sphi 0, %s47
    %s49 = sphi 0, %s47
    %s50 = sphi 0, %s49
    %s64 = sphi 0, %s50
    %s68 = sphi 0, %s68
    %s70 = sphi 0, %s68
    %s71 = sphi 0, %s70
    %s85 = sphi 0, %s71
    %s89 = sphi 0, %s89
    %s91 = sphi 0, %s89
    %s92 = sphi 0, %s91
    %s106 = sphi 0, %s92
    %s110 = sphi 0, %s110
    %s112 = sphi 0, %s110
    %s113 = sphi 0, %s112
    %s127 = sphi 0, %s113
    %s131 = sphi 0, %s131
    %s133 = sphi 0, %s131
    %s134 = sphi 0, %s133
    %s148 = sphi 0, %s134
    %s152 = sphi 0, %s152
    %s154 = sphi 0, %s152
    %s155 = sphi 0, %s154
    %s169 = sphi 0, %s155
    %s175 = sphi 0, %s177
    %s178 = sphi 0, %s175
    %s179 = sphi 0, %s178
    %s195 = sphi 0, %s179
  $region4: #{gnn_forward.10} parent=0 // loop_header_branch
    %16 = sbr.rel (%p14) target = $region8
  $region5: #{gnn_forward.10} parent=0 // loop_body
    %s18 = ssub.s32 %s13, 1
    %s19 = ssub.s32 %s13, 2
    %s20 = sadd.s32 %s13, 1
    %s21 = ssub.s32 %s13, %s20
    %p22 = scmp.eq.s32.totalorder %s21, 0
    %s24 = sadd.s32 %s23, 1
    %s25 = scalar_select %p22, %s23, %s24
    %p28 = pneg %p22
    %p29 = scmp.eq.s32.totalorder %s13, 1
    %p30 = por %p28, %p29
    %p31 = scmp.ne.s32.totalorder %s23, %s26
    %p32 = scmp.eq.s32.totalorder %s13, 0
    %p33 = por %p31, %p32
    %p34 = scmp.ne.s32.totalorder %s23, %s26
    %p35 = scmp.eq.s32.totalorder %s18, 1
    %p36 = por %p34, %p35
    %p37 = scmp.ne.s32.totalorder %s26, %s27
    %p38 = scmp.eq.s32.totalorder %s18, 0
    %p39 = por %p37, %p38
    %p40 = scmp.ne.s32.totalorder %s26, %s27
    %p41 = scmp.eq.s32.totalorder %s19, 1
    %p42 = por %p40, %p41
    %p44 = scmp.ne.s32.totalorder %s27, %s43
    %p45 = scmp.eq.s32.totalorder %s19, 0
    %p46 = por %p44, %p45
    %s48 = sadd.s32 %s47, 1
    %p51 = scmp.eq.s32.totalorder %s13, 1
    %p52 = scmp.ne.s32.totalorder %s47, %s49
    %p53 = scmp.eq.s32.totalorder %s13, 0
    %p54 = por %p52, %p53
    %p55 = scmp.ne.s32.totalorder %s47, %s49
    %p56 = scmp.eq.s32.totalorder %s18, 1
    %p57 = por %p55, %p56
    %p58 = scmp.ne.s32.totalorder %s49, %s50
    %p59 = scmp.eq.s32.totalorder %s18, 0
    %p60 = por %p58, %p59
    %p61 = scmp.ne.s32.totalorder %s49, %s50
    %p62 = scmp.eq.s32.totalorder %s19, 1
    %p63 = por %p61, %p62
    %p65 = scmp.ne.s32.totalorder %s50, %s64
    %p66 = scmp.eq.s32.totalorder %s19, 0
    %p67 = por %p65, %p66
    %s69 = sadd.s32 %s68, 1
    %p72 = scmp.eq.s32.totalorder %s13, 1
    %p73 = scmp.ne.s32.totalorder %s68, %s70
    %p74 = scmp.eq.s32.totalorder %s13, 0
    %p75 = por %p73, %p74
    %p76 = scmp.ne.s32.totalorder %s68, %s70
    %p77 = scmp.eq.s32.totalorder %s18, 1
    %p78 = por %p76, %p77
    %p79 = scmp.ne.s32.totalorder %s70, %s71
    %p80 = scmp.eq.s32.totalorder %s18, 0
    %p81 = por %p79, %p80
    %p82 = scmp.ne.s32.totalorder %s70, %s71
    %p83 = scmp.eq.s32.totalorder %s19, 1
    %p84 = por %p82, %p83
    %p86 = scmp.ne.s32.totalorder %s71, %s85
    %p87 = scmp.eq.s32.totalorder %s19, 0
    %p88 = por %p86, %p87
    %s90 = sadd.s32 %s89, 1
    %p93 = scmp.eq.s32.totalorder %s13, 1
    %p94 = scmp.ne.s32.totalorder %s89, %s91
    %p95 = scmp.eq.s32.totalorder %s13, 0
    %p96 = por %p94, %p95
    %p97 = scmp.ne.s32.totalorder %s89, %s91
    %p98 = scmp.eq.s32.totalorder %s18, 1
    %p99 = por %p97, %p98
    %p100 = scmp.ne.s32.totalorder %s91, %s92
    %p101 = scmp.eq.s32.totalorder %s18, 0
    %p102 = por %p100, %p101
    %p103 = scmp.ne.s32.totalorder %s91, %s92
    %p104 = scmp.eq.s32.totalorder %s19, 1
    %p105 = por %p103, %p104
    %p107 = scmp.ne.s32.totalorder %s92, %s106
    %p108 = scmp.eq.s32.totalorder %s19, 0
    %p109 = por %p107, %p108
    %s111 = sadd.s32 %s110, 1
    %p114 = scmp.eq.s32.totalorder %s13, 1
    %p115 = scmp.ne.s32.totalorder %s110, %s112
    %p116 = scmp.eq.s32.totalorder %s13, 0
    %p117 = por %p115, %p116
    %p118 = scmp.ne.s32.totalorder %s110, %s112
    %p119 = scmp.eq.s32.totalorder %s18, 1
    %p120 = por %p118, %p119
    %p121 = scmp.ne.s32.totalorder %s112, %s113
    %p122 = scmp.eq.s32.totalorder %s18, 0
    %p123 = por %p121, %p122
    %p124 = scmp.ne.s32.totalorder %s112, %s113
    %p125 = scmp.eq.s32.totalorder %s19, 1
    %p126 = por %p124, %p125
    %p128 = scmp.ne.s32.totalorder %s113, %s127
    %p129 = scmp.eq.s32.totalorder %s19, 0
    %p130 = por %p128, %p129
    %s132 = sadd.s32 %s131, 1
    %p135 = scmp.eq.s32.totalorder %s13, 1
    %p136 = scmp.ne.s32.totalorder %s131, %s133
    %p137 = scmp.eq.s32.totalorder %s13, 0
    %p138 = por %p136, %p137
    %p139 = scmp.ne.s32.totalorder %s131, %s133
    %p140 = scmp.eq.s32.totalorder %s18, 1
    %p141 = por %p139, %p140
    %p142 = scmp.ne.s32.totalorder %s133, %s134
    %p143 = scmp.eq.s32.totalorder %s18, 0
    %p144 = por %p142, %p143
    %p145 = scmp.ne.s32.totalorder %s133, %s134
    %p146 = scmp.eq.s32.totalorder %s19, 1
    %p147 = por %p145, %p146
    %p149 = scmp.ne.s32.totalorder %s134, %s148
    %p150 = scmp.eq.s32.totalorder %s19, 0
    %p151 = por %p149, %p150
    %s153 = sadd.s32 %s152, 1
    %p156 = scmp.eq.s32.totalorder %s13, 1
    %p157 = scmp.ne.s32.totalorder %s152, %s154
    %p158 = scmp.eq.s32.totalorder %s13, 0
    %p159 = por %p157, %p158
    %p160 = scmp.ne.s32.totalorder %s152, %s154
    %p161 = scmp.eq.s32.totalorder %s18, 1
    %p162 = por %p160, %p161
    %p163 = scmp.ne.s32.totalorder %s154, %s155
    %p164 = scmp.eq.s32.totalorder %s18, 0
    %p165 = por %p163, %p164
    %p166 = scmp.ne.s32.totalorder %s154, %s155
    %p167 = scmp.eq.s32.totalorder %s19, 1
    %p168 = por %p166, %p167
    %p170 = scmp.ne.s32.totalorder %s155, %s169
    %p171 = scmp.eq.s32.totalorder %s19, 0
    %p172 = por %p170, %p171
    %s173 = ssub.s32 %s13, %s20
    %p174 = scmp.eq.s32.totalorder %s173, 0
    %s176 = sadd.s32 %s175, 1
    %s177 = scalar_select %p174, %s175, %s176
    %p180 = pneg %p174
    %p181 = scmp.eq.s32.totalorder %s13, 1
    %p182 = por %p180, %p181
    %p183 = scmp.ne.s32.totalorder %s175, %s178
    %p184 = scmp.eq.s32.totalorder %s13, 0
    %p185 = por %p183, %p184
    %p186 = scmp.ne.s32.totalorder %s175, %s178
    %p187 = scmp.eq.s32.totalorder %s18, 1
    %p188 = por %p186, %p187
    %p189 = scmp.ne.s32.totalorder %s178, %s179
    %p190 = scmp.eq.s32.totalorder %s18, 0
    %p191 = por %p189, %p190
    %p192 = scmp.ne.s32.totalorder %s178, %s179
    %p193 = scmp.eq.s32.totalorder %s19, 1
    %p194 = por %p192, %p193
    %p196 = scmp.ne.s32.totalorder %s179, %s195
    %p197 = scmp.eq.s32.totalorder %s19, 0
    %p198 = por %p196, %p197
    %p199 = scmp.le.s32.totalorder 1, %s13
    %p200 = scmp.lt.s32.totalorder %s13, 3
    %p201 = pnand %p199, %p200
    %p202 = pneg %p201
    // Predicated region
    $region9: #{gnn_forward.10} parent=5 // pred_check
      _
    $region10: #{gnn_forward.10} parent=5 // pred_check_branch
      %204 = sbr.rel (%p201) target = $region12
    $region11: #{gnn_forward.10} parent=5 // pred_region
      %s205 = ssub.s32 %s13, 1
      // Predicated region
      $region13: #{gnn_forward.10} parent=11 // pred_check
        %p206 = pneg %p60
      $region14: #{gnn_forward.10} parent=11 // pred_check_branch
        %208 = sbr.rel (%p206) target = $region16
      $region15: #{gnn_forward.10} parent=11 // pred_region
        _
      $region16: #{gnn_forward.10} parent=11 // pred_fallthru
        _
      // Predicated region
      $region17: #{gnn_forward.10} parent=11 // pred_check
        %p209 = pneg %p81
      $region18: #{gnn_forward.10} parent=11 // pred_check_branch
        %211 = sbr.rel (%p209) target = $region20
      $region19: #{gnn_forward.10} parent=11 // pred_region
        _
      $region20: #{gnn_forward.10} parent=11 // pred_fallthru
        _
      // Predicated region
      $region21: #{gnn_forward.10} parent=11 // pred_check
        %p212 = pneg %p102
      $region22: #{gnn_forward.10} parent=11 // pred_check_branch
        %214 = sbr.rel (%p212) target = $region24
      $region23: #{gnn_forward.10} parent=11 // pred_region
        _
      $region24: #{gnn_forward.10} parent=11 // pred_fallthru
        _
      // Predicated region
      $region25: #{gnn_forward.10} parent=11 // pred_check
        %p215 = pneg %p123
      $region26: #{gnn_forward.10} parent=11 // pred_check_branch
        %217 = sbr.rel (%p215) target = $region28
      $region27: #{gnn_forward.10} parent=11 // pred_region
        _
      $region28: #{gnn_forward.10} parent=11 // pred_fallthru
        _
      // Predicated region
      $region29: #{gnn_forward.10} parent=11 // pred_check
        %p218 = pneg %p144
      $region30: #{gnn_forward.10} parent=11 // pred_check_branch
        %220 = sbr.rel (%p218) target = $region32
      $region31: #{gnn_forward.10} parent=11 // pred_region
        _
      $region32: #{gnn_forward.10} parent=11 // pred_fallthru
        _
      // Predicated region
      $region33: #{gnn_forward.10} parent=11 // pred_check
        %p221 = pneg %p165
      $region34: #{gnn_forward.10} parent=11 // pred_check_branch
        %223 = sbr.rel (%p221) target = $region36
      $region35: #{gnn_forward.10} parent=11 // pred_region
        _
      $region36: #{gnn_forward.10} parent=11 // pred_fallthru
        _
    $region12: #{gnn_forward.10} parent=5 // pred_fallthru
      _
    %p224 = scmp.lt.s32.totalorder %s13, 2
    // Predicated region
    $region37: #{gnn_forward.10} parent=5 // pred_check
      %p225 = pneg %p224
    $region38: #{gnn_forward.10} parent=5 // pred_check_branch
      %227 = sbr.rel (%p225) target = $region40
    $region39: #{gnn_forward.10} parent=5 // pred_region
      // Predicated region
      $region41: #{gnn_forward.10} parent=39 // pred_check
        %p228 = pneg %p33
      $region42: #{gnn_forward.10} parent=39 // pred_check_branch
        %230 = sbr.rel (%p228) target = $region44
      $region43: #{gnn_forward.10} parent=39 // pred_region
        %s231 = smul.u32 4, %s13
        %p232 = scmp.lt.s32.totalorder %s231, 7
        %s233 = scalar_select %p232, %s231, 7
        %s234 = smul.addr %s233, 8
        %s235 = scalar_lea.vmem %s0, %s234
        %s236 = smul.u32 4, %s13
      $region44: #{gnn_forward.10} parent=39 // pred_fallthru
        _
    $region40: #{gnn_forward.10} parent=5 // pred_fallthru
      _
    %p237 = scmp.le.s32.totalorder 1, %s13
    %p238 = scmp.lt.s32.totalorder %s13, 3
    %p239 = pnand %p237, %p238
    %p240 = pneg %p239
    // Predicated region
    $region45: #{gnn_forward.10} parent=5 // pred_check
      _
    $region46: #{gnn_forward.10} parent=5 // pred_check_branch
      %242 = sbr.rel (%p239) target = $region48
    $region47: #{gnn_forward.10} parent=5 // pred_region
      %s243 = ssub.s32 %s13, 1
      %s244 = smul.u32 4, %s18
      %p245 = scmp.lt.s32.totalorder %s244, 7
      %s246 = scalar_select %p245, %s244, 7
      %s247 = smul.addr %s246, 8
      %s248 = scalar_lea.vmem %s0, %s247
      %p249 = pneg %p39
      %p250 = pneg %p36
      %p251 = pneg %p60
      %p252 = pneg %p57
      %p253 = pneg %p81
      %p254 = pneg %p78
      %p255 = pneg %p102
      %p256 = pneg %p99
      %p257 = pneg %p123
      %p258 = pneg %p120
      %p259 = pneg %p144
      %p260 = pneg %p141
      %p261 = pneg %p165
      %p262 = pneg %p162
      %p263 = pneg %p191
      %p264 = pneg %p188
      %s265 = smul.u32 4, %s18
      %p266 = scmp.lt.s32.totalorder %s265, 7
      %s267 = scalar_select %p266, %s265, 7
      %s268 = smul.addr %s267, 4
      %s269 = scalar_lea.vmem %s7, %s268
      %s270 = smul.u32 4, %s18
      %p271 = scmp.lt.s32.totalorder %s270, 7
      %s272 = scalar_select %p271, %s270, 7
      %s273 = smul.addr %s272, 8
      %s274 = scalar_lea.vmem %s0, %s273
      %s275 = smul.u32 4, %s18
      %s276 = smul.u32 4, %s18
      %p277 = scmp.lt.s32.totalorder %s276, 7
      %s278 = scalar_select %p277, %s276, 7
      %s279 = smul.addr %s278, 4
      %s280 = scalar_lea.vmem %s7, %s279
      %s281 = smul.u32 4, %s18
      %v283 = vld [vmem:[%s274] sm:$0xff]
      %v284 = vld [vmem:[%s274 + $0x8] sm:$0xff]
      %v285 = vld [vmem:[%s274 + $0x10] sm:$0xff]
      %v286 = vld [vmem:[%s274 + $0x18] sm:$0xff]
      %v287 = vld [vmem:[%s1] sm:$0x1]
      %v288 = vld [vmem:[%s2] sm:$0x1]
      %vm289 = vcmask 31744
      %v290 = vsel %vm289, %v283, 0.0
      %291 = vadd.xlane.f32.xlu0 %v290
      %v292 = vpop.xlane.xlu0 %291
      %v293 = vsel %vm289, %v284, 0.0
      %294 = vadd.xlane.f32.xlu0 %v293
      %v295 = vpop.xlane.xlu0 %294
      %v296 = vsel %vm289, %v285, 0.0
      %297 = vadd.xlane.f32.xlu0 %v296
      %v298 = vpop.xlane.xlu0 %297
      %v299 = vsel %vm289, %v286, 0.0
      %300 = vadd.xlane.f32.xlu0 %v299
      %v301 = vpop.xlane.xlu0 %300
      %v302 = vrcp.pop 4.0
      %v303 = vmul.f32 4.0, %v302
      %v304 = vsub.f32 1.0, %v303
      %v305 = vmul.f32 %v302, %v304
      %v306 = vadd.f32 %v302, %v305
      %vm307 = vweird.f32 %v302
      %v308 = vsel %vm307, %v302, %v306
      %v309 = vmul.f32 %v292, %v308
      %v310 = vmul.f32 %v295, %v308
      %v311 = vmul.f32 %v298, %v308
      %v312 = vmul.f32 %v301, %v308
      %v313 = vsub.f32 %v283, %v309
      %v314 = vsub.f32 %v284, %v310
      %v315 = vsub.f32 %v285, %v311
      %v316 = vsub.f32 %v286, %v312
      %v317 = vmul.f32 %v313, %v313
      %v318 = vmul.f32 %v314, %v314
      %v319 = vmul.f32 %v315, %v315
      %v320 = vmul.f32 %v316, %v316
      %v321 = vsel %vm289, %v317, 0.0
      %322 = vadd.xlane.f32.xlu0 %v321
      %v323 = vpop.xlane.xlu0 %322
      %v324 = vsel %vm289, %v318, 0.0
      %325 = vadd.xlane.f32.xlu0 %v324
      %v326 = vpop.xlane.xlu0 %325
      %v327 = vsel %vm289, %v319, 0.0
      %328 = vadd.xlane.f32.xlu0 %v327
      %v329 = vpop.xlane.xlu0 %328
      %v330 = vsel %vm289, %v320, 0.0
      %331 = vadd.xlane.f32.xlu0 %v330
      %v332 = vpop.xlane.xlu0 %331
      %v333 = vmul.f32 %v323, %v308
      %v334 = vmul.f32 %v326, %v308
      %v335 = vmul.f32 %v329, %v308
      %v336 = vmul.f32 %v332, %v308
      %v337 = vadd.f32 %v333, 1e-05
      %v338 = vadd.f32 %v334, 1e-05
      %v339 = vadd.f32 %v335, 1e-05
      %v340 = vadd.f32 %v336, 1e-05
      %v341 = vrsqrt.pop %v337
      %v342 = vmul.f32 %v341, %v337
      %v343 = vmul.f32 %v342, %v341
      %v344 = vmul.f32 0.5, %v343
      %v345 = vsub.f32 1.5, %v344
      %v346 = vmul.f32 %v341, %v345
      %vm347 = vweird.f32 %v337
      %vm348 = vweird.f32 %v341
      %vm349 = vmor %vm347, %vm348
      %v350 = vsel %vm349, %v341, %v346
      %v351 = vrsqrt.pop %v338
      %v352 = vmul.f32 %v351, %v338
      %v353 = vmul.f32 %v352, %v351
      %v354 = vmul.f32 0.5, %v353
      %v355 = vsub.f32 1.5, %v354
      %v356 = vmul.f32 %v351, %v355
      %vm357 = vweird.f32 %v338
      %vm358 = vweird.f32 %v351
      %vm359 = vmor %vm357, %vm358
      %v360 = vsel %vm359, %v351, %v356
      %v361 = vrsqrt.pop %v339
      %v362 = vmul.f32 %v361, %v339
      %v363 = vmul.f32 %v362, %v361
      %v364 = vmul.f32 0.5, %v363
      %v365 = vsub.f32 1.5, %v364
      %v366 = vmul.f32 %v361, %v365
      %vm367 = vweird.f32 %v339
      %vm368 = vweird.f32 %v361
      %vm369 = vmor %vm367, %vm368
      %v370 = vsel %vm369, %v361, %v366
      %v371 = vrsqrt.pop %v340
      %v372 = vmul.f32 %v371, %v340
      %v373 = vmul.f32 %v372, %v371
      %v374 = vmul.f32 0.5, %v373
      %v375 = vsub.f32 1.5, %v374
      %v376 = vmul.f32 %v371, %v375
      %vm377 = vweird.f32 %v340
      %vm378 = vweird.f32 %v371
      %vm379 = vmor %vm377, %vm378
      %v380 = vsel %vm379, %v371, %v376
      %v381 = vmul.f32 %v313, %v350
      %v382 = vmul.f32 %v314, %v360
      %v383 = vmul.f32 %v315, %v370
      %v384 = vmul.f32 %v316, %v380
      %v386 = vperm.slane %v287, 0
      %v388 = vmul.f32 %v381, %v386
      %v389 = vmul.f32 %v382, %v386
      %v390 = vmul.f32 %v383, %v386
      %v391 = vmul.f32 %v384, %v386
      %v393 = vperm.slane %v288, 0
      %v395 = vadd.f32 %v388, %v393
      %v396 = vadd.f32 %v389, %v393
      %v397 = vadd.f32 %v390, %v393
      %v398 = vadd.f32 %v391, %v393
      %v399 = vpack.c.bf16 %v396, %v395
      %v400 = vpack.c.bf16 %v398, %v397
      %v401 = vld [vmem:[%s3] sm:$0x3]
      %v402 = vld [vmem:[%s4] sm:$0x1]
      %v404 = vperm.slane %v402, 0
      %v407 = vsel %vm289, %v399, 0
      %v410 = vsel %vm289, %v400, 0
      %vm412 = vcmask 1041408
      %v414 = vsel %vm412, %v401, 0
      %416 = vmatpush.bf16.msra.mxu0 0
      %417 = vmatpush.bf16.msra.mxu0 0
      %418 = vmatpush.bf16.msra.mxu0 0
      %419 = vmatpush.bf16.msra.mxu0 0
      %420 = vmatpush.bf16.msra.mxu0 0
      %421 = vmatpush.bf16.msra.mxu0 0
      %422 = vmatpush.bf16.msra.mxu0 0
      %423 = vmatpush.bf16.msra.mxu0 %v414
      %424 = vmatmul.bf16.gmra.mxu0 %v407
      %v425 = vpop.f32.mrf.mxu0
      %v426 = vadd.f32 %v404, %v425
      %v427 = vpop.f32.mrf.mxu0
      %v428 = vadd.f32 %v404, %v427
      %429 = vmatmul.bf16.gmra.mxu0 %v410
      %v430 = vpop.f32.mrf.mxu0
      %v431 = vadd.f32 %v404, %v430
      %v432 = vpop.f32.mrf.mxu0
      %v433 = vadd.f32 %v404, %v432
      %434 = vdwg.mxu0
      %v435 = vmax.f32 %v426, 0.0
      %v436 = vmax.f32 %v428, 0.0
      %v437 = vmax.f32 %v431, 0.0
      %v438 = vmax.f32 %v433, 0.0
      %v439 = vpack.c.bf16 %v436, %v435
      %v440 = vpack.c.bf16 %v438, %v437
      %v441 = vld [vmem:[%s5] sm:$0xf]
      %v442 = vld [vmem:[%s5 + $0x4] sm:$0xf]
      %v443 = vld [vmem:[%s5 + $0x8] sm:$0xf]
      %v444 = vld [vmem:[%s5 + $0xc] sm:$0xf]
      %v445 = vld [vmem:[%s5 + $0x10] sm:$0xf]
      %v446 = vld [vmem:[%s5 + $0x14] sm:$0xf]
      %v447 = vld [vmem:[%s5 + $0x18] sm:$0xf]
      %v448 = vld [vmem:[%s5 + $0x1c] sm:$0xf]
      %v449 = vld [vmem:[%s6] sm:$0x1]
      %v451 = vperm.slane %v449, 0
      %v461 = vunpack.c.l.b16 %v441
      %v462 = vunpack.c.l.b16 %v442
      %v463 = vunpack.c.l.b16 %v443
      %v464 = vunpack.c.l.b16 %v444
      %v465 = vunpack.c.l.b16 %v445
      %v466 = vunpack.c.l.b16 %v446
      %v467 = vunpack.c.l.b16 %v447
      %v468 = vunpack.c.l.b16 %v448
      %v469 = vpack.c.b16 %v462, %v461
      %v470 = vpack.c.b16 %v464, %v463
      %v471 = vpack.c.b16 %v466, %v465
      %v472 = vpack.c.b16 %v468, %v467
      %vm477 = vcmask 523264
      %v479 = vsel %vm477, %v439, 0
      %v482 = vsel %vm477, %v440, 0
      %484 = vmatpush.bf16.msra.mxu0 0
      %485 = vmatpush.bf16.msra.mxu0 0
      %486 = vmatpush.bf16.msra.mxu0 0
      %487 = vmatpush.bf16.msra.mxu0 0
      %488 = vmatpush.bf16.msra.mxu0 %v472
      %489 = vmatpush.bf16.msra.mxu0 %v471
      %490 = vmatpush.bf16.msra.mxu0 %v470
      %491 = vmatpush.bf16.msra.mxu0 %v469
      %492 = vmatmul.bf16.gmra.mxu0 %v479
      %v493 = vpop.f32.mrf.mxu0
      %v494 = vadd.f32 %v451, %v493
      %v495 = vpop.f32.mrf.mxu0
      %v496 = vadd.f32 %v451, %v495
      %497 = vmatmul.bf16.gmra.mxu0 %v482
      %v498 = vpop.f32.mrf.mxu0
      %v499 = vadd.f32 %v451, %v498
      %v500 = vpop.f32.mrf.mxu0
      %v501 = vadd.f32 %v451, %v500
      %502 = vdwg.mxu0
      %v503 = vmax.f32 %v494, 0.0
      %v504 = vmax.f32 %v496, 0.0
      %v505 = vmax.f32 %v499, 0.0
      %v506 = vmax.f32 %v501, 0.0
      %v507 = vpack.c.bf16 %v503, %v503
      %v508 = vpack.c.bf16 %v504, %v504
      %v509 = vpack.c.bf16 %v505, %v505
      %v510 = vpack.c.bf16 %v506, %v506
      %vm511 = vcmask 519168
      %512 = vst.msk [vmem:[%s280] sm:$0xf] %vm511, %v507
      %513 = vst.msk [vmem:[%s280 + $0x4] sm:$0xf] %vm511, %v508
      %514 = vst.msk [vmem:[%s280 + $0x8] sm:$0xf] %vm511, %v509
      %515 = vst.msk [vmem:[%s280 + $0xc] sm:$0xf] %vm511, %v510
      %s516 = smul.u32 4, %s18
      %p517 = scmp.lt.s32.totalorder %s516, 7
      %s518 = scalar_select %p517, %s516, 7
      %s519 = smul.addr %s518, 4
      %s520 = scalar_lea.vmem %s7, %s519
      // Predicated region
      $region49: #{gnn_forward.10} parent=47 // pred_check
        %p521 = pneg %p188
      $region50: #{gnn_forward.10} parent=47 // pred_check_branch
        %523 = sbr.rel (%p521) target = $region52
      $region51: #{gnn_forward.10} parent=47 // pred_region
        %s524 = smul.u32 4, %s18
      $region52: #{gnn_forward.10} parent=47 // pred_fallthru
        _
    $region48: #{gnn_forward.10} parent=5 // pred_fallthru
      _
    %p525 = scmp.le.s32.totalorder 2, %s13
    // Predicated region
    $region53: #{gnn_forward.10} parent=5 // pred_check
      %p526 = pneg %p525
    $region54: #{gnn_forward.10} parent=5 // pred_check_branch
      %528 = sbr.rel (%p526) target = $region56
    $region55: #{gnn_forward.10} parent=5 // pred_region
      %s529 = ssub.s32 %s13, 2
      // Predicated region
      $region57: #{gnn_forward.10} parent=55 // pred_check
        %p530 = pneg %p194
      $region58: #{gnn_forward.10} parent=55 // pred_check_branch
        %532 = sbr.rel (%p530) target = $region60
      $region59: #{gnn_forward.10} parent=55 // pred_region
        %s533 = smul.u32 4, %s19
        %p534 = scmp.lt.s32.totalorder %s533, 7
        %s535 = scalar_select %p534, %s533, 7
        %s536 = smul.addr %s535, 4
        %s537 = scalar_lea.vmem %s7, %s536
      $region60: #{gnn_forward.10} parent=55 // pred_fallthru
        _
    $region56: #{gnn_forward.10} parent=5 // pred_fallthru
      _
  $region6: #{gnn_forward.10} parent=0 // loop_footer
    %s17 = sadd.s32 1, %s13
  $region7: #{gnn_forward.10} parent=0 // loop_footer_branch
    %12 = sbr.rel target = $region3
  $region8: #{gnn_forward.10} parent=0 // loop_exit
    _

// kernel: gnn_forward.11
$region0: #{gnn_forward.11}
  #allocation0 [shape = 'u32[]', space=smem, size = 0x4, offset = 0x4, fixed_abs, tag = 'smem constant byte address 0x4 - core index']
  #allocation1 [shape = 'u32[72,128]{1,0:T(1,128)}', space=vmem, size = 0x9000, scoped, tag = 'internal scratch']
  %s0 = inlined_call_operand.vmem [shape: f32[96,18], index: 0, kind: input, shape index: {}]
  %s1 = inlined_call_operand.vmem [shape: f32[1,18], index: 1, kind: input, shape index: {}]
  %s2 = inlined_call_operand.vmem [shape: f32[1,18], index: 2, kind: input, shape index: {}]
  %s3 = inlined_call_operand.vmem [shape: bf16[18,64], index: 3, kind: input, shape index: {}]
  %s4 = inlined_call_operand.vmem [shape: f32[1,64], index: 4, kind: input, shape index: {}]
  %s5 = inlined_call_operand.vmem [shape: bf16[64,64], index: 5, kind: input, shape index: {}]
  %s6 = inlined_call_operand.vmem [shape: f32[1,64], index: 6, kind: input, shape index: {}]
  %s7 = inlined_call_operand.vmem [shape: bf16[96,64], index: 7, kind: output, shape index: {}]
  %s8 = sld [smem:[#allocation0]]
  $region61: #{gnn_forward.11} parent=0
    _
  %s10 = ssub.s32 1, %s8
  %s11 = scalar_select 0, %s10, %s8
  loop: start=0, step=1, limit=4
  $region2: #{gnn_forward.11} parent=0 // loop_pre_header
    _
  $region3: #{gnn_forward.11} parent=0 // loop_header
    %s13 = sphi 0, %s17
    %p14 = scmp.ge.s32.totalorder %s13, 4
    %s23 = sphi 0, %s25
    %s26 = sphi 0, %s23
    %s27 = sphi 0, %s26
    %s43 = sphi 0, %s27
    %s47 = sphi 0, %s47
    %s49 = sphi 0, %s47
    %s50 = sphi 0, %s49
    %s64 = sphi 0, %s50
    %s68 = sphi 0, %s68
    %s70 = sphi 0, %s68
    %s71 = sphi 0, %s70
    %s85 = sphi 0, %s71
    %s89 = sphi 0, %s89
    %s91 = sphi 0, %s89
    %s92 = sphi 0, %s91
    %s106 = sphi 0, %s92
    %s110 = sphi 0, %s110
    %s112 = sphi 0, %s110
    %s113 = sphi 0, %s112
    %s127 = sphi 0, %s113
    %s131 = sphi 0, %s131
    %s133 = sphi 0, %s131
    %s134 = sphi 0, %s133
    %s148 = sphi 0, %s134
    %s152 = sphi 0, %s152
    %s154 = sphi 0, %s152
    %s155 = sphi 0, %s154
    %s169 = sphi 0, %s155
    %s175 = sphi 0, %s177
    %s178 = sphi 0, %s175
    %s179 = sphi 0, %s178
    %s195 = sphi 0, %s179
  $region4: #{gnn_forward.11} parent=0 // loop_header_branch
    %16 = sbr.rel (%p14) target = $region8
  $region5: #{gnn_forward.11} parent=0 // loop_body
    %s18 = ssub.s32 %s13, 1
    %s19 = ssub.s32 %s13, 2
    %s20 = sadd.s32 %s13, 1
    %s21 = ssub.s32 %s13, %s20
    %p22 = scmp.eq.s32.totalorder %s21, 0
    %s24 = sadd.s32 %s23, 1
    %s25 = scalar_select %p22, %s23, %s24
    %p28 = pneg %p22
    %p29 = scmp.eq.s32.totalorder %s13, 1
    %p30 = por %p28, %p29
    %p31 = scmp.ne.s32.totalorder %s23, %s26
    %p32 = scmp.eq.s32.totalorder %s13, 0
    %p33 = por %p31, %p32
    %p34 = scmp.ne.s32.totalorder %s23, %s26
    %p35 = scmp.eq.s32.totalorder %s18, 1
    %p36 = por %p34, %p35
    %p37 = scmp.ne.s32.totalorder %s26, %s27
    %p38 = scmp.eq.s32.totalorder %s18, 0
    %p39 = por %p37, %p38
    %p40 = scmp.ne.s32.totalorder %s26, %s27
    %p41 = scmp.eq.s32.totalorder %s19, 1
    %p42 = por %p40, %p41
    %p44 = scmp.ne.s32.totalorder %s27, %s43
    %p45 = scmp.eq.s32.totalorder %s19, 0
    %p46 = por %p44, %p45
    %s48 = sadd.s32 %s47, 1
    %p51 = scmp.eq.s32.totalorder %s13, 1
    %p52 = scmp.ne.s32.totalorder %s47, %s49
    %p53 = scmp.eq.s32.totalorder %s13, 0
    %p54 = por %p52, %p53
    %p55 = scmp.ne.s32.totalorder %s47, %s49
    %p56 = scmp.eq.s32.totalorder %s18, 1
    %p57 = por %p55, %p56
    %p58 = scmp.ne.s32.totalorder %s49, %s50
    %p59 = scmp.eq.s32.totalorder %s18, 0
    %p60 = por %p58, %p59
    %p61 = scmp.ne.s32.totalorder %s49, %s50
    %p62 = scmp.eq.s32.totalorder %s19, 1
    %p63 = por %p61, %p62
    %p65 = scmp.ne.s32.totalorder %s50, %s64
    %p66 = scmp.eq.s32.totalorder %s19, 0
    %p67 = por %p65, %p66
    %s69 = sadd.s32 %s68, 1
    %p72 = scmp.eq.s32.totalorder %s13, 1
    %p73 = scmp.ne.s32.totalorder %s68, %s70
    %p74 = scmp.eq.s32.totalorder %s13, 0
    %p75 = por %p73, %p74
    %p76 = scmp.ne.s32.totalorder %s68, %s70
    %p77 = scmp.eq.s32.totalorder %s18, 1
    %p78 = por %p76, %p77
    %p79 = scmp.ne.s32.totalorder %s70, %s71
    %p80 = scmp.eq.s32.totalorder %s18, 0
    %p81 = por %p79, %p80
    %p82 = scmp.ne.s32.totalorder %s70, %s71
    %p83 = scmp.eq.s32.totalorder %s19, 1
    %p84 = por %p82, %p83
    %p86 = scmp.ne.s32.totalorder %s71, %s85
    %p87 = scmp.eq.s32.totalorder %s19, 0
    %p88 = por %p86, %p87
    %s90 = sadd.s32 %s89, 1
    %p93 = scmp.eq.s32.totalorder %s13, 1
    %p94 = scmp.ne.s32.totalorder %s89, %s91
    %p95 = scmp.eq.s32.totalorder %s13, 0
    %p96 = por %p94, %p95
    %p97 = scmp.ne.s32.totalorder %s89, %s91
    %p98 = scmp.eq.s32.totalorder %s18, 1
    %p99 = por %p97, %p98
    %p100 = scmp.ne.s32.totalorder %s91, %s92
    %p101 = scmp.eq.s32.totalorder %s18, 0
    %p102 = por %p100, %p101
    %p103 = scmp.ne.s32.totalorder %s91, %s92
    %p104 = scmp.eq.s32.totalorder %s19, 1
    %p105 = por %p103, %p104
    %p107 = scmp.ne.s32.totalorder %s92, %s106
    %p108 = scmp.eq.s32.totalorder %s19, 0
    %p109 = por %p107, %p108
    %s111 = sadd.s32 %s110, 1
    %p114 = scmp.eq.s32.totalorder %s13, 1
    %p115 = scmp.ne.s32.totalorder %s110, %s112
    %p116 = scmp.eq.s32.totalorder %s13, 0
    %p117 = por %p115, %p116
    %p118 = scmp.ne.s32.totalorder %s110, %s112
    %p119 = scmp.eq.s32.totalorder %s18, 1
    %p120 = por %p118, %p119
    %p121 = scmp.ne.s32.totalorder %s112, %s113
    %p122 = scmp.eq.s32.totalorder %s18, 0
    %p123 = por %p121, %p122
    %p124 = scmp.ne.s32.totalorder %s112, %s113
    %p125 = scmp.eq.s32.totalorder %s19, 1
    %p126 = por %p124, %p125
    %p128 = scmp.ne.s32.totalorder %s113, %s127
    %p129 = scmp.eq.s32.totalorder %s19, 0
    %p130 = por %p128, %p129
    %s132 = sadd.s32 %s131, 1
    %p135 = scmp.eq.s32.totalorder %s13, 1
    %p136 = scmp.ne.s32.totalorder %s131, %s133
    %p137 = scmp.eq.s32.totalorder %s13, 0
    %p138 = por %p136, %p137
    %p139 = scmp.ne.s32.totalorder %s131, %s133
    %p140 = scmp.eq.s32.totalorder %s18, 1
    %p141 = por %p139, %p140
    %p142 = scmp.ne.s32.totalorder %s133, %s134
    %p143 = scmp.eq.s32.totalorder %s18, 0
    %p144 = por %p142, %p143
    %p145 = scmp.ne.s32.totalorder %s133, %s134
    %p146 = scmp.eq.s32.totalorder %s19, 1
    %p147 = por %p145, %p146
    %p149 = scmp.ne.s32.totalorder %s134, %s148
    %p150 = scmp.eq.s32.totalorder %s19, 0
    %p151 = por %p149, %p150
    %s153 = sadd.s32 %s152, 1
    %p156 = scmp.eq.s32.totalorder %s13, 1
    %p157 = scmp.ne.s32.totalorder %s152, %s154
    %p158 = scmp.eq.s32.totalorder %s13, 0
    %p159 = por %p157, %p158
    %p160 = scmp.ne.s32.totalorder %s152, %s154
    %p161 = scmp.eq.s32.totalorder %s18, 1
    %p162 = por %p160, %p161
    %p163 = scmp.ne.s32.totalorder %s154, %s155
    %p164 = scmp.eq.s32.totalorder %s18, 0
    %p165 = por %p163, %p164
    %p166 = scmp.ne.s32.totalorder %s154, %s155
    %p167 = scmp.eq.s32.totalorder %s19, 1
    %p168 = por %p166, %p167
    %p170 = scmp.ne.s32.totalorder %s155, %s169
    %p171 = scmp.eq.s32.totalorder %s19, 0
    %p172 = por %p170, %p171
    %s173 = ssub.s32 %s13, %s20
    %p174 = scmp.eq.s32.totalorder %s173, 0
    %s176 = sadd.s32 %s175, 1
    %s177 = scalar_select %p174, %s175, %s176
    %p180 = pneg %p174
    %p181 = scmp.eq.s32.totalorder %s13, 1
    %p182 = por %p180, %p181
    %p183 = scmp.ne.s32.totalorder %s175, %s178
    %p184 = scmp.eq.s32.totalorder %s13, 0
    %p185 = por %p183, %p184
    %p186 = scmp.ne.s32.totalorder %s175, %s178
    %p187 = scmp.eq.s32.totalorder %s18, 1
    %p188 = por %p186, %p187
    %p189 = scmp.ne.s32.totalorder %s178, %s179
    %p190 = scmp.eq.s32.totalorder %s18, 0
    %p191 = por %p189, %p190
    %p192 = scmp.ne.s32.totalorder %s178, %s179
    %p193 = scmp.eq.s32.totalorder %s19, 1
    %p194 = por %p192, %p193
    %p196 = scmp.ne.s32.totalorder %s179, %s195
    %p197 = scmp.eq.s32.totalorder %s19, 0
    %p198 = por %p196, %p197
    %p199 = scmp.le.s32.totalorder 1, %s13
    %p200 = scmp.lt.s32.totalorder %s13, 3
    %p201 = pnand %p199, %p200
    %p202 = pneg %p201
    // Predicated region
    $region9: #{gnn_forward.11} parent=5 // pred_check
      _
    $region10: #{gnn_forward.11} parent=5 // pred_check_branch
      %204 = sbr.rel (%p201) target = $region12
    $region11: #{gnn_forward.11} parent=5 // pred_region
      %s205 = ssub.s32 %s13, 1
      // Predicated region
      $region13: #{gnn_forward.11} parent=11 // pred_check
        %p206 = pneg %p60
      $region14: #{gnn_forward.11} parent=11 // pred_check_branch
        %208 = sbr.rel (%p206) target = $region16
      $region15: #{gnn_forward.11} parent=11 // pred_region
        _
      $region16: #{gnn_forward.11} parent=11 // pred_fallthru
        _
      // Predicated region
      $region17: #{gnn_forward.11} parent=11 // pred_check
        %p209 = pneg %p81
      $region18: #{gnn_forward.11} parent=11 // pred_check_branch
        %211 = sbr.rel (%p209) target = $region20
      $region19: #{gnn_forward.11} parent=11 // pred_region
        _
      $region20: #{gnn_forward.11} parent=11 // pred_fallthru
        _
      // Predicated region
      $region21: #{gnn_forward.11} parent=11 // pred_check
        %p212 = pneg %p102
      $region22: #{gnn_forward.11} parent=11 // pred_check_branch
        %214 = sbr.rel (%p212) target = $region24
      $region23: #{gnn_forward.11} parent=11 // pred_region
        _
      $region24: #{gnn_forward.11} parent=11 // pred_fallthru
        _
      // Predicated region
      $region25: #{gnn_forward.11} parent=11 // pred_check
        %p215 = pneg %p123
      $region26: #{gnn_forward.11} parent=11 // pred_check_branch
        %217 = sbr.rel (%p215) target = $region28
      $region27: #{gnn_forward.11} parent=11 // pred_region
        _
      $region28: #{gnn_forward.11} parent=11 // pred_fallthru
        _
      // Predicated region
      $region29: #{gnn_forward.11} parent=11 // pred_check
        %p218 = pneg %p144
      $region30: #{gnn_forward.11} parent=11 // pred_check_branch
        %220 = sbr.rel (%p218) target = $region32
      $region31: #{gnn_forward.11} parent=11 // pred_region
        _
      $region32: #{gnn_forward.11} parent=11 // pred_fallthru
        _
      // Predicated region
      $region33: #{gnn_forward.11} parent=11 // pred_check
        %p221 = pneg %p165
      $region34: #{gnn_forward.11} parent=11 // pred_check_branch
        %223 = sbr.rel (%p221) target = $region36
      $region35: #{gnn_forward.11} parent=11 // pred_region
        _
      $region36: #{gnn_forward.11} parent=11 // pred_fallthru
        _
    $region12: #{gnn_forward.11} parent=5 // pred_fallthru
      _
    %p224 = scmp.lt.s32.totalorder %s13, 2
    // Predicated region
    $region37: #{gnn_forward.11} parent=5 // pred_check
      %p225 = pneg %p224
    $region38: #{gnn_forward.11} parent=5 // pred_check_branch
      %227 = sbr.rel (%p225) target = $region40
    $region39: #{gnn_forward.11} parent=5 // pred_region
      // Predicated region
      $region41: #{gnn_forward.11} parent=39 // pred_check
        %p228 = pneg %p33
      $region42: #{gnn_forward.11} parent=39 // pred_check_branch
        %230 = sbr.rel (%p228) target = $region44
      $region43: #{gnn_forward.11} parent=39 // pred_region
        %s231 = smul.u32 6, %s13
        %p232 = scmp.lt.s32.totalorder %s231, 11
        %s233 = scalar_select %p232, %s231, 11
        %s234 = smul.addr %s233, 8
        %s235 = scalar_lea.vmem %s0, %s234
        %s236 = smul.u32 6, %s13
      $region44: #{gnn_forward.11} parent=39 // pred_fallthru
        _
    $region40: #{gnn_forward.11} parent=5 // pred_fallthru
      _
    %p237 = scmp.le.s32.totalorder 1, %s13
    %p238 = scmp.lt.s32.totalorder %s13, 3
    %p239 = pnand %p237, %p238
    %p240 = pneg %p239
    // Predicated region
    $region45: #{gnn_forward.11} parent=5 // pred_check
      _
    $region46: #{gnn_forward.11} parent=5 // pred_check_branch
      %242 = sbr.rel (%p239) target = $region48
    $region47: #{gnn_forward.11} parent=5 // pred_region
      %s243 = ssub.s32 %s13, 1
      %s244 = smul.u32 6, %s18
      %p245 = scmp.lt.s32.totalorder %s244, 11
      %s246 = scalar_select %p245, %s244, 11
      %s247 = smul.addr %s246, 8
      %s248 = scalar_lea.vmem %s0, %s247
      %p249 = pneg %p39
      %p250 = pneg %p36
      %p251 = pneg %p60
      %p252 = pneg %p57
      %p253 = pneg %p81
      %p254 = pneg %p78
      %p255 = pneg %p102
      %p256 = pneg %p99
      %p257 = pneg %p123
      %p258 = pneg %p120
      %p259 = pneg %p144
      %p260 = pneg %p141
      %p261 = pneg %p165
      %p262 = pneg %p162
      %p263 = pneg %p191
      %p264 = pneg %p188
      %s265 = smul.u32 6, %s18
      %p266 = scmp.lt.s32.totalorder %s265, 11
      %s267 = scalar_select %p266, %s265, 11
      %s268 = smul.addr %s267, 4
      %s269 = scalar_lea.vmem %s7, %s268
      %s270 = smul.u32 6, %s18
      %p271 = scmp.lt.s32.totalorder %s270, 11
      %s272 = scalar_select %p271, %s270, 11
      %s273 = smul.addr %s272, 8
      %s274 = scalar_lea.vmem %s0, %s273
      %s275 = smul.u32 6, %s18
      %s276 = smul.u32 6, %s18
      %p277 = scmp.lt.s32.totalorder %s276, 11
      %s278 = scalar_select %p277, %s276, 11
      %s279 = smul.addr %s278, 4
      %s280 = scalar_lea.vmem %s7, %s279
      %s281 = smul.u32 6, %s18
      %v283 = vld [vmem:[%s274] sm:$0xff]
      %v284 = vld [vmem:[%s274 + $0x8] sm:$0xff]
      %v285 = vld [vmem:[%s274 + $0x10] sm:$0xff]
      %v286 = vld [vmem:[%s274 + $0x18] sm:$0xff]
      %v287 = vld [vmem:[%s274 + $0x20] sm:$0xff]
      %v288 = vld [vmem:[%s274 + $0x28] sm:$0xff]
      %v289 = vld [vmem:[%s1] sm:$0x1]
      %v290 = vld [vmem:[%s2] sm:$0x1]
      %vm291 = vcmask 146432
      %v292 = vsel %vm291, %v283, 0.0
      %293 = vadd.xlane.f32.xlu0 %v292
      %v294 = vpop.xlane.xlu0 %293
      %v295 = vsel %vm291, %v284, 0.0
      %296 = vadd.xlane.f32.xlu0 %v295
      %v297 = vpop.xlane.xlu0 %296
      %v298 = vsel %vm291, %v285, 0.0
      %299 = vadd.xlane.f32.xlu0 %v298
      %v300 = vpop.xlane.xlu0 %299
      %v301 = vsel %vm291, %v286, 0.0
      %302 = vadd.xlane.f32.xlu0 %v301
      %v303 = vpop.xlane.xlu0 %302
      %v304 = vsel %vm291, %v287, 0.0
      %305 = vadd.xlane.f32.xlu0 %v304
      %v306 = vpop.xlane.xlu0 %305
      %v307 = vsel %vm291, %v288, 0.0
      %308 = vadd.xlane.f32.xlu0 %v307
      %v309 = vpop.xlane.xlu0 %308
      %v310 = vrcp.pop 18.0
      %v311 = vmul.f32 18.0, %v310
      %v312 = vsub.f32 1.0, %v311
      %v313 = vmul.f32 %v310, %v312
      %v314 = vadd.f32 %v310, %v313
      %vm315 = vweird.f32 %v310
      %v316 = vsel %vm315, %v310, %v314
      %v317 = vmul.f32 %v294, %v316
      %v318 = vmul.f32 %v297, %v316
      %v319 = vmul.f32 %v300, %v316
      %v320 = vmul.f32 %v303, %v316
      %v321 = vmul.f32 %v306, %v316
      %v322 = vmul.f32 %v309, %v316
      %v323 = vsub.f32 %v283, %v317
      %v324 = vsub.f32 %v284, %v318
      %v325 = vsub.f32 %v285, %v319
      %v326 = vsub.f32 %v286, %v320
      %v327 = vsub.f32 %v287, %v321
      %v328 = vsub.f32 %v288, %v322
      %v329 = vmul.f32 %v323, %v323
      %v330 = vmul.f32 %v324, %v324
      %v331 = vmul.f32 %v325, %v325
      %v332 = vmul.f32 %v326, %v326
      %v333 = vmul.f32 %v327, %v327
      %v334 = vmul.f32 %v328, %v328
      %v335 = vsel %vm291, %v329, 0.0
      %336 = vadd.xlane.f32.xlu0 %v335
      %v337 = vpop.xlane.xlu0 %336
      %v338 = vsel %vm291, %v330, 0.0
      %339 = vadd.xlane.f32.xlu0 %v338
      %v340 = vpop.xlane.xlu0 %339
      %v341 = vsel %vm291, %v331, 0.0
      %342 = vadd.xlane.f32.xlu0 %v341
      %v343 = vpop.xlane.xlu0 %342
      %v344 = vsel %vm291, %v332, 0.0
      %345 = vadd.xlane.f32.xlu0 %v344
      %v346 = vpop.xlane.xlu0 %345
      %v347 = vsel %vm291, %v333, 0.0
      %348 = vadd.xlane.f32.xlu0 %v347
      %v349 = vpop.xlane.xlu0 %348
      %v350 = vsel %vm291, %v334, 0.0
      %351 = vadd.xlane.f32.xlu0 %v350
      %v352 = vpop.xlane.xlu0 %351
      %v353 = vmul.f32 %v337, %v316
      %v354 = vmul.f32 %v340, %v316
      %v355 = vmul.f32 %v343, %v316
      %v356 = vmul.f32 %v346, %v316
      %v357 = vmul.f32 %v349, %v316
      %v358 = vmul.f32 %v352, %v316
      %v359 = vadd.f32 %v353, 1e-05
      %v360 = vadd.f32 %v354, 1e-05
      %v361 = vadd.f32 %v355, 1e-05
      %v362 = vadd.f32 %v356, 1e-05
      %v363 = vadd.f32 %v357, 1e-05
      %v364 = vadd.f32 %v358, 1e-05
      %v365 = vrsqrt.pop %v359
      %v366 = vmul.f32 %v365, %v359
      %v367 = vmul.f32 %v366, %v365
      %v368 = vmul.f32 0.5, %v367
      %v369 = vsub.f32 1.5, %v368
      %v370 = vmul.f32 %v365, %v369
      %vm371 = vweird.f32 %v359
      %vm372 = vweird.f32 %v365
      %vm373 = vmor %vm371, %vm372
      %v374 = vsel %vm373, %v365, %v370
      %v375 = vrsqrt.pop %v360
      %v376 = vmul.f32 %v375, %v360
      %v377 = vmul.f32 %v376, %v375
      %v378 = vmul.f32 0.5, %v377
      %v379 = vsub.f32 1.5, %v378
      %v380 = vmul.f32 %v375, %v379
      %vm381 = vweird.f32 %v360
      %vm382 = vweird.f32 %v375
      %vm383 = vmor %vm381, %vm382
      %v384 = vsel %vm383, %v375, %v380
      %v385 = vrsqrt.pop %v361
      %v386 = vmul.f32 %v385, %v361
      %v387 = vmul.f32 %v386, %v385
      %v388 = vmul.f32 0.5, %v387
      %v389 = vsub.f32 1.5, %v388
      %v390 = vmul.f32 %v385, %v389
      %vm391 = vweird.f32 %v361
      %vm392 = vweird.f32 %v385
      %vm393 = vmor %vm391, %vm392
      %v394 = vsel %vm393, %v385, %v390
      %v395 = vrsqrt.pop %v362
      %v396 = vmul.f32 %v395, %v362
      %v397 = vmul.f32 %v396, %v395
      %v398 = vmul.f32 0.5, %v397
      %v399 = vsub.f32 1.5, %v398
      %v400 = vmul.f32 %v395, %v399
      %vm401 = vweird.f32 %v362
      %vm402 = vweird.f32 %v395
      %vm403 = vmor %vm401, %vm402
      %v404 = vsel %vm403, %v395, %v400
      %v405 = vrsqrt.pop %v363
      %v406 = vmul.f32 %v405, %v363
      %v407 = vmul.f32 %v406, %v405
      %v408 = vmul.f32 0.5, %v407
      %v409 = vsub.f32 1.5, %v408
      %v410 = vmul.f32 %v405, %v409
      %vm411 = vweird.f32 %v363
      %vm412 = vweird.f32 %v405
      %vm413 = vmor %vm411, %vm412
      %v414 = vsel %vm413, %v405, %v410
      %v415 = vrsqrt.pop %v364
      %v416 = vmul.f32 %v415, %v364
      %v417 = vmul.f32 %v416, %v415
      %v418 = vmul.f32 0.5, %v417
      %v419 = vsub.f32 1.5, %v418
      %v420 = vmul.f32 %v415, %v419
      %vm421 = vweird.f32 %v364
      %vm422 = vweird.f32 %v415
      %vm423 = vmor %vm421, %vm422
      %v424 = vsel %vm423, %v415, %v420
      %v425 = vmul.f32 %v323, %v374
      %v426 = vmul.f32 %v324, %v384
      %v427 = vmul.f32 %v325, %v394
      %v428 = vmul.f32 %v326, %v404
      %v429 = vmul.f32 %v327, %v414
      %v430 = vmul.f32 %v328, %v424
      %v432 = vperm.slane %v289, 0
      %v434 = vmul.f32 %v425, %v432
      %v435 = vmul.f32 %v426, %v432
      %v436 = vmul.f32 %v427, %v432
      %v437 = vmul.f32 %v428, %v432
      %v438 = vmul.f32 %v429, %v432
      %v439 = vmul.f32 %v430, %v432
      %v441 = vperm.slane %v290, 0
      %v443 = vadd.f32 %v434, %v441
      %v444 = vadd.f32 %v435, %v441
      %v445 = vadd.f32 %v436, %v441
      %v446 = vadd.f32 %v437, %v441
      %v447 = vadd.f32 %v438, %v441
      %v448 = vadd.f32 %v439, %v441
      %v449 = vpack.c.bf16 %v444, %v443
      %v450 = vpack.c.bf16 %v446, %v445
      %v451 = vpack.c.bf16 %v448, %v447
      %v452 = vld [vmem:[%s3] sm:$0xf]
      %v453 = vld [vmem:[%s3 + $0x4] sm:$0xf]
      %v454 = vld [vmem:[%s3 + $0x8] sm:$0x1]
      %v455 = vld [vmem:[%s4] sm:$0x1]
      %v457 = vperm.slane %v455, 0
      %v462 = vunpack.c.l.b16 %v452
      %v463 = vunpack.c.l.b16 %v453
      %v464 = vunpack.c.l.b16 %v454
      %v465 = vpack.c.b16 %v463, %v462
      %v466 = vpack.c.b16 %v464, %v464
      %v469 = vsel %vm291, %v449, 0
      %v472 = vsel %vm291, %v450, 0
      %v475 = vsel %vm291, %v451, 0
      %vm477 = vcmask 1040384
      %v479 = vsel %vm477, %v466, 0
      %481 = vmatpush.bf16.msra.mxu0 0
      %482 = vmatpush.bf16.msra.mxu0 0
      %483 = vmatpush.bf16.msra.mxu0 0
      %484 = vmatpush.bf16.msra.mxu0 0
      %485 = vmatpush.bf16.msra.mxu0 0
      %486 = vmatpush.bf16.msra.mxu0 0
      %487 = vmatpush.bf16.msra.mxu0 %v479
      %488 = vmatpush.bf16.msra.mxu0 %v465
      %489 = vmatmul.bf16.gmra.mxu0 %v469
      %v490 = vpop.f32.mrf.mxu0
      %v491 = vadd.f32 %v457, %v490
      %v492 = vpop.f32.mrf.mxu0
      %v493 = vadd.f32 %v457, %v492
      %494 = vmatmul.bf16.gmra.mxu0 %v472
      %v495 = vpop.f32.mrf.mxu0
      %v496 = vadd.f32 %v457, %v495
      %v497 = vpop.f32.mrf.mxu0
      %v498 = vadd.f32 %v457, %v497
      %499 = vmatmul.bf16.gmra.mxu0 %v475
      %v500 = vpop.f32.mrf.mxu0
      %v501 = vadd.f32 %v457, %v500
      %v502 = vpop.f32.mrf.mxu0
      %v503 = vadd.f32 %v457, %v502
      %504 = vdwg.mxu0
      %v505 = vmax.f32 %v491, 0.0
      %v506 = vmax.f32 %v493, 0.0
      %v507 = vmax.f32 %v496, 0.0
      %v508 = vmax.f32 %v498, 0.0
      %v509 = vmax.f32 %v501, 0.0
      %v510 = vmax.f32 %v503, 0.0
      %v511 = vpack.c.bf16 %v506, %v505
      %v512 = vpack.c.bf16 %v508, %v507
      %v513 = vpack.c.bf16 %v510, %v509
      %v514 = vld [vmem:[%s5] sm:$0xf]
      %v515 = vld [vmem:[%s5 + $0x4] sm:$0xf]
      %v516 = vld [vmem:[%s5 + $0x8] sm:$0xf]
      %v517 = vld [vmem:[%s5 + $0xc] sm:$0xf]
      %v518 = vld [vmem:[%s5 + $0x10] sm:$0xf]
      %v519 = vld [vmem:[%s5 + $0x14] sm:$0xf]
      %v520 = vld [vmem:[%s5 + $0x18] sm:$0xf]
      %v521 = vld [vmem:[%s5 + $0x1c] sm:$0xf]
      %v522 = vld [vmem:[%s6] sm:$0x1]
      %v524 = vperm.slane %v522, 0
      %v534 = vunpack.c.l.b16 %v514
      %v535 = vunpack.c.l.b16 %v515
      %v536 = vunpack.c.l.b16 %v516
      %v537 = vunpack.c.l.b16 %v517
      %v538 = vunpack.c.l.b16 %v518
      %v539 = vunpack.c.l.b16 %v519
      %v540 = vunpack.c.l.b16 %v520
      %v541 = vunpack.c.l.b16 %v521
      %v542 = vpack.c.b16 %v535, %v534
      %v543 = vpack.c.b16 %v537, %v536
      %v544 = vpack.c.b16 %v539, %v538
      %v545 = vpack.c.b16 %v541, %v540
      %vm550 = vcmask 523264
      %v552 = vsel %vm550, %v511, 0
      %v555 = vsel %vm550, %v512, 0
      %v558 = vsel %vm550, %v513, 0
      %560 = vmatpush.bf16.msra.mxu0 0
      %561 = vmatpush.bf16.msra.mxu0 0
      %562 = vmatpush.bf16.msra.mxu0 0
      %563 = vmatpush.bf16.msra.mxu0 0
      %564 = vmatpush.bf16.msra.mxu0 %v545
      %565 = vmatpush.bf16.msra.mxu0 %v544
      %566 = vmatpush.bf16.msra.mxu0 %v543
      %567 = vmatpush.bf16.msra.mxu0 %v542
      %568 = vmatmul.bf16.gmra.mxu0 %v552
      %v569 = vpop.f32.mrf.mxu0
      %v570 = vadd.f32 %v524, %v569
      %v571 = vpop.f32.mrf.mxu0
      %v572 = vadd.f32 %v524, %v571
      %573 = vmatmul.bf16.gmra.mxu0 %v555
      %v574 = vpop.f32.mrf.mxu0
      %v575 = vadd.f32 %v524, %v574
      %v576 = vpop.f32.mrf.mxu0
      %v577 = vadd.f32 %v524, %v576
      %578 = vmatmul.bf16.gmra.mxu0 %v558
      %v579 = vpop.f32.mrf.mxu0
      %v580 = vadd.f32 %v524, %v579
      %v581 = vpop.f32.mrf.mxu0
      %v582 = vadd.f32 %v524, %v581
      %583 = vdwg.mxu0
      %v584 = vmax.f32 %v570, 0.0
      %v585 = vmax.f32 %v572, 0.0
      %v586 = vmax.f32 %v575, 0.0
      %v587 = vmax.f32 %v577, 0.0
      %v588 = vmax.f32 %v580, 0.0
      %v589 = vmax.f32 %v582, 0.0
      %v590 = vpack.c.bf16 %v584, %v584
      %v591 = vpack.c.bf16 %v585, %v585
      %v592 = vpack.c.bf16 %v586, %v586
      %v593 = vpack.c.bf16 %v587, %v587
      %v594 = vpack.c.bf16 %v588, %v588
      %v595 = vpack.c.bf16 %v589, %v589
      %vm596 = vcmask 519168
      %597 = vst.msk [vmem:[%s280] sm:$0xf] %vm596, %v590
      %598 = vst.msk [vmem:[%s280 + $0x4] sm:$0xf] %vm596, %v591
      %599 = vst.msk [vmem:[%s280 + $0x8] sm:$0xf] %vm596, %v592
      %600 = vst.msk [vmem:[%s280 + $0xc] sm:$0xf] %vm596, %v593
      %601 = vst.msk [vmem:[%s280 + $0x10] sm:$0xf] %vm596, %v594
      %602 = vst.msk [vmem:[%s280 + $0x14] sm:$0xf] %vm596, %v595
      %s603 = smul.u32 6, %s18
      %p604 = scmp.lt.s32.totalorder %s603, 11
      %s605 = scalar_select %p604, %s603, 11
      %s606 = smul.addr %s605, 4
      %s607 = scalar_lea.vmem %s7, %s606
      // Predicated region
      $region49: #{gnn_forward.11} parent=47 // pred_check
        %p608 = pneg %p188
      $region50: #{gnn_forward.11} parent=47 // pred_check_branch
        %610 = sbr.rel (%p608) target = $region52
      $region51: #{gnn_forward.11} parent=47 // pred_region
        %s611 = smul.u32 6, %s18
      $region52: #{gnn_forward.11} parent=47 // pred_fallthru
        _
    $region48: #{gnn_forward.11} parent=5 // pred_fallthru
      _
    %p612 = scmp.le.s32.totalorder 2, %s13
    // Predicated region
    $region53: #{gnn_forward.11} parent=5 // pred_check
      %p613 = pneg %p612
    $region54: #{gnn_forward.11} parent=5 // pred_check_branch
      %615 = sbr.rel (%p613) target = $region56
    $region55: #{gnn_forward.11} parent=5 // pred_region
      %s616 = ssub.s32 %s13, 2
      // Predicated region
      $region57: #{gnn_forward.11} parent=55 // pred_check
        %p617 = pneg %p194
      $region58: #{gnn_forward.11} parent=55 // pred_check_branch
        %619 = sbr.rel (%p617) target = $region60
      $region59: #{gnn_forward.11} parent=55 // pred_region
        %s620 = smul.u32 6, %s19
        %p621 = scmp.lt.s32.totalorder %s620, 11
        %s622 = scalar_select %p621, %s620, 11
        %s623 = smul.addr %s622, 4
        %s624 = scalar_lea.vmem %s7, %s623
      $region60: #{gnn_forward.11} parent=55 // pred_fallthru
        _
    $region56: #{gnn_forward.11} parent=5 // pred_fallthru
      _
  $region6: #{gnn_forward.11} parent=0 // loop_footer
    %s17 = sadd.s32 1, %s13
  $region7: #{gnn_forward.11} parent=0 // loop_footer_branch
    %12 = sbr.rel target = $region3
  $region8: #{gnn_forward.11} parent=0 // loop_exit
    _

// kernel: gnn_forward.12
$region0: #{gnn_forward.12}
  #allocation0 [shape = 'u32[]', space=smem, size = 0x4, offset = 0x4, fixed_abs, tag = 'smem constant byte address 0x4 - core index']
  #allocation1 [shape = 'u32[72,128]{1,0:T(1,128)}', space=vmem, size = 0x9000, scoped, tag = 'internal scratch']
  %s0 = inlined_call_operand.vmem [shape: bf16[224,128], index: 0, kind: input, shape index: {}]
  %s1 = inlined_call_operand.vmem [shape: bf16[128,64], index: 1, kind: input, shape index: {}]
  %s2 = inlined_call_operand.vmem [shape: f32[1,64], index: 2, kind: input, shape index: {}]
  %s3 = inlined_call_operand.vmem [shape: f32[1,64], index: 3, kind: input, shape index: {}]
  %s4 = inlined_call_operand.vmem [shape: f32[1,64], index: 4, kind: input, shape index: {}]
  %s5 = inlined_call_operand.vmem [shape: bf16[64,64], index: 5, kind: input, shape index: {}]
  %s6 = inlined_call_operand.vmem [shape: f32[1,64], index: 6, kind: input, shape index: {}]
  %s7 = inlined_call_operand.vmem [shape: bf16[224,64], index: 7, kind: output, shape index: {}]
  %s8 = sld [smem:[#allocation0]]
  $region61: #{gnn_forward.12} parent=0
    _
  %s10 = ssub.s32 1, %s8
  %s11 = scalar_select 0, %s10, %s8
  loop: start=0, step=1, limit=4
  $region2: #{gnn_forward.12} parent=0 // loop_pre_header
    _
  $region3: #{gnn_forward.12} parent=0 // loop_header
    %s13 = sphi 0, %s17
    %p14 = scmp.ge.s32.totalorder %s13, 4
    %s23 = sphi 0, %s25
    %s26 = sphi 0, %s23
    %s27 = sphi 0, %s26
    %s43 = sphi 0, %s27
    %s47 = sphi 0, %s47
    %s49 = sphi 0, %s47
    %s50 = sphi 0, %s49
    %s64 = sphi 0, %s50
    %s68 = sphi 0, %s68
    %s70 = sphi 0, %s68
    %s71 = sphi 0, %s70
    %s85 = sphi 0, %s71
    %s89 = sphi 0, %s89
    %s91 = sphi 0, %s89
    %s92 = sphi 0, %s91
    %s106 = sphi 0, %s92
    %s110 = sphi 0, %s110
    %s112 = sphi 0, %s110
    %s113 = sphi 0, %s112
    %s127 = sphi 0, %s113
    %s131 = sphi 0, %s131
    %s133 = sphi 0, %s131
    %s134 = sphi 0, %s133
    %s148 = sphi 0, %s134
    %s152 = sphi 0, %s152
    %s154 = sphi 0, %s152
    %s155 = sphi 0, %s154
    %s169 = sphi 0, %s155
    %s175 = sphi 0, %s177
    %s178 = sphi 0, %s175
    %s179 = sphi 0, %s178
    %s195 = sphi 0, %s179
  $region4: #{gnn_forward.12} parent=0 // loop_header_branch
    %16 = sbr.rel (%p14) target = $region8
  $region5: #{gnn_forward.12} parent=0 // loop_body
    %s18 = ssub.s32 %s13, 1
    %s19 = ssub.s32 %s13, 2
    %s20 = sadd.s32 %s13, 1
    %s21 = ssub.s32 %s13, %s20
    %p22 = scmp.eq.s32.totalorder %s21, 0
    %s24 = sadd.s32 %s23, 1
    %s25 = scalar_select %p22, %s23, %s24
    %p28 = pneg %p22
    %p29 = scmp.eq.s32.totalorder %s13, 1
    %p30 = por %p28, %p29
    %p31 = scmp.ne.s32.totalorder %s23, %s26
    %p32 = scmp.eq.s32.totalorder %s13, 0
    %p33 = por %p31, %p32
    %p34 = scmp.ne.s32.totalorder %s23, %s26
    %p35 = scmp.eq.s32.totalorder %s18, 1
    %p36 = por %p34, %p35
    %p37 = scmp.ne.s32.totalorder %s26, %s27
    %p38 = scmp.eq.s32.totalorder %s18, 0
    %p39 = por %p37, %p38
    %p40 = scmp.ne.s32.totalorder %s26, %s27
    %p41 = scmp.eq.s32.totalorder %s19, 1
    %p42 = por %p40, %p41
    %p44 = scmp.ne.s32.totalorder %s27, %s43
    %p45 = scmp.eq.s32.totalorder %s19, 0
    %p46 = por %p44, %p45
    %s48 = sadd.s32 %s47, 1
    %p51 = scmp.eq.s32.totalorder %s13, 1
    %p52 = scmp.ne.s32.totalorder %s47, %s49
    %p53 = scmp.eq.s32.totalorder %s13, 0
    %p54 = por %p52, %p53
    %p55 = scmp.ne.s32.totalorder %s47, %s49
    %p56 = scmp.eq.s32.totalorder %s18, 1
    %p57 = por %p55, %p56
    %p58 = scmp.ne.s32.totalorder %s49, %s50
    %p59 = scmp.eq.s32.totalorder %s18, 0
    %p60 = por %p58, %p59
    %p61 = scmp.ne.s32.totalorder %s49, %s50
    %p62 = scmp.eq.s32.totalorder %s19, 1
    %p63 = por %p61, %p62
    %p65 = scmp.ne.s32.totalorder %s50, %s64
    %p66 = scmp.eq.s32.totalorder %s19, 0
    %p67 = por %p65, %p66
    %s69 = sadd.s32 %s68, 1
    %p72 = scmp.eq.s32.totalorder %s13, 1
    %p73 = scmp.ne.s32.totalorder %s68, %s70
    %p74 = scmp.eq.s32.totalorder %s13, 0
    %p75 = por %p73, %p74
    %p76 = scmp.ne.s32.totalorder %s68, %s70
    %p77 = scmp.eq.s32.totalorder %s18, 1
    %p78 = por %p76, %p77
    %p79 = scmp.ne.s32.totalorder %s70, %s71
    %p80 = scmp.eq.s32.totalorder %s18, 0
    %p81 = por %p79, %p80
    %p82 = scmp.ne.s32.totalorder %s70, %s71
    %p83 = scmp.eq.s32.totalorder %s19, 1
    %p84 = por %p82, %p83
    %p86 = scmp.ne.s32.totalorder %s71, %s85
    %p87 = scmp.eq.s32.totalorder %s19, 0
    %p88 = por %p86, %p87
    %s90 = sadd.s32 %s89, 1
    %p93 = scmp.eq.s32.totalorder %s13, 1
    %p94 = scmp.ne.s32.totalorder %s89, %s91
    %p95 = scmp.eq.s32.totalorder %s13, 0
    %p96 = por %p94, %p95
    %p97 = scmp.ne.s32.totalorder %s89, %s91
    %p98 = scmp.eq.s32.totalorder %s18, 1
    %p99 = por %p97, %p98
    %p100 = scmp.ne.s32.totalorder %s91, %s92
    %p101 = scmp.eq.s32.totalorder %s18, 0
    %p102 = por %p100, %p101
    %p103 = scmp.ne.s32.totalorder %s91, %s92
    %p104 = scmp.eq.s32.totalorder %s19, 1
    %p105 = por %p103, %p104
    %p107 = scmp.ne.s32.totalorder %s92, %s106
    %p108 = scmp.eq.s32.totalorder %s19, 0
    %p109 = por %p107, %p108
    %s111 = sadd.s32 %s110, 1
    %p114 = scmp.eq.s32.totalorder %s13, 1
    %p115 = scmp.ne.s32.totalorder %s110, %s112
    %p116 = scmp.eq.s32.totalorder %s13, 0
    %p117 = por %p115, %p116
    %p118 = scmp.ne.s32.totalorder %s110, %s112
    %p119 = scmp.eq.s32.totalorder %s18, 1
    %p120 = por %p118, %p119
    %p121 = scmp.ne.s32.totalorder %s112, %s113
    %p122 = scmp.eq.s32.totalorder %s18, 0
    %p123 = por %p121, %p122
    %p124 = scmp.ne.s32.totalorder %s112, %s113
    %p125 = scmp.eq.s32.totalorder %s19, 1
    %p126 = por %p124, %p125
    %p128 = scmp.ne.s32.totalorder %s113, %s127
    %p129 = scmp.eq.s32.totalorder %s19, 0
    %p130 = por %p128, %p129
    %s132 = sadd.s32 %s131, 1
    %p135 = scmp.eq.s32.totalorder %s13, 1
    %p136 = scmp.ne.s32.totalorder %s131, %s133
    %p137 = scmp.eq.s32.totalorder %s13, 0
    %p138 = por %p136, %p137
    %p139 = scmp.ne.s32.totalorder %s131, %s133
    %p140 = scmp.eq.s32.totalorder %s18, 1
    %p141 = por %p139, %p140
    %p142 = scmp.ne.s32.totalorder %s133, %s134
    %p143 = scmp.eq.s32.totalorder %s18, 0
    %p144 = por %p142, %p143
    %p145 = scmp.ne.s32.totalorder %s133, %s134
    %p146 = scmp.eq.s32.totalorder %s19, 1
    %p147 = por %p145, %p146
    %p149 = scmp.ne.s32.totalorder %s134, %s148
    %p150 = scmp.eq.s32.totalorder %s19, 0
    %p151 = por %p149, %p150
    %s153 = sadd.s32 %s152, 1
    %p156 = scmp.eq.s32.totalorder %s13, 1
    %p157 = scmp.ne.s32.totalorder %s152, %s154
    %p158 = scmp.eq.s32.totalorder %s13, 0
    %p159 = por %p157, %p158
    %p160 = scmp.ne.s32.totalorder %s152, %s154
    %p161 = scmp.eq.s32.totalorder %s18, 1
    %p162 = por %p160, %p161
    %p163 = scmp.ne.s32.totalorder %s154, %s155
    %p164 = scmp.eq.s32.totalorder %s18, 0
    %p165 = por %p163, %p164
    %p166 = scmp.ne.s32.totalorder %s154, %s155
    %p167 = scmp.eq.s32.totalorder %s19, 1
    %p168 = por %p166, %p167
    %p170 = scmp.ne.s32.totalorder %s155, %s169
    %p171 = scmp.eq.s32.totalorder %s19, 0
    %p172 = por %p170, %p171
    %s173 = ssub.s32 %s13, %s20
    %p174 = scmp.eq.s32.totalorder %s173, 0
    %s176 = sadd.s32 %s175, 1
    %s177 = scalar_select %p174, %s175, %s176
    %p180 = pneg %p174
    %p181 = scmp.eq.s32.totalorder %s13, 1
    %p182 = por %p180, %p181
    %p183 = scmp.ne.s32.totalorder %s175, %s178
    %p184 = scmp.eq.s32.totalorder %s13, 0
    %p185 = por %p183, %p184
    %p186 = scmp.ne.s32.totalorder %s175, %s178
    %p187 = scmp.eq.s32.totalorder %s18, 1
    %p188 = por %p186, %p187
    %p189 = scmp.ne.s32.totalorder %s178, %s179
    %p190 = scmp.eq.s32.totalorder %s18, 0
    %p191 = por %p189, %p190
    %p192 = scmp.ne.s32.totalorder %s178, %s179
    %p193 = scmp.eq.s32.totalorder %s19, 1
    %p194 = por %p192, %p193
    %p196 = scmp.ne.s32.totalorder %s179, %s195
    %p197 = scmp.eq.s32.totalorder %s19, 0
    %p198 = por %p196, %p197
    %p199 = scmp.le.s32.totalorder 1, %s13
    %p200 = scmp.lt.s32.totalorder %s13, 3
    %p201 = pnand %p199, %p200
    %p202 = pneg %p201
    // Predicated region
    $region9: #{gnn_forward.12} parent=5 // pred_check
      _
    $region10: #{gnn_forward.12} parent=5 // pred_check_branch
      %204 = sbr.rel (%p201) target = $region12
    $region11: #{gnn_forward.12} parent=5 // pred_region
      %s205 = ssub.s32 %s13, 1
      // Predicated region
      $region13: #{gnn_forward.12} parent=11 // pred_check
        %p206 = pneg %p60
      $region14: #{gnn_forward.12} parent=11 // pred_check_branch
        %208 = sbr.rel (%p206) target = $region16
      $region15: #{gnn_forward.12} parent=11 // pred_region
        _
      $region16: #{gnn_forward.12} parent=11 // pred_fallthru
        _
      // Predicated region
      $region17: #{gnn_forward.12} parent=11 // pred_check
        %p209 = pneg %p81
      $region18: #{gnn_forward.12} parent=11 // pred_check_branch
        %211 = sbr.rel (%p209) target = $region20
      $region19: #{gnn_forward.12} parent=11 // pred_region
        _
      $region20: #{gnn_forward.12} parent=11 // pred_fallthru
        _
      // Predicated region
      $region21: #{gnn_forward.12} parent=11 // pred_check
        %p212 = pneg %p102
      $region22: #{gnn_forward.12} parent=11 // pred_check_branch
        %214 = sbr.rel (%p212) target = $region24
      $region23: #{gnn_forward.12} parent=11 // pred_region
        _
      $region24: #{gnn_forward.12} parent=11 // pred_fallthru
        _
      // Predicated region
      $region25: #{gnn_forward.12} parent=11 // pred_check
        %p215 = pneg %p123
      $region26: #{gnn_forward.12} parent=11 // pred_check_branch
        %217 = sbr.rel (%p215) target = $region28
      $region27: #{gnn_forward.12} parent=11 // pred_region
        _
      $region28: #{gnn_forward.12} parent=11 // pred_fallthru
        _
      // Predicated region
      $region29: #{gnn_forward.12} parent=11 // pred_check
        %p218 = pneg %p144
      $region30: #{gnn_forward.12} parent=11 // pred_check_branch
        %220 = sbr.rel (%p218) target = $region32
      $region31: #{gnn_forward.12} parent=11 // pred_region
        _
      $region32: #{gnn_forward.12} parent=11 // pred_fallthru
        _
      // Predicated region
      $region33: #{gnn_forward.12} parent=11 // pred_check
        %p221 = pneg %p165
      $region34: #{gnn_forward.12} parent=11 // pred_check_branch
        %223 = sbr.rel (%p221) target = $region36
      $region35: #{gnn_forward.12} parent=11 // pred_region
        _
      $region36: #{gnn_forward.12} parent=11 // pred_fallthru
        _
    $region12: #{gnn_forward.12} parent=5 // pred_fallthru
      _
    %p224 = scmp.lt.s32.totalorder %s13, 2
    // Predicated region
    $region37: #{gnn_forward.12} parent=5 // pred_check
      %p225 = pneg %p224
    $region38: #{gnn_forward.12} parent=5 // pred_check_branch
      %227 = sbr.rel (%p225) target = $region40
    $region39: #{gnn_forward.12} parent=5 // pred_region
      // Predicated region
      $region41: #{gnn_forward.12} parent=39 // pred_check
        %p228 = pneg %p33
      $region42: #{gnn_forward.12} parent=39 // pred_check_branch
        %230 = sbr.rel (%p228) target = $region44
      $region43: #{gnn_forward.12} parent=39 // pred_region
        %s231 = smul.u32 14, %s13
        %p232 = scmp.lt.s32.totalorder %s231, 27
        %s233 = scalar_select %p232, %s231, 27
        %s234 = smul.addr %s233, 4
        %s235 = scalar_lea.vmem %s0, %s234
        %s236 = smul.u32 14, %s13
      $region44: #{gnn_forward.12} parent=39 // pred_fallthru
        _
    $region40: #{gnn_forward.12} parent=5 // pred_fallthru
      _
    %p237 = scmp.le.s32.totalorder 1, %s13
    %p238 = scmp.lt.s32.totalorder %s13, 3
    %p239 = pnand %p237, %p238
    %p240 = pneg %p239
    // Predicated region
    $region45: #{gnn_forward.12} parent=5 // pred_check
      _
    $region46: #{gnn_forward.12} parent=5 // pred_check_branch
      %242 = sbr.rel (%p239) target = $region48
    $region47: #{gnn_forward.12} parent=5 // pred_region
      %s243 = ssub.s32 %s13, 1
      %s244 = smul.u32 14, %s18
      %p245 = scmp.lt.s32.totalorder %s244, 27
      %s246 = scalar_select %p245, %s244, 27
      %s247 = smul.addr %s246, 4
      %s248 = scalar_lea.vmem %s0, %s247
      %p249 = pneg %p39
      %p250 = pneg %p36
      %p251 = pneg %p60
      %p252 = pneg %p57
      %p253 = pneg %p81
      %p254 = pneg %p78
      %p255 = pneg %p102
      %p256 = pneg %p99
      %p257 = pneg %p123
      %p258 = pneg %p120
      %p259 = pneg %p144
      %p260 = pneg %p141
      %p261 = pneg %p165
      %p262 = pneg %p162
      %p263 = pneg %p191
      %p264 = pneg %p188
      %s265 = smul.u32 14, %s18
      %p266 = scmp.lt.s32.totalorder %s265, 27
      %s267 = scalar_select %p266, %s265, 27
      %s268 = smul.addr %s267, 4
      %s269 = scalar_lea.vmem %s7, %s268
      %s270 = smul.u32 14, %s18
      %p271 = scmp.lt.s32.totalorder %s270, 27
      %s272 = scalar_select %p271, %s270, 27
      %s273 = smul.addr %s272, 4
      %s274 = scalar_lea.vmem %s0, %s273
      %s275 = smul.u32 14, %s18
      %s276 = smul.u32 14, %s18
      %p277 = scmp.lt.s32.totalorder %s276, 27
      %s278 = scalar_select %p277, %s276, 27
      %s279 = smul.addr %s278, 4
      %s280 = scalar_lea.vmem %s7, %s279
      %s281 = smul.u32 14, %s18
      %v283 = vld [vmem:[%s274] sm:$0xf]
      %v284 = vld [vmem:[%s274 + $0x4] sm:$0xf]
      %v285 = vld [vmem:[%s274 + $0x8] sm:$0xf]
      %v286 = vld [vmem:[%s274 + $0xc] sm:$0xf]
      %v287 = vld [vmem:[%s274 + $0x10] sm:$0xf]
      %v288 = vld [vmem:[%s274 + $0x14] sm:$0xf]
      %v289 = vld [vmem:[%s274 + $0x18] sm:$0xf]
      %v290 = vld [vmem:[%s274 + $0x1c] sm:$0xf]
      %v291 = vld [vmem:[%s274 + $0x20] sm:$0xf]
      %v292 = vld [vmem:[%s274 + $0x24] sm:$0xf]
      %v293 = vld [vmem:[%s274 + $0x28] sm:$0xf]
      %v294 = vld [vmem:[%s274 + $0x2c] sm:$0xf]
      %v295 = vld [vmem:[%s274 + $0x30] sm:$0xf]
      %v296 = vld [vmem:[%s274 + $0x34] sm:$0xf]
      %v297 = vld [vmem:[%s1] sm:$0xf]
      %v298 = vld [vmem:[%s1 + $0x4] sm:$0xf]
      %v299 = vld [vmem:[%s1 + $0x8] sm:$0xf]
      %v300 = vld [vmem:[%s1 + $0xc] sm:$0xf]
      %v301 = vld [vmem:[%s1 + $0x10] sm:$0xf]
      %v302 = vld [vmem:[%s1 + $0x14] sm:$0xf]
      %v303 = vld [vmem:[%s1 + $0x18] sm:$0xf]
      %v304 = vld [vmem:[%s1 + $0x1c] sm:$0xf]
      %v305 = vld [vmem:[%s1 + $0x20] sm:$0xf]
      %v306 = vld [vmem:[%s1 + $0x24] sm:$0xf]
      %v307 = vld [vmem:[%s1 + $0x28] sm:$0xf]
      %v308 = vld [vmem:[%s1 + $0x2c] sm:$0xf]
      %v309 = vld [vmem:[%s1 + $0x30] sm:$0xf]
      %v310 = vld [vmem:[%s1 + $0x34] sm:$0xf]
      %v311 = vld [vmem:[%s1 + $0x38] sm:$0xf]
      %v312 = vld [vmem:[%s1 + $0x3c] sm:$0xf]
      %v313 = vld [vmem:[%s2] sm:$0x1]
      %v315 = vperm.slane %v313, 0
      %v331 = vunpack.c.l.b16 %v283
      %v332 = vunpack.c.l.b16 %v284
      %v333 = vunpack.c.l.b16 %v285
      %v334 = vunpack.c.l.b16 %v286
      %v335 = vunpack.c.l.b16 %v287
      %v336 = vunpack.c.l.b16 %v288
      %v337 = vunpack.c.l.b16 %v289
      %v338 = vunpack.c.l.b16 %v290
      %v339 = vunpack.c.l.b16 %v291
      %v340 = vunpack.c.l.b16 %v292
      %v341 = vunpack.c.l.b16 %v293
      %v342 = vunpack.c.l.b16 %v294
      %v343 = vunpack.c.l.b16 %v295
      %v344 = vunpack.c.l.b16 %v296
      %v345 = vpack.c.b16 %v332, %v331
      %v346 = vpack.c.b16 %v334, %v333
      %v347 = vpack.c.b16 %v336, %v335
      %v348 = vpack.c.b16 %v338, %v337
      %v349 = vpack.c.b16 %v340, %v339
      %v350 = vpack.c.b16 %v342, %v341
      %v351 = vpack.c.b16 %v344, %v343
      %v375 = vunpack.c.l.b16 %v297
      %v376 = vunpack.c.l.b16 %v298
      %v377 = vunpack.c.l.b16 %v299
      %v378 = vunpack.c.l.b16 %v300
      %v379 = vunpack.c.l.b16 %v301
      %v380 = vunpack.c.l.b16 %v302
      %v381 = vunpack.c.l.b16 %v303
      %v382 = vunpack.c.l.b16 %v304
      %v383 = vunpack.c.l.b16 %v305
      %v384 = vunpack.c.l.b16 %v306
      %v385 = vunpack.c.l.b16 %v307
      %v386 = vunpack.c.l.b16 %v308
      %v387 = vunpack.c.l.b16 %v309
      %v388 = vunpack.c.l.b16 %v310
      %v389 = vunpack.c.l.b16 %v311
      %v390 = vunpack.c.l.b16 %v312
      %v391 = vpack.c.b16 %v376, %v375
      %v392 = vpack.c.b16 %v378, %v377
      %v393 = vpack.c.b16 %v380, %v379
      %v394 = vpack.c.b16 %v382, %v381
      %v395 = vpack.c.b16 %v384, %v383
      %v396 = vpack.c.b16 %v386, %v385
      %v397 = vpack.c.b16 %v388, %v387
      %v398 = vpack.c.b16 %v390, %v389
      %407 = vmatpush.bf16.msra.mxu0 %v398
      %408 = vmatpush.bf16.msra.mxu0 %v397
      %409 = vmatpush.bf16.msra.mxu0 %v396
      %410 = vmatpush.bf16.msra.mxu0 %v395
      %411 = vmatpush.bf16.msra.mxu0 %v394
      %412 = vmatpush.bf16.msra.mxu0 %v393
      %413 = vmatpush.bf16.msra.mxu0 %v392
      %414 = vmatpush.bf16.msra.mxu0 %v391
      %415 = vmatmul.bf16.gmra.mxu0 %v345
      %v416 = vpop.f32.mrf.mxu0
      %v417 = vadd.f32 %v315, %v416
      %v418 = vpop.f32.mrf.mxu0
      %v419 = vadd.f32 %v315, %v418
      %420 = vmatmul.bf16.gmra.mxu0 %v346
      %v421 = vpop.f32.mrf.mxu0
      %v422 = vadd.f32 %v315, %v421
      %v423 = vpop.f32.mrf.mxu0
      %v424 = vadd.f32 %v315, %v423
      %425 = vmatmul.bf16.gmra.mxu0 %v347
      %v426 = vpop.f32.mrf.mxu0
      %v427 = vadd.f32 %v315, %v426
      %v428 = vpop.f32.mrf.mxu0
      %v429 = vadd.f32 %v315, %v428
      %430 = vmatmul.bf16.gmra.mxu0 %v348
      %v431 = vpop.f32.mrf.mxu0
      %v432 = vadd.f32 %v315, %v431
      %v433 = vpop.f32.mrf.mxu0
      %v434 = vadd.f32 %v315, %v433
      %435 = vmatmul.bf16.gmra.mxu0 %v349
      %v436 = vpop.f32.mrf.mxu0
      %v437 = vadd.f32 %v315, %v436
      %v438 = vpop.f32.mrf.mxu0
      %v439 = vadd.f32 %v315, %v438
      %440 = vmatmul.bf16.gmra.mxu0 %v350
      %v441 = vpop.f32.mrf.mxu0
      %v442 = vadd.f32 %v315, %v441
      %v443 = vpop.f32.mrf.mxu0
      %v444 = vadd.f32 %v315, %v443
      %445 = vmatmul.bf16.gmra.mxu0 %v351
      %v446 = vpop.f32.mrf.mxu0
      %v447 = vadd.f32 %v315, %v446
      %v448 = vpop.f32.mrf.mxu0
      %v449 = vadd.f32 %v315, %v448
      %450 = vdwg.mxu0
      %v451 = vld [vmem:[%s3] sm:$0x1]
      %v452 = vld [vmem:[%s4] sm:$0x1]
      %vm453 = vcmask 523264
      %v454 = vsel %vm453, %v417, 0.0
      %455 = vadd.xlane.f32.xlu0 %v454
      %v456 = vpop.xlane.xlu0 %455
      %v457 = vsel %vm453, %v419, 0.0
      %458 = vadd.xlane.f32.xlu0 %v457
      %v459 = vpop.xlane.xlu0 %458
      %v460 = vsel %vm453, %v422, 0.0
      %461 = vadd.xlane.f32.xlu0 %v460
      %v462 = vpop.xlane.xlu0 %461
      %v463 = vsel %vm453, %v424, 0.0
      %464 = vadd.xlane.f32.xlu0 %v463
      %v465 = vpop.xlane.xlu0 %464
      %v466 = vsel %vm453, %v427, 0.0
      %467 = vadd.xlane.f32.xlu0 %v466
      %v468 = vpop.xlane.xlu0 %467
      %v469 = vsel %vm453, %v429, 0.0
      %470 = vadd.xlane.f32.xlu0 %v469
      %v471 = vpop.xlane.xlu0 %470
      %v472 = vsel %vm453, %v432, 0.0
      %473 = vadd.xlane.f32.xlu0 %v472
      %v474 = vpop.xlane.xlu0 %473
      %v475 = vsel %vm453, %v434, 0.0
      %476 = vadd.xlane.f32.xlu0 %v475
      %v477 = vpop.xlane.xlu0 %476
      %v478 = vsel %vm453, %v437, 0.0
      %479 = vadd.xlane.f32.xlu0 %v478
      %v480 = vpop.xlane.xlu0 %479
      %v481 = vsel %vm453, %v439, 0.0
      %482 = vadd.xlane.f32.xlu0 %v481
      %v483 = vpop.xlane.xlu0 %482
      %v484 = vsel %vm453, %v442, 0.0
      %485 = vadd.xlane.f32.xlu0 %v484
      %v486 = vpop.xlane.xlu0 %485
      %v487 = vsel %vm453, %v444, 0.0
      %488 = vadd.xlane.f32.xlu0 %v487
      %v489 = vpop.xlane.xlu0 %488
      %v490 = vsel %vm453, %v447, 0.0
      %491 = vadd.xlane.f32.xlu0 %v490
      %v492 = vpop.xlane.xlu0 %491
      %v493 = vsel %vm453, %v449, 0.0
      %494 = vadd.xlane.f32.xlu0 %v493
      %v495 = vpop.xlane.xlu0 %494
      %v496 = vrcp.pop 64.0
      %v497 = vmul.f32 64.0, %v496
      %v498 = vsub.f32 1.0, %v497
      %v499 = vmul.f32 %v496, %v498
      %v500 = vadd.f32 %v496, %v499
      %vm501 = vweird.f32 %v496
      %v502 = vsel %vm501, %v496, %v500
      %v503 = vmul.f32 %v456, %v502
      %v504 = vmul.f32 %v459, %v502
      %v505 = vmul.f32 %v462, %v502
      %v506 = vmul.f32 %v465, %v502
      %v507 = vmul.f32 %v468, %v502
      %v508 = vmul.f32 %v471, %v502
      %v509 = vmul.f32 %v474, %v502
      %v510 = vmul.f32 %v477, %v502
      %v511 = vmul.f32 %v480, %v502
      %v512 = vmul.f32 %v483, %v502
      %v513 = vmul.f32 %v486, %v502
      %v514 = vmul.f32 %v489, %v502
      %v515 = vmul.f32 %v492, %v502
      %v516 = vmul.f32 %v495, %v502
      %v517 = vsub.f32 %v417, %v503
      %v518 = vsub.f32 %v419, %v504
      %v519 = vsub.f32 %v422, %v505
      %v520 = vsub.f32 %v424, %v506
      %v521 = vsub.f32 %v427, %v507
      %v522 = vsub.f32 %v429, %v508
      %v523 = vsub.f32 %v432, %v509
      %v524 = vsub.f32 %v434, %v510
      %v525 = vsub.f32 %v437, %v511
      %v526 = vsub.f32 %v439, %v512
      %v527 = vsub.f32 %v442, %v513
      %v528 = vsub.f32 %v444, %v514
      %v529 = vsub.f32 %v447, %v515
      %v530 = vsub.f32 %v449, %v516
      %v531 = vmul.f32 %v517, %v517
      %v532 = vmul.f32 %v518, %v518
      %v533 = vmul.f32 %v519, %v519
      %v534 = vmul.f32 %v520, %v520
      %v535 = vmul.f32 %v521, %v521
      %v536 = vmul.f32 %v522, %v522
      %v537 = vmul.f32 %v523, %v523
      %v538 = vmul.f32 %v524, %v524
      %v539 = vmul.f32 %v525, %v525
      %v540 = vmul.f32 %v526, %v526
      %v541 = vmul.f32 %v527, %v527
      %v542 = vmul.f32 %v528, %v528
      %v543 = vmul.f32 %v529, %v529
      %v544 = vmul.f32 %v530, %v530
      %v545 = vsel %vm453, %v531, 0.0
      %546 = vadd.xlane.f32.xlu0 %v545
      %v547 = vpop.xlane.xlu0 %546
      %v548 = vsel %vm453, %v532, 0.0
      %549 = vadd.xlane.f32.xlu0 %v548
      %v550 = vpop.xlane.xlu0 %549
      %v551 = vsel %vm453, %v533, 0.0
      %552 = vadd.xlane.f32.xlu0 %v551
      %v553 = vpop.xlane.xlu0 %552
      %v554 = vsel %vm453, %v534, 0.0
      %555 = vadd.xlane.f32.xlu0 %v554
      %v556 = vpop.xlane.xlu0 %555
      %v557 = vsel %vm453, %v535, 0.0
      %558 = vadd.xlane.f32.xlu0 %v557
      %v559 = vpop.xlane.xlu0 %558
      %v560 = vsel %vm453, %v536, 0.0
      %561 = vadd.xlane.f32.xlu0 %v560
      %v562 = vpop.xlane.xlu0 %561
      %v563 = vsel %vm453, %v537, 0.0
      %564 = vadd.xlane.f32.xlu0 %v563
      %v565 = vpop.xlane.xlu0 %564
      %v566 = vsel %vm453, %v538, 0.0
      %567 = vadd.xlane.f32.xlu0 %v566
      %v568 = vpop.xlane.xlu0 %567
      %v569 = vsel %vm453, %v539, 0.0
      %570 = vadd.xlane.f32.xlu0 %v569
      %v571 = vpop.xlane.xlu0 %570
      %v572 = vsel %vm453, %v540, 0.0
      %573 = vadd.xlane.f32.xlu0 %v572
      %v574 = vpop.xlane.xlu0 %573
      %v575 = vsel %vm453, %v541, 0.0
      %576 = vadd.xlane.f32.xlu0 %v575
      %v577 = vpop.xlane.xlu0 %576
      %v578 = vsel %vm453, %v542, 0.0
      %579 = vadd.xlane.f32.xlu0 %v578
      %v580 = vpop.xlane.xlu0 %579
      %v581 = vsel %vm453, %v543, 0.0
      %582 = vadd.xlane.f32.xlu0 %v581
      %v583 = vpop.xlane.xlu0 %582
      %v584 = vsel %vm453, %v544, 0.0
      %585 = vadd.xlane.f32.xlu0 %v584
      %v586 = vpop.xlane.xlu0 %585
      %v587 = vmul.f32 %v547, %v502
      %v588 = vmul.f32 %v550, %v502
      %v589 = vmul.f32 %v553, %v502
      %v590 = vmul.f32 %v556, %v502
      %v591 = vmul.f32 %v559, %v502
      %v592 = vmul.f32 %v562, %v502
      %v593 = vmul.f32 %v565, %v502
      %v594 = vmul.f32 %v568, %v502
      %v595 = vmul.f32 %v571, %v502
      %v596 = vmul.f32 %v574, %v502
      %v597 = vmul.f32 %v577, %v502
      %v598 = vmul.f32 %v580, %v502
      %v599 = vmul.f32 %v583, %v502
      %v600 = vmul.f32 %v586, %v502
      %v601 = vadd.f32 %v587, 1e-05
      %v602 = vadd.f32 %v588, 1e-05
      %v603 = vadd.f32 %v589, 1e-05
      %v604 = vadd.f32 %v590, 1e-05
      %v605 = vadd.f32 %v591, 1e-05
      %v606 = vadd.f32 %v592, 1e-05
      %v607 = vadd.f32 %v593, 1e-05
      %v608 = vadd.f32 %v594, 1e-05
      %v609 = vadd.f32 %v595, 1e-05
      %v610 = vadd.f32 %v596, 1e-05
      %v611 = vadd.f32 %v597, 1e-05
      %v612 = vadd.f32 %v598, 1e-05
      %v613 = vadd.f32 %v599, 1e-05
      %v614 = vadd.f32 %v600, 1e-05
      %v615 = vrsqrt.pop %v601
      %v616 = vmul.f32 %v615, %v601
      %v617 = vmul.f32 %v616, %v615
      %v618 = vmul.f32 0.5, %v617
      %v619 = vsub.f32 1.5, %v618
      %v620 = vmul.f32 %v615, %v619
      %vm621 = vweird.f32 %v601
      %vm622 = vweird.f32 %v615
      %vm623 = vmor %vm621, %vm622
      %v624 = vsel %vm623, %v615, %v620
      %v625 = vrsqrt.pop %v602
      %v626 = vmul.f32 %v625, %v602
      %v627 = vmul.f32 %v626, %v625
      %v628 = vmul.f32 0.5, %v627
      %v629 = vsub.f32 1.5, %v628
      %v630 = vmul.f32 %v625, %v629
      %vm631 = vweird.f32 %v602
      %vm632 = vweird.f32 %v625
      %vm633 = vmor %vm631, %vm632
      %v634 = vsel %vm633, %v625, %v630
      %v635 = vrsqrt.pop %v603
      %v636 = vmul.f32 %v635, %v603
      %v637 = vmul.f32 %v636, %v635
      %v638 = vmul.f32 0.5, %v637
      %v639 = vsub.f32 1.5, %v638
      %v640 = vmul.f32 %v635, %v639
      %vm641 = vweird.f32 %v603
      %vm642 = vweird.f32 %v635
      %vm643 = vmor %vm641, %vm642
      %v644 = vsel %vm643, %v635, %v640
      %v645 = vrsqrt.pop %v604
      %v646 = vmul.f32 %v645, %v604
      %v647 = vmul.f32 %v646, %v645
      %v648 = vmul.f32 0.5, %v647
      %v649 = vsub.f32 1.5, %v648
      %v650 = vmul.f32 %v645, %v649
      %vm651 = vweird.f32 %v604
      %vm652 = vweird.f32 %v645
      %vm653 = vmor %vm651, %vm652
      %v654 = vsel %vm653, %v645, %v650
      %v655 = vrsqrt.pop %v605
      %v656 = vmul.f32 %v655, %v605
      %v657 = vmul.f32 %v656, %v655
      %v658 = vmul.f32 0.5, %v657
      %v659 = vsub.f32 1.5, %v658
      %v660 = vmul.f32 %v655, %v659
      %vm661 = vweird.f32 %v605
      %vm662 = vweird.f32 %v655
      %vm663 = vmor %vm661, %vm662
      %v664 = vsel %vm663, %v655, %v660
      %v665 = vrsqrt.pop %v606
      %v666 = vmul.f32 %v665, %v606
      %v667 = vmul.f32 %v666, %v665
      %v668 = vmul.f32 0.5, %v667
      %v669 = vsub.f32 1.5, %v668
      %v670 = vmul.f32 %v665, %v669
      %vm671 = vweird.f32 %v606
      %vm672 = vweird.f32 %v665
      %vm673 = vmor %vm671, %vm672
      %v674 = vsel %vm673, %v665, %v670
      %v675 = vrsqrt.pop %v607
      %v676 = vmul.f32 %v675, %v607
      %v677 = vmul.f32 %v676, %v675
      %v678 = vmul.f32 0.5, %v677
      %v679 = vsub.f32 1.5, %v678
      %v680 = vmul.f32 %v675, %v679
      %vm681 = vweird.f32 %v607
      %vm682 = vweird.f32 %v675
      %vm683 = vmor %vm681, %vm682
      %v684 = vsel %vm683, %v675, %v680
      %v685 = vrsqrt.pop %v608
      %v686 = vmul.f32 %v685, %v608
      %v687 = vmul.f32 %v686, %v685
      %v688 = vmul.f32 0.5, %v687
      %v689 = vsub.f32 1.5, %v688
      %v690 = vmul.f32 %v685, %v689
      %vm691 = vweird.f32 %v608
      %vm692 = vweird.f32 %v685
      %vm693 = vmor %vm691, %vm692
      %v694 = vsel %vm693, %v685, %v690
      %v695 = vrsqrt.pop %v609
      %v696 = vmul.f32 %v695, %v609
      %v697 = vmul.f32 %v696, %v695
      %v698 = vmul.f32 0.5, %v697
      %v699 = vsub.f32 1.5, %v698
      %v700 = vmul.f32 %v695, %v699
      %vm701 = vweird.f32 %v609
      %vm702 = vweird.f32 %v695
      %vm703 = vmor %vm701, %vm702
      %v704 = vsel %vm703, %v695, %v700
      %v705 = vrsqrt.pop %v610
      %v706 = vmul.f32 %v705, %v610
      %v707 = vmul.f32 %v706, %v705
      %v708 = vmul.f32 0.5, %v707
      %v709 = vsub.f32 1.5, %v708
      %v710 = vmul.f32 %v705, %v709
      %vm711 = vweird.f32 %v610
      %vm712 = vweird.f32 %v705
      %vm713 = vmor %vm711, %vm712
      %v714 = vsel %vm713, %v705, %v710
      %v715 = vrsqrt.pop %v611
      %v716 = vmul.f32 %v715, %v611
      %v717 = vmul.f32 %v716, %v715
      %v718 = vmul.f32 0.5, %v717
      %v719 = vsub.f32 1.5, %v718
      %v720 = vmul.f32 %v715, %v719
      %vm721 = vweird.f32 %v611
      %vm722 = vweird.f32 %v715
      %vm723 = vmor %vm721, %vm722
      %v724 = vsel %vm723, %v715, %v720
      %v725 = vrsqrt.pop %v612
      %v726 = vmul.f32 %v725, %v612
      %v727 = vmul.f32 %v726, %v725
      %v728 = vmul.f32 0.5, %v727
      %v729 = vsub.f32 1.5, %v728
      %v730 = vmul.f32 %v725, %v729
      %vm731 = vweird.f32 %v612
      %vm732 = vweird.f32 %v725
      %vm733 = vmor %vm731, %vm732
      %v734 = vsel %vm733, %v725, %v730
      %v735 = vrsqrt.pop %v613
      %v736 = vmul.f32 %v735, %v613
      %v737 = vmul.f32 %v736, %v735
      %v738 = vmul.f32 0.5, %v737
      %v739 = vsub.f32 1.5, %v738
      %v740 = vmul.f32 %v735, %v739
      %vm741 = vweird.f32 %v613
      %vm742 = vweird.f32 %v735
      %vm743 = vmor %vm741, %vm742
      %v744 = vsel %vm743, %v735, %v740
      %v745 = vrsqrt.pop %v614
      %v746 = vmul.f32 %v745, %v614
      %v747 = vmul.f32 %v746, %v745
      %v748 = vmul.f32 0.5, %v747
      %v749 = vsub.f32 1.5, %v748
      %v750 = vmul.f32 %v745, %v749
      %vm751 = vweird.f32 %v614
      %vm752 = vweird.f32 %v745
      %vm753 = vmor %vm751, %vm752
      %v754 = vsel %vm753, %v745, %v750
      %v755 = vmul.f32 %v517, %v624
      %v756 = vmul.f32 %v518, %v634
      %v757 = vmul.f32 %v519, %v644
      %v758 = vmul.f32 %v520, %v654
      %v759 = vmul.f32 %v521, %v664
      %v760 = vmul.f32 %v522, %v674
      %v761 = vmul.f32 %v523, %v684
      %v762 = vmul.f32 %v524, %v694
      %v763 = vmul.f32 %v525, %v704
      %v764 = vmul.f32 %v526, %v714
      %v765 = vmul.f32 %v527, %v724
      %v766 = vmul.f32 %v528, %v734
      %v767 = vmul.f32 %v529, %v744
      %v768 = vmul.f32 %v530, %v754
      %v770 = vperm.slane %v451, 0
      %v772 = vmul.f32 %v755, %v770
      %v773 = vmul.f32 %v756, %v770
      %v774 = vmul.f32 %v757, %v770
      %v775 = vmul.f32 %v758, %v770
      %v776 = vmul.f32 %v759, %v770
      %v777 = vmul.f32 %v760, %v770
      %v778 = vmul.f32 %v761, %v770
      %v779 = vmul.f32 %v762, %v770
      %v780 = vmul.f32 %v763, %v770
      %v781 = vmul.f32 %v764, %v770
      %v782 = vmul.f32 %v765, %v770
      %v783 = vmul.f32 %v766, %v770
      %v784 = vmul.f32 %v767, %v770
      %v785 = vmul.f32 %v768, %v770
      %v787 = vperm.slane %v452, 0
      %v789 = vadd.f32 %v772, %v787
      %v790 = vadd.f32 %v773, %v787
      %v791 = vadd.f32 %v774, %v787
      %v792 = vadd.f32 %v775, %v787
      %v793 = vadd.f32 %v776, %v787
      %v794 = vadd.f32 %v777, %v787
      %v795 = vadd.f32 %v778, %v787
      %v796 = vadd.f32 %v779, %v787
      %v797 = vadd.f32 %v780, %v787
      %v798 = vadd.f32 %v781, %v787
      %v799 = vadd.f32 %v782, %v787
      %v800 = vadd.f32 %v783, %v787
      %v801 = vadd.f32 %v784, %v787
      %v802 = vadd.f32 %v785, %v787
      %v803 = vmax.f32 %v789, 0.0
      %v804 = vmax.f32 %v790, 0.0
      %v805 = vmax.f32 %v791, 0.0
      %v806 = vmax.f32 %v792, 0.0
      %v807 = vmax.f32 %v793, 0.0
      %v808 = vmax.f32 %v794, 0.0
      %v809 = vmax.f32 %v795, 0.0
      %v810 = vmax.f32 %v796, 0.0
      %v811 = vmax.f32 %v797, 0.0
      %v812 = vmax.f32 %v798, 0.0
      %v813 = vmax.f32 %v799, 0.0
      %v814 = vmax.f32 %v800, 0.0
      %v815 = vmax.f32 %v801, 0.0
      %v816 = vmax.f32 %v802, 0.0
      %v817 = vpack.c.bf16 %v804, %v803
      %v818 = vpack.c.bf16 %v806, %v805
      %v819 = vpack.c.bf16 %v808, %v807
      %v820 = vpack.c.bf16 %v810, %v809
      %v821 = vpack.c.bf16 %v812, %v811
      %v822 = vpack.c.bf16 %v814, %v813
      %v823 = vpack.c.bf16 %v816, %v815
      %v824 = vld [vmem:[%s5] sm:$0xf]
      %v825 = vld [vmem:[%s5 + $0x4] sm:$0xf]
      %v826 = vld [vmem:[%s5 + $0x8] sm:$0xf]
      %v827 = vld [vmem:[%s5 + $0xc] sm:$0xf]
      %v828 = vld [vmem:[%s5 + $0x10] sm:$0xf]
      %v829 = vld [vmem:[%s5 + $0x14] sm:$0xf]
      %v830 = vld [vmem:[%s5 + $0x18] sm:$0xf]
      %v831 = vld [vmem:[%s5 + $0x1c] sm:$0xf]
      %v832 = vld [vmem:[%s6] sm:$0x1]
      %v834 = vperm.slane %v832, 0
      %v844 = vunpack.c.l.b16 %v824
      %v845 = vunpack.c.l.b16 %v825
      %v846 = vunpack.c.l.b16 %v826
      %v847 = vunpack.c.l.b16 %v827
      %v848 = vunpack.c.l.b16 %v828
      %v849 = vunpack.c.l.b16 %v829
      %v850 = vunpack.c.l.b16 %v830
      %v851 = vunpack.c.l.b16 %v831
      %v852 = vpack.c.b16 %v845, %v844
      %v853 = vpack.c.b16 %v847, %v846
      %v854 = vpack.c.b16 %v849, %v848
      %v855 = vpack.c.b16 %v851, %v850
      %v861 = vsel %vm453, %v817, 0
      %v864 = vsel %vm453, %v818, 0
      %v867 = vsel %vm453, %v819, 0
      %v870 = vsel %vm453, %v820, 0
      %v873 = vsel %vm453, %v821, 0
      %v876 = vsel %vm453, %v822, 0
      %v879 = vsel %vm453, %v823, 0
      %881 = vmatpush.bf16.msra.mxu0 0
      %882 = vmatpush.bf16.msra.mxu0 0
      %883 = vmatpush.bf16.msra.mxu0 0
      %884 = vmatpush.bf16.msra.mxu0 0
      %885 = vmatpush.bf16.msra.mxu0 %v855
      %886 = vmatpush.bf16.msra.mxu0 %v854
      %887 = vmatpush.bf16.msra.mxu0 %v853
      %888 = vmatpush.bf16.msra.mxu0 %v852
      %889 = vmatmul.bf16.gmra.mxu0 %v861
      %v890 = vpop.f32.mrf.mxu0
      %v891 = vadd.f32 %v834, %v890
      %v892 = vpop.f32.mrf.mxu0
      %v893 = vadd.f32 %v834, %v892
      %894 = vmatmul.bf16.gmra.mxu0 %v864
      %v895 = vpop.f32.mrf.mxu0
      %v896 = vadd.f32 %v834, %v895
      %v897 = vpop.f32.mrf.mxu0
      %v898 = vadd.f32 %v834, %v897
      %899 = vmatmul.bf16.gmra.mxu0 %v867
      %v900 = vpop.f32.mrf.mxu0
      %v901 = vadd.f32 %v834, %v900
      %v902 = vpop.f32.mrf.mxu0
      %v903 = vadd.f32 %v834, %v902
      %904 = vmatmul.bf16.gmra.mxu0 %v870
      %v905 = vpop.f32.mrf.mxu0
      %v906 = vadd.f32 %v834, %v905
      %v907 = vpop.f32.mrf.mxu0
      %v908 = vadd.f32 %v834, %v907
      %909 = vmatmul.bf16.gmra.mxu0 %v873
      %v910 = vpop.f32.mrf.mxu0
      %v911 = vadd.f32 %v834, %v910
      %v912 = vpop.f32.mrf.mxu0
      %v913 = vadd.f32 %v834, %v912
      %914 = vmatmul.bf16.gmra.mxu0 %v876
      %v915 = vpop.f32.mrf.mxu0
      %v916 = vadd.f32 %v834, %v915
      %v917 = vpop.f32.mrf.mxu0
      %v918 = vadd.f32 %v834, %v917
      %919 = vmatmul.bf16.gmra.mxu0 %v879
      %v920 = vpop.f32.mrf.mxu0
      %v921 = vadd.f32 %v834, %v920
      %v922 = vpop.f32.mrf.mxu0
      %v923 = vadd.f32 %v834, %v922
      %924 = vdwg.mxu0
      %v925 = vpack.c.bf16 %v891, %v891
      %v926 = vpack.c.bf16 %v893, %v893
      %v927 = vpack.c.bf16 %v896, %v896
      %v928 = vpack.c.bf16 %v898, %v898
      %v929 = vpack.c.bf16 %v901, %v901
      %v930 = vpack.c.bf16 %v903, %v903
      %v931 = vpack.c.bf16 %v906, %v906
      %v932 = vpack.c.bf16 %v908, %v908
      %v933 = vpack.c.bf16 %v911, %v911
      %v934 = vpack.c.bf16 %v913, %v913
      %v935 = vpack.c.bf16 %v916, %v916
      %v936 = vpack.c.bf16 %v918, %v918
      %v937 = vpack.c.bf16 %v921, %v921
      %v938 = vpack.c.bf16 %v923, %v923
      %vm939 = vcmask 519168
      %940 = vst.msk [vmem:[%s280] sm:$0xf] %vm939, %v925
      %941 = vst.msk [vmem:[%s280 + $0x4] sm:$0xf] %vm939, %v926
      %942 = vst.msk [vmem:[%s280 + $0x8] sm:$0xf] %vm939, %v927
      %943 = vst.msk [vmem:[%s280 + $0xc] sm:$0xf] %vm939, %v928
      %944 = vst.msk [vmem:[%s280 + $0x10] sm:$0xf] %vm939, %v929
      %945 = vst.msk [vmem:[%s280 + $0x14] sm:$0xf] %vm939, %v930
      %946 = vst.msk [vmem:[%s280 + $0x18] sm:$0xf] %vm939, %v931
      %947 = vst.msk [vmem:[%s280 + $0x1c] sm:$0xf] %vm939, %v932
      %948 = vst.msk [vmem:[%s280 + $0x20] sm:$0xf] %vm939, %v933
      %949 = vst.msk [vmem:[%s280 + $0x24] sm:$0xf] %vm939, %v934
      %950 = vst.msk [vmem:[%s280 + $0x28] sm:$0xf] %vm939, %v935
      %951 = vst.msk [vmem:[%s280 + $0x2c] sm:$0xf] %vm939, %v936
      %952 = vst.msk [vmem:[%s280 + $0x30] sm:$0xf] %vm939, %v937
      %953 = vst.msk [vmem:[%s280 + $0x34] sm:$0xf] %vm939, %v938
      %s954 = smul.u32 14, %s18
      %p955 = scmp.lt.s32.totalorder %s954, 27
      %s956 = scalar_select %p955, %s954, 27
      %s957 = smul.addr %s956, 4
      %s958 = scalar_lea.vmem %s7, %s957
      // Predicated region
      $region49: #{gnn_forward.12} parent=47 // pred_check
        %p959 = pneg %p188
      $region50: #{gnn_forward.12} parent=47 // pred_check_branch
        %961 = sbr.rel (%p959) target = $region52
      $region51: #{gnn_forward.12} parent=47 // pred_region
        %s962 = smul.u32 14, %s18
      $region52: #{gnn_forward.12} parent=47 // pred_fallthru
        _
    $region48: #{gnn_forward.12} parent=5 // pred_fallthru
      _
    %p963 = scmp.le.s32.totalorder 2, %s13
    // Predicated region
    $region53: #{gnn_forward.12} parent=5 // pred_check
      %p964 = pneg %p963
    $region54: #{gnn_forward.12} parent=5 // pred_check_branch
      %966 = sbr.rel (%p964) target = $region56
    $region55: #{gnn_forward.12} parent=5 // pred_region
      %s967 = ssub.s32 %s13, 2
      // Predicated region
      $region57: #{gnn_forward.12} parent=55 // pred_check
        %p968 = pneg %p194
      $region58: #{gnn_forward.12} parent=55 // pred_check_branch
        %970 = sbr.rel (%p968) target = $region60
      $region59: #{gnn_forward.12} parent=55 // pred_region
        %s971 = smul.u32 14, %s19
        %p972 = scmp.lt.s32.totalorder %s971, 27
        %s973 = scalar_select %p972, %s971, 27
        %s974 = smul.addr %s973, 4
        %s975 = scalar_lea.vmem %s7, %s974
      $region60: #{gnn_forward.12} parent=55 // pred_fallthru
        _
    $region56: #{gnn_forward.12} parent=5 // pred_fallthru
      _
  $region6: #{gnn_forward.12} parent=0 // loop_footer
    %s17 = sadd.s32 1, %s13
  $region7: #{gnn_forward.12} parent=0 // loop_footer_branch
    %12 = sbr.rel target = $region3
  $region8: #{gnn_forward.12} parent=0 // loop_exit
    _

// kernel: gnn_forward.13
$region0: #{gnn_forward.13}
  #allocation0 [shape = 'u32[]', space=smem, size = 0x4, offset = 0x4, fixed_abs, tag = 'smem constant byte address 0x4 - core index']
  #allocation1 [shape = 'u32[72,128]{1,0:T(1,128)}', space=vmem, size = 0x9000, scoped, tag = 'internal scratch']
  %s0 = inlined_call_operand.vmem [shape: f32[64,64], index: 0, kind: input, shape index: {}]
  %s1 = inlined_call_operand.vmem [shape: bf16[64,64], index: 1, kind: input, shape index: {}]
  %s2 = inlined_call_operand.vmem [shape: f32[1,64], index: 2, kind: input, shape index: {}]
  %s3 = inlined_call_operand.vmem [shape: f32[1,64], index: 3, kind: input, shape index: {}]
  %s4 = inlined_call_operand.vmem [shape: bf16[128,64], index: 4, kind: input, shape index: {}]
  %s5 = inlined_call_operand.vmem [shape: f32[1,64], index: 5, kind: input, shape index: {}]
  %s6 = inlined_call_operand.vmem [shape: bf16[64,64], index: 6, kind: input, shape index: {}]
  %s7 = inlined_call_operand.vmem [shape: f32[1,64], index: 7, kind: input, shape index: {}]
  %s8 = inlined_call_operand.vmem [shape: bf16[64,64], index: 8, kind: output, shape index: {}]
  %s9 = sld [smem:[#allocation0]]
  $region65: #{gnn_forward.13} parent=0
    _
  %s11 = ssub.s32 1, %s9
  %s12 = scalar_select 0, %s11, %s9
  loop: start=0, step=1, limit=4
  $region2: #{gnn_forward.13} parent=0 // loop_pre_header
    _
  $region3: #{gnn_forward.13} parent=0 // loop_header
    %s14 = sphi 0, %s18
    %p15 = scmp.ge.s32.totalorder %s14, 4
    %s24 = sphi 0, %s26
    %s27 = sphi 0, %s24
    %s28 = sphi 0, %s27
    %s44 = sphi 0, %s28
    %s50 = sphi 0, %s52
    %s53 = sphi 0, %s50
    %s54 = sphi 0, %s53
    %s70 = sphi 0, %s54
    %s74 = sphi 0, %s74
    %s76 = sphi 0, %s74
    %s77 = sphi 0, %s76
    %s91 = sphi 0, %s77
    %s95 = sphi 0, %s95
    %s97 = sphi 0, %s95
    %s98 = sphi 0, %s97
    %s112 = sphi 0, %s98
    %s116 = sphi 0, %s116
    %s118 = sphi 0, %s116
    %s119 = sphi 0, %s118
    %s133 = sphi 0, %s119
    %s137 = sphi 0, %s137
    %s139 = sphi 0, %s137
    %s140 = sphi 0, %s139
    %s154 = sphi 0, %s140
    %s158 = sphi 0, %s158
    %s160 = sphi 0, %s158
    %s161 = sphi 0, %s160
    %s175 = sphi 0, %s161
    %s179 = sphi 0, %s179
    %s181 = sphi 0, %s179
    %s182 = sphi 0, %s181
    %s196 = sphi 0, %s182
    %s202 = sphi 0, %s204
    %s205 = sphi 0, %s202
    %s206 = sphi 0, %s205
    %s222 = sphi 0, %s206
  $region4: #{gnn_forward.13} parent=0 // loop_header_branch
    %17 = sbr.rel (%p15) target = $region8
  $region5: #{gnn_forward.13} parent=0 // loop_body
    %s19 = ssub.s32 %s14, 1
    %s20 = ssub.s32 %s14, 2
    %s21 = sadd.s32 %s14, 1
    %s22 = ssub.s32 %s14, %s21
    %p23 = scmp.eq.s32.totalorder %s22, 0
    %s25 = sadd.s32 %s24, 1
    %s26 = scalar_select %p23, %s24, %s25
    %p29 = pneg %p23
    %p30 = scmp.eq.s32.totalorder %s14, 1
    %p31 = por %p29, %p30
    %p32 = scmp.ne.s32.totalorder %s24, %s27
    %p33 = scmp.eq.s32.totalorder %s14, 0
    %p34 = por %p32, %p33
    %p35 = scmp.ne.s32.totalorder %s24, %s27
    %p36 = scmp.eq.s32.totalorder %s19, 1
    %p37 = por %p35, %p36
    %p38 = scmp.ne.s32.totalorder %s27, %s28
    %p39 = scmp.eq.s32.totalorder %s19, 0
    %p40 = por %p38, %p39
    %p41 = scmp.ne.s32.totalorder %s27, %s28
    %p42 = scmp.eq.s32.totalorder %s20, 1
    %p43 = por %p41, %p42
    %p45 = scmp.ne.s32.totalorder %s28, %s44
    %p46 = scmp.eq.s32.totalorder %s20, 0
    %p47 = por %p45, %p46
    %s48 = ssub.s32 %s14, %s21
    %p49 = scmp.eq.s32.totalorder %s48, 0
    %s51 = sadd.s32 %s50, 1
    %s52 = scalar_select %p49, %s50, %s51
    %p55 = pneg %p49
    %p56 = scmp.eq.s32.totalorder %s14, 1
    %p57 = por %p55, %p56
    %p58 = scmp.ne.s32.totalorder %s50, %s53
    %p59 = scmp.eq.s32.totalorder %s14, 0
    %p60 = por %p58, %p59
    %p61 = scmp.ne.s32.totalorder %s50, %s53
    %p62 = scmp.eq.s32.totalorder %s19, 1
    %p63 = por %p61, %p62
    %p64 = scmp.ne.s32.totalorder %s53, %s54
    %p65 = scmp.eq.s32.totalorder %s19, 0
    %p66 = por %p64, %p65
    %p67 = scmp.ne.s32.totalorder %s53, %s54
    %p68 = scmp.eq.s32.totalorder %s20, 1
    %p69 = por %p67, %p68
    %p71 = scmp.ne.s32.totalorder %s54, %s70
    %p72 = scmp.eq.s32.totalorder %s20, 0
    %p73 = por %p71, %p72
    %s75 = sadd.s32 %s74, 1
    %p78 = scmp.eq.s32.totalorder %s14, 1
    %p79 = scmp.ne.s32.totalorder %s74, %s76
    %p80 = scmp.eq.s32.totalorder %s14, 0
    %p81 = por %p79, %p80
    %p82 = scmp.ne.s32.totalorder %s74, %s76
    %p83 = scmp.eq.s32.totalorder %s19, 1
    %p84 = por %p82, %p83
    %p85 = scmp.ne.s32.totalorder %s76, %s77
    %p86 = scmp.eq.s32.totalorder %s19, 0
    %p87 = por %p85, %p86
    %p88 = scmp.ne.s32.totalorder %s76, %s77
    %p89 = scmp.eq.s32.totalorder %s20, 1
    %p90 = por %p88, %p89
    %p92 = scmp.ne.s32.totalorder %s77, %s91
    %p93 = scmp.eq.s32.totalorder %s20, 0
    %p94 = por %p92, %p93
    %s96 = sadd.s32 %s95, 1
    %p99 = scmp.eq.s32.totalorder %s14, 1
    %p100 = scmp.ne.s32.totalorder %s95, %s97
    %p101 = scmp.eq.s32.totalorder %s14, 0
    %p102 = por %p100, %p101
    %p103 = scmp.ne.s32.totalorder %s95, %s97
    %p104 = scmp.eq.s32.totalorder %s19, 1
    %p105 = por %p103, %p104
    %p106 = scmp.ne.s32.totalorder %s97, %s98
    %p107 = scmp.eq.s32.totalorder %s19, 0
    %p108 = por %p106, %p107
    %p109 = scmp.ne.s32.totalorder %s97, %s98
    %p110 = scmp.eq.s32.totalorder %s20, 1
    %p111 = por %p109, %p110
    %p113 = scmp.ne.s32.totalorder %s98, %s112
    %p114 = scmp.eq.s32.totalorder %s20, 0
    %p115 = por %p113, %p114
    %s117 = sadd.s32 %s116, 1
    %p120 = scmp.eq.s32.totalorder %s14, 1
    %p121 = scmp.ne.s32.totalorder %s116, %s118
    %p122 = scmp.eq.s32.totalorder %s14, 0
    %p123 = por %p121, %p122
    %p124 = scmp.ne.s32.totalorder %s116, %s118
    %p125 = scmp.eq.s32.totalorder %s19, 1
    %p126 = por %p124, %p125
    %p127 = scmp.ne.s32.totalorder %s118, %s119
    %p128 = scmp.eq.s32.totalorder %s19, 0
    %p129 = por %p127, %p128
    %p130 = scmp.ne.s32.totalorder %s118, %s119
    %p131 = scmp.eq.s32.totalorder %s20, 1
    %p132 = por %p130, %p131
    %p134 = scmp.ne.s32.totalorder %s119, %s133
    %p135 = scmp.eq.s32.totalorder %s20, 0
    %p136 = por %p134, %p135
    %s138 = sadd.s32 %s137, 1
    %p141 = scmp.eq.s32.totalorder %s14, 1
    %p142 = scmp.ne.s32.totalorder %s137, %s139
    %p143 = scmp.eq.s32.totalorder %s14, 0
    %p144 = por %p142, %p143
    %p145 = scmp.ne.s32.totalorder %s137, %s139
    %p146 = scmp.eq.s32.totalorder %s19, 1
    %p147 = por %p145, %p146
    %p148 = scmp.ne.s32.totalorder %s139, %s140
    %p149 = scmp.eq.s32.totalorder %s19, 0
    %p150 = por %p148, %p149
    %p151 = scmp.ne.s32.totalorder %s139, %s140
    %p152 = scmp.eq.s32.totalorder %s20, 1
    %p153 = por %p151, %p152
    %p155 = scmp.ne.s32.totalorder %s140, %s154
    %p156 = scmp.eq.s32.totalorder %s20, 0
    %p157 = por %p155, %p156
    %s159 = sadd.s32 %s158, 1
    %p162 = scmp.eq.s32.totalorder %s14, 1
    %p163 = scmp.ne.s32.totalorder %s158, %s160
    %p164 = scmp.eq.s32.totalorder %s14, 0
    %p165 = por %p163, %p164
    %p166 = scmp.ne.s32.totalorder %s158, %s160
    %p167 = scmp.eq.s32.totalorder %s19, 1
    %p168 = por %p166, %p167
    %p169 = scmp.ne.s32.totalorder %s160, %s161
    %p170 = scmp.eq.s32.totalorder %s19, 0
    %p171 = por %p169, %p170
    %p172 = scmp.ne.s32.totalorder %s160, %s161
    %p173 = scmp.eq.s32.totalorder %s20, 1
    %p174 = por %p172, %p173
    %p176 = scmp.ne.s32.totalorder %s161, %s175
    %p177 = scmp.eq.s32.totalorder %s20, 0
    %p178 = por %p176, %p177
    %s180 = sadd.s32 %s179, 1
    %p183 = scmp.eq.s32.totalorder %s14, 1
    %p184 = scmp.ne.s32.totalorder %s179, %s181
    %p185 = scmp.eq.s32.totalorder %s14, 0
    %p186 = por %p184, %p185
    %p187 = scmp.ne.s32.totalorder %s179, %s181
    %p188 = scmp.eq.s32.totalorder %s19, 1
    %p189 = por %p187, %p188
    %p190 = scmp.ne.s32.totalorder %s181, %s182
    %p191 = scmp.eq.s32.totalorder %s19, 0
    %p192 = por %p190, %p191
    %p193 = scmp.ne.s32.totalorder %s181, %s182
    %p194 = scmp.eq.s32.totalorder %s20, 1
    %p195 = por %p193, %p194
    %p197 = scmp.ne.s32.totalorder %s182, %s196
    %p198 = scmp.eq.s32.totalorder %s20, 0
    %p199 = por %p197, %p198
    %s200 = ssub.s32 %s14, %s21
    %p201 = scmp.eq.s32.totalorder %s200, 0
    %s203 = sadd.s32 %s202, 1
    %s204 = scalar_select %p201, %s202, %s203
    %p207 = pneg %p201
    %p208 = scmp.eq.s32.totalorder %s14, 1
    %p209 = por %p207, %p208
    %p210 = scmp.ne.s32.totalorder %s202, %s205
    %p211 = scmp.eq.s32.totalorder %s14, 0
    %p212 = por %p210, %p211
    %p213 = scmp.ne.s32.totalorder %s202, %s205
    %p214 = scmp.eq.s32.totalorder %s19, 1
    %p215 = por %p213, %p214
    %p216 = scmp.ne.s32.totalorder %s205, %s206
    %p217 = scmp.eq.s32.totalorder %s19, 0
    %p218 = por %p216, %p217
    %p219 = scmp.ne.s32.totalorder %s205, %s206
    %p220 = scmp.eq.s32.totalorder %s20, 1
    %p221 = por %p219, %p220
    %p223 = scmp.ne.s32.totalorder %s206, %s222
    %p224 = scmp.eq.s32.totalorder %s20, 0
    %p225 = por %p223, %p224
    %p226 = scmp.le.s32.totalorder 1, %s14
    %p227 = scmp.lt.s32.totalorder %s14, 3
    %p228 = pnand %p226, %p227
    %p229 = pneg %p228
    // Predicated region
    $region9: #{gnn_forward.13} parent=5 // pred_check
      _
    $region10: #{gnn_forward.13} parent=5 // pred_check_branch
      %231 = sbr.rel (%p228) target = $region12
    $region11: #{gnn_forward.13} parent=5 // pred_region
      %s232 = ssub.s32 %s14, 1
      // Predicated region
      $region13: #{gnn_forward.13} parent=11 // pred_check
        %p233 = pneg %p87
      $region14: #{gnn_forward.13} parent=11 // pred_check_branch
        %235 = sbr.rel (%p233) target = $region16
      $region15: #{gnn_forward.13} parent=11 // pred_region
        _
      $region16: #{gnn_forward.13} parent=11 // pred_fallthru
        _
      // Predicated region
      $region17: #{gnn_forward.13} parent=11 // pred_check
        %p236 = pneg %p108
      $region18: #{gnn_forward.13} parent=11 // pred_check_branch
        %238 = sbr.rel (%p236) target = $region20
      $region19: #{gnn_forward.13} parent=11 // pred_region
        _
      $region20: #{gnn_forward.13} parent=11 // pred_fallthru
        _
      // Predicated region
      $region21: #{gnn_forward.13} parent=11 // pred_check
        %p239 = pneg %p129
      $region22: #{gnn_forward.13} parent=11 // pred_check_branch
        %241 = sbr.rel (%p239) target = $region24
      $region23: #{gnn_forward.13} parent=11 // pred_region
        _
      $region24: #{gnn_forward.13} parent=11 // pred_fallthru
        _
      // Predicated region
      $region25: #{gnn_forward.13} parent=11 // pred_check
        %p242 = pneg %p150
      $region26: #{gnn_forward.13} parent=11 // pred_check_branch
        %244 = sbr.rel (%p242) target = $region28
      $region27: #{gnn_forward.13} parent=11 // pred_region
        _
      $region28: #{gnn_forward.13} parent=11 // pred_fallthru
        _
      // Predicated region
      $region29: #{gnn_forward.13} parent=11 // pred_check
        %p245 = pneg %p171
      $region30: #{gnn_forward.13} parent=11 // pred_check_branch
        %247 = sbr.rel (%p245) target = $region32
      $region31: #{gnn_forward.13} parent=11 // pred_region
        _
      $region32: #{gnn_forward.13} parent=11 // pred_fallthru
        _
      // Predicated region
      $region33: #{gnn_forward.13} parent=11 // pred_check
        %p248 = pneg %p192
      $region34: #{gnn_forward.13} parent=11 // pred_check_branch
        %250 = sbr.rel (%p248) target = $region36
      $region35: #{gnn_forward.13} parent=11 // pred_region
        _
      $region36: #{gnn_forward.13} parent=11 // pred_fallthru
        _
    $region12: #{gnn_forward.13} parent=5 // pred_fallthru
      _
    %p251 = scmp.lt.s32.totalorder %s14, 2
    // Predicated region
    $region37: #{gnn_forward.13} parent=5 // pred_check
      %p252 = pneg %p251
    $region38: #{gnn_forward.13} parent=5 // pred_check_branch
      %254 = sbr.rel (%p252) target = $region40
    $region39: #{gnn_forward.13} parent=5 // pred_region
      // Predicated region
      $region41: #{gnn_forward.13} parent=39 // pred_check
        %p255 = pneg %p34
      $region42: #{gnn_forward.13} parent=39 // pred_check_branch
        %257 = sbr.rel (%p255) target = $region44
      $region43: #{gnn_forward.13} parent=39 // pred_region
        %s258 = smul.u32 4, %s14
        %p259 = scmp.lt.s32.totalorder %s258, 7
        %s260 = scalar_select %p259, %s258, 7
        %s261 = smul.addr %s260, 8
        %s262 = scalar_lea.vmem %s0, %s261
        %s263 = smul.u32 4, %s14
      $region44: #{gnn_forward.13} parent=39 // pred_fallthru
        _
      // Predicated region
      $region45: #{gnn_forward.13} parent=39 // pred_check
        %p264 = pneg %p60
      $region46: #{gnn_forward.13} parent=39 // pred_check_branch
        %266 = sbr.rel (%p264) target = $region48
      $region47: #{gnn_forward.13} parent=39 // pred_region
        %s267 = smul.u32 4, %s14
        %p268 = scmp.lt.s32.totalorder %s267, 7
        %s269 = scalar_select %p268, %s267, 7
        %s270 = smul.addr %s269, 4
        %s271 = scalar_lea.vmem %s1, %s270
        %s272 = smul.u32 4, %s14
      $region48: #{gnn_forward.13} parent=39 // pred_fallthru
        _
    $region40: #{gnn_forward.13} parent=5 // pred_fallthru
      _
    %p273 = scmp.le.s32.totalorder 1, %s14
    %p274 = scmp.lt.s32.totalorder %s14, 3
    %p275 = pnand %p273, %p274
    %p276 = pneg %p275
    // Predicated region
    $region49: #{gnn_forward.13} parent=5 // pred_check
      _
    $region50: #{gnn_forward.13} parent=5 // pred_check_branch
      %278 = sbr.rel (%p275) target = $region52
    $region51: #{gnn_forward.13} parent=5 // pred_region
      %s279 = ssub.s32 %s14, 1
      %s280 = smul.u32 4, %s19
      %p281 = scmp.lt.s32.totalorder %s280, 7
      %s282 = scalar_select %p281, %s280, 7
      %s283 = smul.addr %s282, 8
      %s284 = scalar_lea.vmem %s0, %s283
      %p285 = pneg %p40
      %p286 = pneg %p37
      %s287 = smul.u32 4, %s19
      %p288 = scmp.lt.s32.totalorder %s287, 7
      %s289 = scalar_select %p288, %s287, 7
      %s290 = smul.addr %s289, 4
      %s291 = scalar_lea.vmem %s1, %s290
      %p292 = pneg %p66
      %p293 = pneg %p63
      %p294 = pneg %p87
      %p295 = pneg %p84
      %p296 = pneg %p108
      %p297 = pneg %p105
      %p298 = pneg %p129
      %p299 = pneg %p126
      %p300 = pneg %p150
      %p301 = pneg %p147
      %p302 = pneg %p171
      %p303 = pneg %p168
      %p304 = pneg %p192
      %p305 = pneg %p189
      %p306 = pneg %p218
      %p307 = pneg %p215
      %s308 = smul.u32 4, %s19
      %p309 = scmp.lt.s32.totalorder %s308, 7
      %s310 = scalar_select %p309, %s308, 7
      %s311 = smul.addr %s310, 4
      %s312 = scalar_lea.vmem %s8, %s311
      %s313 = smul.u32 4, %s19
      %p314 = scmp.lt.s32.totalorder %s313, 7
      %s315 = scalar_select %p314, %s313, 7
      %s316 = smul.addr %s315, 8
      %s317 = scalar_lea.vmem %s0, %s316
      %s318 = smul.u32 4, %s19
      %s319 = smul.u32 4, %s19
      %p320 = scmp.lt.s32.totalorder %s319, 7
      %s321 = scalar_select %p320, %s319, 7
      %s322 = smul.addr %s321, 4
      %s323 = scalar_lea.vmem %s1, %s322
      %s324 = smul.u32 4, %s19
      %s325 = smul.u32 4, %s19
      %p326 = scmp.lt.s32.totalorder %s325, 7
      %s327 = scalar_select %p326, %s325, 7
      %s328 = smul.addr %s327, 4
      %s329 = scalar_lea.vmem %s8, %s328
      %s330 = smul.u32 4, %s19
      %v332 = vld [vmem:[%s317] sm:$0xff]
      %v333 = vld [vmem:[%s317 + $0x8] sm:$0xff]
      %v334 = vld [vmem:[%s317 + $0x10] sm:$0xff]
      %v335 = vld [vmem:[%s317 + $0x18] sm:$0xff]
      %v336 = vld [vmem:[%s2] sm:$0x1]
      %v337 = vld [vmem:[%s3] sm:$0x1]
      %vm338 = vcmask 523264
      %v339 = vsel %vm338, %v332, 0.0
      %340 = vadd.xlane.f32.xlu0 %v339
      %v341 = vpop.xlane.xlu0 %340
      %v342 = vsel %vm338, %v333, 0.0
      %343 = vadd.xlane.f32.xlu0 %v342
      %v344 = vpop.xlane.xlu0 %343
      %v345 = vsel %vm338, %v334, 0.0
      %346 = vadd.xlane.f32.xlu0 %v345
      %v347 = vpop.xlane.xlu0 %346
      %v348 = vsel %vm338, %v335, 0.0
      %349 = vadd.xlane.f32.xlu0 %v348
      %v350 = vpop.xlane.xlu0 %349
      %v351 = vrcp.pop 64.0
      %v352 = vmul.f32 64.0, %v351
      %v353 = vsub.f32 1.0, %v352
      %v354 = vmul.f32 %v351, %v353
      %v355 = vadd.f32 %v351, %v354
      %vm356 = vweird.f32 %v351
      %v357 = vsel %vm356, %v351, %v355
      %v358 = vmul.f32 %v341, %v357
      %v359 = vmul.f32 %v344, %v357
      %v360 = vmul.f32 %v347, %v357
      %v361 = vmul.f32 %v350, %v357
      %v362 = vsub.f32 %v332, %v358
      %v363 = vsub.f32 %v333, %v359
      %v364 = vsub.f32 %v334, %v360
      %v365 = vsub.f32 %v335, %v361
      %v366 = vmul.f32 %v362, %v362
      %v367 = vmul.f32 %v363, %v363
      %v368 = vmul.f32 %v364, %v364
      %v369 = vmul.f32 %v365, %v365
      %v370 = vsel %vm338, %v366, 0.0
      %371 = vadd.xlane.f32.xlu0 %v370
      %v372 = vpop.xlane.xlu0 %371
      %v373 = vsel %vm338, %v367, 0.0
      %374 = vadd.xlane.f32.xlu0 %v373
      %v375 = vpop.xlane.xlu0 %374
      %v376 = vsel %vm338, %v368, 0.0
      %377 = vadd.xlane.f32.xlu0 %v376
      %v378 = vpop.xlane.xlu0 %377
      %v379 = vsel %vm338, %v369, 0.0
      %380 = vadd.xlane.f32.xlu0 %v379
      %v381 = vpop.xlane.xlu0 %380
      %v382 = vmul.f32 %v372, %v357
      %v383 = vmul.f32 %v375, %v357
      %v384 = vmul.f32 %v378, %v357
      %v385 = vmul.f32 %v381, %v357
      %v386 = vadd.f32 %v382, 1e-05
      %v387 = vadd.f32 %v383, 1e-05
      %v388 = vadd.f32 %v384, 1e-05
      %v389 = vadd.f32 %v385, 1e-05
      %v390 = vrsqrt.pop %v386
      %v391 = vmul.f32 %v390, %v386
      %v392 = vmul.f32 %v391, %v390
      %v393 = vmul.f32 0.5, %v392
      %v394 = vsub.f32 1.5, %v393
      %v395 = vmul.f32 %v390, %v394
      %vm396 = vweird.f32 %v386
      %vm397 = vweird.f32 %v390
      %vm398 = vmor %vm396, %vm397
      %v399 = vsel %vm398, %v390, %v395
      %v400 = vrsqrt.pop %v387
      %v401 = vmul.f32 %v400, %v387
      %v402 = vmul.f32 %v401, %v400
      %v403 = vmul.f32 0.5, %v402
      %v404 = vsub.f32 1.5, %v403
      %v405 = vmul.f32 %v400, %v404
      %vm406 = vweird.f32 %v387
      %vm407 = vweird.f32 %v400
      %vm408 = vmor %vm406, %vm407
      %v409 = vsel %vm408, %v400, %v405
      %v410 = vrsqrt.pop %v388
      %v411 = vmul.f32 %v410, %v388
      %v412 = vmul.f32 %v411, %v410
      %v413 = vmul.f32 0.5, %v412
      %v414 = vsub.f32 1.5, %v413
      %v415 = vmul.f32 %v410, %v414
      %vm416 = vweird.f32 %v388
      %vm417 = vweird.f32 %v410
      %vm418 = vmor %vm416, %vm417
      %v419 = vsel %vm418, %v410, %v415
      %v420 = vrsqrt.pop %v389
      %v421 = vmul.f32 %v420, %v389
      %v422 = vmul.f32 %v421, %v420
      %v423 = vmul.f32 0.5, %v422
      %v424 = vsub.f32 1.5, %v423
      %v425 = vmul.f32 %v420, %v424
      %vm426 = vweird.f32 %v389
      %vm427 = vweird.f32 %v420
      %vm428 = vmor %vm426, %vm427
      %v429 = vsel %vm428, %v420, %v425
      %v430 = vmul.f32 %v362, %v399
      %v431 = vmul.f32 %v363, %v409
      %v432 = vmul.f32 %v364, %v419
      %v433 = vmul.f32 %v365, %v429
      %v435 = vperm.slane %v336, 0
      %v437 = vmul.f32 %v430, %v435
      %v438 = vmul.f32 %v431, %v435
      %v439 = vmul.f32 %v432, %v435
      %v440 = vmul.f32 %v433, %v435
      %v442 = vperm.slane %v337, 0
      %v444 = vadd.f32 %v437, %v442
      %v445 = vadd.f32 %v438, %v442
      %v446 = vadd.f32 %v439, %v442
      %v447 = vadd.f32 %v440, %v442
      %v448 = vld [vmem:[%s323] sm:$0xf]
      %v449 = vld [vmem:[%s323 + $0x4] sm:$0xf]
      %v450 = vld [vmem:[%s323 + $0x8] sm:$0xf]
      %v451 = vld [vmem:[%s323 + $0xc] sm:$0xf]
      %v452 = vunpack.c.l.bf16 %v448
      %v453 = vunpack.c.l.bf16 %v449
      %v454 = vunpack.c.l.bf16 %v450
      %v455 = vunpack.c.l.bf16 %v451
      %460 = vrot.lane.b32.xlu0 %v452, 64
      %v461 = vpop.permute.xlu0 %460
      %462 = vrot.lane.b32.xlu0 %v453, 64
      %v463 = vpop.permute.xlu0 %462
      %464 = vrot.lane.b32.xlu0 %v454, 64
      %v465 = vpop.permute.xlu0 %464
      %466 = vrot.lane.b32.xlu0 %v455, 64
      %v467 = vpop.permute.xlu0 %466
      %v472 = vsel %vm338, %v444, %v461
      %v473 = vsel %vm338, %v445, %v463
      %v474 = vsel %vm338, %v446, %v465
      %v475 = vsel %vm338, %v447, %v467
      %v476 = vpack.c.bf16 %v473, %v472
      %v477 = vpack.c.bf16 %v475, %v474
      %v478 = vld [vmem:[%s4] sm:$0xf]
      %v479 = vld [vmem:[%s4 + $0x4] sm:$0xf]
      %v480 = vld [vmem:[%s4 + $0x8] sm:$0xf]
      %v481 = vld [vmem:[%s4 + $0xc] sm:$0xf]
      %v482 = vld [vmem:[%s4 + $0x10] sm:$0xf]
      %v483 = vld [vmem:[%s4 + $0x14] sm:$0xf]
      %v484 = vld [vmem:[%s4 + $0x18] sm:$0xf]
      %v485 = vld [vmem:[%s4 + $0x1c] sm:$0xf]
      %v486 = vld [vmem:[%s4 + $0x20] sm:$0xf]
      %v487 = vld [vmem:[%s4 + $0x24] sm:$0xf]
      %v488 = vld [vmem:[%s4 + $0x28] sm:$0xf]
      %v489 = vld [vmem:[%s4 + $0x2c] sm:$0xf]
      %v490 = vld [vmem:[%s4 + $0x30] sm:$0xf]
      %v491 = vld [vmem:[%s4 + $0x34] sm:$0xf]
      %v492 = vld [vmem:[%s4 + $0x38] sm:$0xf]
      %v493 = vld [vmem:[%s4 + $0x3c] sm:$0xf]
      %v494 = vld [vmem:[%s5] sm:$0x1]
      %v496 = vperm.slane %v494, 0
      %v514 = vunpack.c.l.b16 %v478
      %v515 = vunpack.c.l.b16 %v479
      %v516 = vunpack.c.l.b16 %v480
      %v517 = vunpack.c.l.b16 %v481
      %v518 = vunpack.c.l.b16 %v482
      %v519 = vunpack.c.l.b16 %v483
      %v520 = vunpack.c.l.b16 %v484
      %v521 = vunpack.c.l.b16 %v485
      %v522 = vunpack.c.l.b16 %v486
      %v523 = vunpack.c.l.b16 %v487
      %v524 = vunpack.c.l.b16 %v488
      %v525 = vunpack.c.l.b16 %v489
      %v526 = vunpack.c.l.b16 %v490
      %v527 = vunpack.c.l.b16 %v491
      %v528 = vunpack.c.l.b16 %v492
      %v529 = vunpack.c.l.b16 %v493
      %v530 = vpack.c.b16 %v515, %v514
      %v531 = vpack.c.b16 %v517, %v516
      %v532 = vpack.c.b16 %v519, %v518
      %v533 = vpack.c.b16 %v521, %v520
      %v534 = vpack.c.b16 %v523, %v522
      %v535 = vpack.c.b16 %v525, %v524
      %v536 = vpack.c.b16 %v527, %v526
      %v537 = vpack.c.b16 %v529, %v528
      %546 = vmatpush.bf16.msra.mxu0 %v537
      %547 = vmatpush.bf16.msra.mxu0 %v536
      %548 = vmatpush.bf16.msra.mxu0 %v535
      %549 = vmatpush.bf16.msra.mxu0 %v534
      %550 = vmatpush.bf16.msra.mxu0 %v533
      %551 = vmatpush.bf16.msra.mxu0 %v532
      %552 = vmatpush.bf16.msra.mxu0 %v531
      %553 = vmatpush.bf16.msra.mxu0 %v530
      %554 = vmatmul.bf16.gmra.mxu0 %v476
      %v555 = vpop.f32.mrf.mxu0
      %v556 = vadd.f32 %v496, %v555
      %v557 = vpop.f32.mrf.mxu0
      %v558 = vadd.f32 %v496, %v557
      %559 = vmatmul.bf16.gmra.mxu0 %v477
      %v560 = vpop.f32.mrf.mxu0
      %v561 = vadd.f32 %v496, %v560
      %v562 = vpop.f32.mrf.mxu0
      %v563 = vadd.f32 %v496, %v562
      %564 = vdwg.mxu0
      %v565 = vmax.f32 %v556, 0.0
      %v566 = vmax.f32 %v558, 0.0
      %v567 = vmax.f32 %v561, 0.0
      %v568 = vmax.f32 %v563, 0.0
      %v569 = vpack.c.bf16 %v566, %v565
      %v570 = vpack.c.bf16 %v568, %v567
      %v571 = vld [vmem:[%s6] sm:$0xf]
      %v572 = vld [vmem:[%s6 + $0x4] sm:$0xf]
      %v573 = vld [vmem:[%s6 + $0x8] sm:$0xf]
      %v574 = vld [vmem:[%s6 + $0xc] sm:$0xf]
      %v575 = vld [vmem:[%s6 + $0x10] sm:$0xf]
      %v576 = vld [vmem:[%s6 + $0x14] sm:$0xf]
      %v577 = vld [vmem:[%s6 + $0x18] sm:$0xf]
      %v578 = vld [vmem:[%s6 + $0x1c] sm:$0xf]
      %v579 = vld [vmem:[%s7] sm:$0x1]
      %v581 = vperm.slane %v579, 0
      %v591 = vunpack.c.l.b16 %v571
      %v592 = vunpack.c.l.b16 %v572
      %v593 = vunpack.c.l.b16 %v573
      %v594 = vunpack.c.l.b16 %v574
      %v595 = vunpack.c.l.b16 %v575
      %v596 = vunpack.c.l.b16 %v576
      %v597 = vunpack.c.l.b16 %v577
      %v598 = vunpack.c.l.b16 %v578
      %v599 = vpack.c.b16 %v592, %v591
      %v600 = vpack.c.b16 %v594, %v593
      %v601 = vpack.c.b16 %v596, %v595
      %v602 = vpack.c.b16 %v598, %v597
      %v608 = vsel %vm338, %v569, 0
      %v611 = vsel %vm338, %v570, 0
      %613 = vmatpush.bf16.msra.mxu0 0
      %614 = vmatpush.bf16.msra.mxu0 0
      %615 = vmatpush.bf16.msra.mxu0 0
      %616 = vmatpush.bf16.msra.mxu0 0
      %617 = vmatpush.bf16.msra.mxu0 %v602
      %618 = vmatpush.bf16.msra.mxu0 %v601
      %619 = vmatpush.bf16.msra.mxu0 %v600
      %620 = vmatpush.bf16.msra.mxu0 %v599
      %621 = vmatmul.bf16.gmra.mxu0 %v608
      %v622 = vpop.f32.mrf.mxu0
      %v623 = vadd.f32 %v581, %v622
      %v624 = vpop.f32.mrf.mxu0
      %v625 = vadd.f32 %v581, %v624
      %626 = vmatmul.bf16.gmra.mxu0 %v611
      %v627 = vpop.f32.mrf.mxu0
      %v628 = vadd.f32 %v581, %v627
      %v629 = vpop.f32.mrf.mxu0
      %v630 = vadd.f32 %v581, %v629
      %631 = vdwg.mxu0
      %v632 = vpack.c.bf16 %v623, %v623
      %v633 = vpack.c.bf16 %v625, %v625
      %v634 = vpack.c.bf16 %v628, %v628
      %v635 = vpack.c.bf16 %v630, %v630
      %vm636 = vcmask 519168
      %637 = vst.msk [vmem:[%s329] sm:$0xf] %vm636, %v632
      %638 = vst.msk [vmem:[%s329 + $0x4] sm:$0xf] %vm636, %v633
      %639 = vst.msk [vmem:[%s329 + $0x8] sm:$0xf] %vm636, %v634
      %640 = vst.msk [vmem:[%s329 + $0xc] sm:$0xf] %vm636, %v635
      %s641 = smul.u32 4, %s19
      %p642 = scmp.lt.s32.totalorder %s641, 7
      %s643 = scalar_select %p642, %s641, 7
      %s644 = smul.addr %s643, 4
      %s645 = scalar_lea.vmem %s8, %s644
      // Predicated region
      $region53: #{gnn_forward.13} parent=51 // pred_check
        %p646 = pneg %p215
      $region54: #{gnn_forward.13} parent=51 // pred_check_branch
        %648 = sbr.rel (%p646) target = $region56
      $region55: #{gnn_forward.13} parent=51 // pred_region
        %s649 = smul.u32 4, %s19
      $region56: #{gnn_forward.13} parent=51 // pred_fallthru
        _
    $region52: #{gnn_forward.13} parent=5 // pred_fallthru
      _
    %p650 = scmp.le.s32.totalorder 2, %s14
    // Predicated region
    $region57: #{gnn_forward.13} parent=5 // pred_check
      %p651 = pneg %p650
    $region58: #{gnn_forward.13} parent=5 // pred_check_branch
      %653 = sbr.rel (%p651) target = $region60
    $region59: #{gnn_forward.13} parent=5 // pred_region
      %s654 = ssub.s32 %s14, 2
      // Predicated region
      $region61: #{gnn_forward.13} parent=59 // pred_check
        %p655 = pneg %p221
      $region62: #{gnn_forward.13} parent=59 // pred_check_branch
        %657 = sbr.rel (%p655) target = $region64
      $region63: #{gnn_forward.13} parent=59 // pred_region
        %s658 = smul.u32 4, %s20
        %p659 = scmp.lt.s32.totalorder %s658, 7
        %s660 = scalar_select %p659, %s658, 7
        %s661 = smul.addr %s660, 4
        %s662 = scalar_lea.vmem %s8, %s661
      $region64: #{gnn_forward.13} parent=59 // pred_fallthru
        _
    $region60: #{gnn_forward.13} parent=5 // pred_fallthru
      _
  $region6: #{gnn_forward.13} parent=0 // loop_footer
    %s18 = sadd.s32 1, %s14
  $region7: #{gnn_forward.13} parent=0 // loop_footer_branch
    %13 = sbr.rel target = $region3
  $region8: #{gnn_forward.13} parent=0 // loop_exit
    _

// kernel: gnn_forward.15
$region0: #{gnn_forward.15}
  #allocation0 [shape = 'u32[]', space=smem, size = 0x4, offset = 0x4, fixed_abs, tag = 'smem constant byte address 0x4 - core index']
  #allocation1 [shape = 'u32[72,128]{1,0:T(1,128)}', space=vmem, size = 0x9000, scoped, tag = 'internal scratch']
  %s0 = inlined_call_operand.vmem [shape: f32[96,64], index: 0, kind: input, shape index: {}]
  %s1 = inlined_call_operand.vmem [shape: bf16[96,64], index: 1, kind: input, shape index: {}]
  %s2 = inlined_call_operand.vmem [shape: f32[1,64], index: 2, kind: input, shape index: {}]
  %s3 = inlined_call_operand.vmem [shape: f32[1,64], index: 3, kind: input, shape index: {}]
  %s4 = inlined_call_operand.vmem [shape: bf16[128,64], index: 4, kind: input, shape index: {}]
  %s5 = inlined_call_operand.vmem [shape: f32[1,64], index: 5, kind: input, shape index: {}]
  %s6 = inlined_call_operand.vmem [shape: bf16[64,64], index: 6, kind: input, shape index: {}]
  %s7 = inlined_call_operand.vmem [shape: f32[1,64], index: 7, kind: input, shape index: {}]
  %s8 = inlined_call_operand.vmem [shape: bf16[96,64], index: 8, kind: output, shape index: {}]
  %s9 = sld [smem:[#allocation0]]
  $region65: #{gnn_forward.15} parent=0
    _
  %s11 = ssub.s32 1, %s9
  %s12 = scalar_select 0, %s11, %s9
  loop: start=0, step=1, limit=4
  $region2: #{gnn_forward.15} parent=0 // loop_pre_header
    _
  $region3: #{gnn_forward.15} parent=0 // loop_header
    %s14 = sphi 0, %s18
    %p15 = scmp.ge.s32.totalorder %s14, 4
    %s24 = sphi 0, %s26
    %s27 = sphi 0, %s24
    %s28 = sphi 0, %s27
    %s44 = sphi 0, %s28
    %s50 = sphi 0, %s52
    %s53 = sphi 0, %s50
    %s54 = sphi 0, %s53
    %s70 = sphi 0, %s54
    %s74 = sphi 0, %s74
    %s76 = sphi 0, %s74
    %s77 = sphi 0, %s76
    %s91 = sphi 0, %s77
    %s95 = sphi 0, %s95
    %s97 = sphi 0, %s95
    %s98 = sphi 0, %s97
    %s112 = sphi 0, %s98
    %s116 = sphi 0, %s116
    %s118 = sphi 0, %s116
    %s119 = sphi 0, %s118
    %s133 = sphi 0, %s119
    %s137 = sphi 0, %s137
    %s139 = sphi 0, %s137
    %s140 = sphi 0, %s139
    %s154 = sphi 0, %s140
    %s158 = sphi 0, %s158
    %s160 = sphi 0, %s158
    %s161 = sphi 0, %s160
    %s175 = sphi 0, %s161
    %s179 = sphi 0, %s179
    %s181 = sphi 0, %s179
    %s182 = sphi 0, %s181
    %s196 = sphi 0, %s182
    %s202 = sphi 0, %s204
    %s205 = sphi 0, %s202
    %s206 = sphi 0, %s205
    %s222 = sphi 0, %s206
  $region4: #{gnn_forward.15} parent=0 // loop_header_branch
    %17 = sbr.rel (%p15) target = $region8
  $region5: #{gnn_forward.15} parent=0 // loop_body
    %s19 = ssub.s32 %s14, 1
    %s20 = ssub.s32 %s14, 2
    %s21 = sadd.s32 %s14, 1
    %s22 = ssub.s32 %s14, %s21
    %p23 = scmp.eq.s32.totalorder %s22, 0
    %s25 = sadd.s32 %s24, 1
    %s26 = scalar_select %p23, %s24, %s25
    %p29 = pneg %p23
    %p30 = scmp.eq.s32.totalorder %s14, 1
    %p31 = por %p29, %p30
    %p32 = scmp.ne.s32.totalorder %s24, %s27
    %p33 = scmp.eq.s32.totalorder %s14, 0
    %p34 = por %p32, %p33
    %p35 = scmp.ne.s32.totalorder %s24, %s27
    %p36 = scmp.eq.s32.totalorder %s19, 1
    %p37 = por %p35, %p36
    %p38 = scmp.ne.s32.totalorder %s27, %s28
    %p39 = scmp.eq.s32.totalorder %s19, 0
    %p40 = por %p38, %p39
    %p41 = scmp.ne.s32.totalorder %s27, %s28
    %p42 = scmp.eq.s32.totalorder %s20, 1
    %p43 = por %p41, %p42
    %p45 = scmp.ne.s32.totalorder %s28, %s44
    %p46 = scmp.eq.s32.totalorder %s20, 0
    %p47 = por %p45, %p46
    %s48 = ssub.s32 %s14, %s21
    %p49 = scmp.eq.s32.totalorder %s48, 0
    %s51 = sadd.s32 %s50, 1
    %s52 = scalar_select %p49, %s50, %s51
    %p55 = pneg %p49
    %p56 = scmp.eq.s32.totalorder %s14, 1
    %p57 = por %p55, %p56
    %p58 = scmp.ne.s32.totalorder %s50, %s53
    %p59 = scmp.eq.s32.totalorder %s14, 0
    %p60 = por %p58, %p59
    %p61 = scmp.ne.s32.totalorder %s50, %s53
    %p62 = scmp.eq.s32.totalorder %s19, 1
    %p63 = por %p61, %p62
    %p64 = scmp.ne.s32.totalorder %s53, %s54
    %p65 = scmp.eq.s32.totalorder %s19, 0
    %p66 = por %p64, %p65
    %p67 = scmp.ne.s32.totalorder %s53, %s54
    %p68 = scmp.eq.s32.totalorder %s20, 1
    %p69 = por %p67, %p68
    %p71 = scmp.ne.s32.totalorder %s54, %s70
    %p72 = scmp.eq.s32.totalorder %s20, 0
    %p73 = por %p71, %p72
    %s75 = sadd.s32 %s74, 1
    %p78 = scmp.eq.s32.totalorder %s14, 1
    %p79 = scmp.ne.s32.totalorder %s74, %s76
    %p80 = scmp.eq.s32.totalorder %s14, 0
    %p81 = por %p79, %p80
    %p82 = scmp.ne.s32.totalorder %s74, %s76
    %p83 = scmp.eq.s32.totalorder %s19, 1
    %p84 = por %p82, %p83
    %p85 = scmp.ne.s32.totalorder %s76, %s77
    %p86 = scmp.eq.s32.totalorder %s19, 0
    %p87 = por %p85, %p86
    %p88 = scmp.ne.s32.totalorder %s76, %s77
    %p89 = scmp.eq.s32.totalorder %s20, 1
    %p90 = por %p88, %p89
    %p92 = scmp.ne.s32.totalorder %s77, %s91
    %p93 = scmp.eq.s32.totalorder %s20, 0
    %p94 = por %p92, %p93
    %s96 = sadd.s32 %s95, 1
    %p99 = scmp.eq.s32.totalorder %s14, 1
    %p100 = scmp.ne.s32.totalorder %s95, %s97
    %p101 = scmp.eq.s32.totalorder %s14, 0
    %p102 = por %p100, %p101
    %p103 = scmp.ne.s32.totalorder %s95, %s97
    %p104 = scmp.eq.s32.totalorder %s19, 1
    %p105 = por %p103, %p104
    %p106 = scmp.ne.s32.totalorder %s97, %s98
    %p107 = scmp.eq.s32.totalorder %s19, 0
    %p108 = por %p106, %p107
    %p109 = scmp.ne.s32.totalorder %s97, %s98
    %p110 = scmp.eq.s32.totalorder %s20, 1
    %p111 = por %p109, %p110
    %p113 = scmp.ne.s32.totalorder %s98, %s112
    %p114 = scmp.eq.s32.totalorder %s20, 0
    %p115 = por %p113, %p114
    %s117 = sadd.s32 %s116, 1
    %p120 = scmp.eq.s32.totalorder %s14, 1
    %p121 = scmp.ne.s32.totalorder %s116, %s118
    %p122 = scmp.eq.s32.totalorder %s14, 0
    %p123 = por %p121, %p122
    %p124 = scmp.ne.s32.totalorder %s116, %s118
    %p125 = scmp.eq.s32.totalorder %s19, 1
    %p126 = por %p124, %p125
    %p127 = scmp.ne.s32.totalorder %s118, %s119
    %p128 = scmp.eq.s32.totalorder %s19, 0
    %p129 = por %p127, %p128
    %p130 = scmp.ne.s32.totalorder %s118, %s119
    %p131 = scmp.eq.s32.totalorder %s20, 1
    %p132 = por %p130, %p131
    %p134 = scmp.ne.s32.totalorder %s119, %s133
    %p135 = scmp.eq.s32.totalorder %s20, 0
    %p136 = por %p134, %p135
    %s138 = sadd.s32 %s137, 1
    %p141 = scmp.eq.s32.totalorder %s14, 1
    %p142 = scmp.ne.s32.totalorder %s137, %s139
    %p143 = scmp.eq.s32.totalorder %s14, 0
    %p144 = por %p142, %p143
    %p145 = scmp.ne.s32.totalorder %s137, %s139
    %p146 = scmp.eq.s32.totalorder %s19, 1
    %p147 = por %p145, %p146
    %p148 = scmp.ne.s32.totalorder %s139, %s140
    %p149 = scmp.eq.s32.totalorder %s19, 0
    %p150 = por %p148, %p149
    %p151 = scmp.ne.s32.totalorder %s139, %s140
    %p152 = scmp.eq.s32.totalorder %s20, 1
    %p153 = por %p151, %p152
    %p155 = scmp.ne.s32.totalorder %s140, %s154
    %p156 = scmp.eq.s32.totalorder %s20, 0
    %p157 = por %p155, %p156
    %s159 = sadd.s32 %s158, 1
    %p162 = scmp.eq.s32.totalorder %s14, 1
    %p163 = scmp.ne.s32.totalorder %s158, %s160
    %p164 = scmp.eq.s32.totalorder %s14, 0
    %p165 = por %p163, %p164
    %p166 = scmp.ne.s32.totalorder %s158, %s160
    %p167 = scmp.eq.s32.totalorder %s19, 1
    %p168 = por %p166, %p167
    %p169 = scmp.ne.s32.totalorder %s160, %s161
    %p170 = scmp.eq.s32.totalorder %s19, 0
    %p171 = por %p169, %p170
    %p172 = scmp.ne.s32.totalorder %s160, %s161
    %p173 = scmp.eq.s32.totalorder %s20, 1
    %p174 = por %p172, %p173
    %p176 = scmp.ne.s32.totalorder %s161, %s175
    %p177 = scmp.eq.s32.totalorder %s20, 0
    %p178 = por %p176, %p177
    %s180 = sadd.s32 %s179, 1
    %p183 = scmp.eq.s32.totalorder %s14, 1
    %p184 = scmp.ne.s32.totalorder %s179, %s181
    %p185 = scmp.eq.s32.totalorder %s14, 0
    %p186 = por %p184, %p185
    %p187 = scmp.ne.s32.totalorder %s179, %s181
    %p188 = scmp.eq.s32.totalorder %s19, 1
    %p189 = por %p187, %p188
    %p190 = scmp.ne.s32.totalorder %s181, %s182
    %p191 = scmp.eq.s32.totalorder %s19, 0
    %p192 = por %p190, %p191
    %p193 = scmp.ne.s32.totalorder %s181, %s182
    %p194 = scmp.eq.s32.totalorder %s20, 1
    %p195 = por %p193, %p194
    %p197 = scmp.ne.s32.totalorder %s182, %s196
    %p198 = scmp.eq.s32.totalorder %s20, 0
    %p199 = por %p197, %p198
    %s200 = ssub.s32 %s14, %s21
    %p201 = scmp.eq.s32.totalorder %s200, 0
    %s203 = sadd.s32 %s202, 1
    %s204 = scalar_select %p201, %s202, %s203
    %p207 = pneg %p201
    %p208 = scmp.eq.s32.totalorder %s14, 1
    %p209 = por %p207, %p208
    %p210 = scmp.ne.s32.totalorder %s202, %s205
    %p211 = scmp.eq.s32.totalorder %s14, 0
    %p212 = por %p210, %p211
    %p213 = scmp.ne.s32.totalorder %s202, %s205
    %p214 = scmp.eq.s32.totalorder %s19, 1
    %p215 = por %p213, %p214
    %p216 = scmp.ne.s32.totalorder %s205, %s206
    %p217 = scmp.eq.s32.totalorder %s19, 0
    %p218 = por %p216, %p217
    %p219 = scmp.ne.s32.totalorder %s205, %s206
    %p220 = scmp.eq.s32.totalorder %s20, 1
    %p221 = por %p219, %p220
    %p223 = scmp.ne.s32.totalorder %s206, %s222
    %p224 = scmp.eq.s32.totalorder %s20, 0
    %p225 = por %p223, %p224
    %p226 = scmp.le.s32.totalorder 1, %s14
    %p227 = scmp.lt.s32.totalorder %s14, 3
    %p228 = pnand %p226, %p227
    %p229 = pneg %p228
    // Predicated region
    $region9: #{gnn_forward.15} parent=5 // pred_check
      _
    $region10: #{gnn_forward.15} parent=5 // pred_check_branch
      %231 = sbr.rel (%p228) target = $region12
    $region11: #{gnn_forward.15} parent=5 // pred_region
      %s232 = ssub.s32 %s14, 1
      // Predicated region
      $region13: #{gnn_forward.15} parent=11 // pred_check
        %p233 = pneg %p87
      $region14: #{gnn_forward.15} parent=11 // pred_check_branch
        %235 = sbr.rel (%p233) target = $region16
      $region15: #{gnn_forward.15} parent=11 // pred_region
        _
      $region16: #{gnn_forward.15} parent=11 // pred_fallthru
        _
      // Predicated region
      $region17: #{gnn_forward.15} parent=11 // pred_check
        %p236 = pneg %p108
      $region18: #{gnn_forward.15} parent=11 // pred_check_branch
        %238 = sbr.rel (%p236) target = $region20
      $region19: #{gnn_forward.15} parent=11 // pred_region
        _
      $region20: #{gnn_forward.15} parent=11 // pred_fallthru
        _
      // Predicated region
      $region21: #{gnn_forward.15} parent=11 // pred_check
        %p239 = pneg %p129
      $region22: #{gnn_forward.15} parent=11 // pred_check_branch
        %241 = sbr.rel (%p239) target = $region24
      $region23: #{gnn_forward.15} parent=11 // pred_region
        _
      $region24: #{gnn_forward.15} parent=11 // pred_fallthru
        _
      // Predicated region
      $region25: #{gnn_forward.15} parent=11 // pred_check
        %p242 = pneg %p150
      $region26: #{gnn_forward.15} parent=11 // pred_check_branch
        %244 = sbr.rel (%p242) target = $region28
      $region27: #{gnn_forward.15} parent=11 // pred_region
        _
      $region28: #{gnn_forward.15} parent=11 // pred_fallthru
        _
      // Predicated region
      $region29: #{gnn_forward.15} parent=11 // pred_check
        %p245 = pneg %p171
      $region30: #{gnn_forward.15} parent=11 // pred_check_branch
        %247 = sbr.rel (%p245) target = $region32
      $region31: #{gnn_forward.15} parent=11 // pred_region
        _
      $region32: #{gnn_forward.15} parent=11 // pred_fallthru
        _
      // Predicated region
      $region33: #{gnn_forward.15} parent=11 // pred_check
        %p248 = pneg %p192
      $region34: #{gnn_forward.15} parent=11 // pred_check_branch
        %250 = sbr.rel (%p248) target = $region36
      $region35: #{gnn_forward.15} parent=11 // pred_region
        _
      $region36: #{gnn_forward.15} parent=11 // pred_fallthru
        _
    $region12: #{gnn_forward.15} parent=5 // pred_fallthru
      _
    %p251 = scmp.lt.s32.totalorder %s14, 2
    // Predicated region
    $region37: #{gnn_forward.15} parent=5 // pred_check
      %p252 = pneg %p251
    $region38: #{gnn_forward.15} parent=5 // pred_check_branch
      %254 = sbr.rel (%p252) target = $region40
    $region39: #{gnn_forward.15} parent=5 // pred_region
      // Predicated region
      $region41: #{gnn_forward.15} parent=39 // pred_check
        %p255 = pneg %p34
      $region42: #{gnn_forward.15} parent=39 // pred_check_branch
        %257 = sbr.rel (%p255) target = $region44
      $region43: #{gnn_forward.15} parent=39 // pred_region
        %s258 = smul.u32 6, %s14
        %p259 = scmp.lt.s32.totalorder %s258, 11
        %s260 = scalar_select %p259, %s258, 11
        %s261 = smul.addr %s260, 8
        %s262 = scalar_lea.vmem %s0, %s261
        %s263 = smul.u32 6, %s14
      $region44: #{gnn_forward.15} parent=39 // pred_fallthru
        _
      // Predicated region
      $region45: #{gnn_forward.15} parent=39 // pred_check
        %p264 = pneg %p60
      $region46: #{gnn_forward.15} parent=39 // pred_check_branch
        %266 = sbr.rel (%p264) target = $region48
      $region47: #{gnn_forward.15} parent=39 // pred_region
        %s267 = smul.u32 6, %s14
        %p268 = scmp.lt.s32.totalorder %s267, 11
        %s269 = scalar_select %p268, %s267, 11
        %s270 = smul.addr %s269, 4
        %s271 = scalar_lea.vmem %s1, %s270
        %s272 = smul.u32 6, %s14
      $region48: #{gnn_forward.15} parent=39 // pred_fallthru
        _
    $region40: #{gnn_forward.15} parent=5 // pred_fallthru
      _
    %p273 = scmp.le.s32.totalorder 1, %s14
    %p274 = scmp.lt.s32.totalorder %s14, 3
    %p275 = pnand %p273, %p274
    %p276 = pneg %p275
    // Predicated region
    $region49: #{gnn_forward.15} parent=5 // pred_check
      _
    $region50: #{gnn_forward.15} parent=5 // pred_check_branch
      %278 = sbr.rel (%p275) target = $region52
    $region51: #{gnn_forward.15} parent=5 // pred_region
      %s279 = ssub.s32 %s14, 1
      %s280 = smul.u32 6, %s19
      %p281 = scmp.lt.s32.totalorder %s280, 11
      %s282 = scalar_select %p281, %s280, 11
      %s283 = smul.addr %s282, 8
      %s284 = scalar_lea.vmem %s0, %s283
      %p285 = pneg %p40
      %p286 = pneg %p37
      %s287 = smul.u32 6, %s19
      %p288 = scmp.lt.s32.totalorder %s287, 11
      %s289 = scalar_select %p288, %s287, 11
      %s290 = smul.addr %s289, 4
      %s291 = scalar_lea.vmem %s1, %s290
      %p292 = pneg %p66
      %p293 = pneg %p63
      %p294 = pneg %p87
      %p295 = pneg %p84
      %p296 = pneg %p108
      %p297 = pneg %p105
      %p298 = pneg %p129
      %p299 = pneg %p126
      %p300 = pneg %p150
      %p301 = pneg %p147
      %p302 = pneg %p171
      %p303 = pneg %p168
      %p304 = pneg %p192
      %p305 = pneg %p189
      %p306 = pneg %p218
      %p307 = pneg %p215
      %s308 = smul.u32 6, %s19
      %p309 = scmp.lt.s32.totalorder %s308, 11
      %s310 = scalar_select %p309, %s308, 11
      %s311 = smul.addr %s310, 4
      %s312 = scalar_lea.vmem %s8, %s311
      %s313 = smul.u32 6, %s19
      %p314 = scmp.lt.s32.totalorder %s313, 11
      %s315 = scalar_select %p314, %s313, 11
      %s316 = smul.addr %s315, 8
      %s317 = scalar_lea.vmem %s0, %s316
      %s318 = smul.u32 6, %s19
      %s319 = smul.u32 6, %s19
      %p320 = scmp.lt.s32.totalorder %s319, 11
      %s321 = scalar_select %p320, %s319, 11
      %s322 = smul.addr %s321, 4
      %s323 = scalar_lea.vmem %s1, %s322
      %s324 = smul.u32 6, %s19
      %s325 = smul.u32 6, %s19
      %p326 = scmp.lt.s32.totalorder %s325, 11
      %s327 = scalar_select %p326, %s325, 11
      %s328 = smul.addr %s327, 4
      %s329 = scalar_lea.vmem %s8, %s328
      %s330 = smul.u32 6, %s19
      %v332 = vld [vmem:[%s317] sm:$0xff]
      %v333 = vld [vmem:[%s317 + $0x8] sm:$0xff]
      %v334 = vld [vmem:[%s317 + $0x10] sm:$0xff]
      %v335 = vld [vmem:[%s317 + $0x18] sm:$0xff]
      %v336 = vld [vmem:[%s317 + $0x20] sm:$0xff]
      %v337 = vld [vmem:[%s317 + $0x28] sm:$0xff]
      %v338 = vld [vmem:[%s2] sm:$0x1]
      %v339 = vld [vmem:[%s3] sm:$0x1]
      %vm340 = vcmask 523264
      %v341 = vsel %vm340, %v332, 0.0
      %342 = vadd.xlane.f32.xlu0 %v341
      %v343 = vpop.xlane.xlu0 %342
      %v344 = vsel %vm340, %v333, 0.0
      %345 = vadd.xlane.f32.xlu0 %v344
      %v346 = vpop.xlane.xlu0 %345
      %v347 = vsel %vm340, %v334, 0.0
      %348 = vadd.xlane.f32.xlu0 %v347
      %v349 = vpop.xlane.xlu0 %348
      %v350 = vsel %vm340, %v335, 0.0
      %351 = vadd.xlane.f32.xlu0 %v350
      %v352 = vpop.xlane.xlu0 %351
      %v353 = vsel %vm340, %v336, 0.0
      %354 = vadd.xlane.f32.xlu0 %v353
      %v355 = vpop.xlane.xlu0 %354
      %v356 = vsel %vm340, %v337, 0.0
      %357 = vadd.xlane.f32.xlu0 %v356
      %v358 = vpop.xlane.xlu0 %357
      %v359 = vrcp.pop 64.0
      %v360 = vmul.f32 64.0, %v359
      %v361 = vsub.f32 1.0, %v360
      %v362 = vmul.f32 %v359, %v361
      %v363 = vadd.f32 %v359, %v362
      %vm364 = vweird.f32 %v359
      %v365 = vsel %vm364, %v359, %v363
      %v366 = vmul.f32 %v343, %v365
      %v367 = vmul.f32 %v346, %v365
      %v368 = vmul.f32 %v349, %v365
      %v369 = vmul.f32 %v352, %v365
      %v370 = vmul.f32 %v355, %v365
      %v371 = vmul.f32 %v358, %v365
      %v372 = vsub.f32 %v332, %v366
      %v373 = vsub.f32 %v333, %v367
      %v374 = vsub.f32 %v334, %v368
      %v375 = vsub.f32 %v335, %v369
      %v376 = vsub.f32 %v336, %v370
      %v377 = vsub.f32 %v337, %v371
      %v378 = vmul.f32 %v372, %v372
      %v379 = vmul.f32 %v373, %v373
      %v380 = vmul.f32 %v374, %v374
      %v381 = vmul.f32 %v375, %v375
      %v382 = vmul.f32 %v376, %v376
      %v383 = vmul.f32 %v377, %v377
      %v384 = vsel %vm340, %v378, 0.0
      %385 = vadd.xlane.f32.xlu0 %v384
      %v386 = vpop.xlane.xlu0 %385
      %v387 = vsel %vm340, %v379, 0.0
      %388 = vadd.xlane.f32.xlu0 %v387
      %v389 = vpop.xlane.xlu0 %388
      %v390 = vsel %vm340, %v380, 0.0
      %391 = vadd.xlane.f32.xlu0 %v390
      %v392 = vpop.xlane.xlu0 %391
      %v393 = vsel %vm340, %v381, 0.0
      %394 = vadd.xlane.f32.xlu0 %v393
      %v395 = vpop.xlane.xlu0 %394
      %v396 = vsel %vm340, %v382, 0.0
      %397 = vadd.xlane.f32.xlu0 %v396
      %v398 = vpop.xlane.xlu0 %397
      %v399 = vsel %vm340, %v383, 0.0
      %400 = vadd.xlane.f32.xlu0 %v399
      %v401 = vpop.xlane.xlu0 %400
      %v402 = vmul.f32 %v386, %v365
      %v403 = vmul.f32 %v389, %v365
      %v404 = vmul.f32 %v392, %v365
      %v405 = vmul.f32 %v395, %v365
      %v406 = vmul.f32 %v398, %v365
      %v407 = vmul.f32 %v401, %v365
      %v408 = vadd.f32 %v402, 1e-05
      %v409 = vadd.f32 %v403, 1e-05
      %v410 = vadd.f32 %v404, 1e-05
      %v411 = vadd.f32 %v405, 1e-05
      %v412 = vadd.f32 %v406, 1e-05
      %v413 = vadd.f32 %v407, 1e-05
      %v414 = vrsqrt.pop %v408
      %v415 = vmul.f32 %v414, %v408
      %v416 = vmul.f32 %v415, %v414
      %v417 = vmul.f32 0.5, %v416
      %v418 = vsub.f32 1.5, %v417
      %v419 = vmul.f32 %v414, %v418
      %vm420 = vweird.f32 %v408
      %vm421 = vweird.f32 %v414
      %vm422 = vmor %vm420, %vm421
      %v423 = vsel %vm422, %v414, %v419
      %v424 = vrsqrt.pop %v409
      %v425 = vmul.f32 %v424, %v409
      %v426 = vmul.f32 %v425, %v424
      %v427 = vmul.f32 0.5, %v426
      %v428 = vsub.f32 1.5, %v427
      %v429 = vmul.f32 %v424, %v428
      %vm430 = vweird.f32 %v409
      %vm431 = vweird.f32 %v424
      %vm432 = vmor %vm430, %vm431
      %v433 = vsel %vm432, %v424, %v429
      %v434 = vrsqrt.pop %v410
      %v435 = vmul.f32 %v434, %v410
      %v436 = vmul.f32 %v435, %v434
      %v437 = vmul.f32 0.5, %v436
      %v438 = vsub.f32 1.5, %v437
      %v439 = vmul.f32 %v434, %v438
      %vm440 = vweird.f32 %v410
      %vm441 = vweird.f32 %v434
      %vm442 = vmor %vm440, %vm441
      %v443 = vsel %vm442, %v434, %v439
      %v444 = vrsqrt.pop %v411
      %v445 = vmul.f32 %v444, %v411
      %v446 = vmul.f32 %v445, %v444
      %v447 = vmul.f32 0.5, %v446
      %v448 = vsub.f32 1.5, %v447
      %v449 = vmul.f32 %v444, %v448
      %vm450 = vweird.f32 %v411
      %vm451 = vweird.f32 %v444
      %vm452 = vmor %vm450, %vm451
      %v453 = vsel %vm452, %v444, %v449
      %v454 = vrsqrt.pop %v412
      %v455 = vmul.f32 %v454, %v412
      %v456 = vmul.f32 %v455, %v454
      %v457 = vmul.f32 0.5, %v456
      %v458 = vsub.f32 1.5, %v457
      %v459 = vmul.f32 %v454, %v458
      %vm460 = vweird.f32 %v412
      %vm461 = vweird.f32 %v454
      %vm462 = vmor %vm460, %vm461
      %v463 = vsel %vm462, %v454, %v459
      %v464 = vrsqrt.pop %v413
      %v465 = vmul.f32 %v464, %v413
      %v466 = vmul.f32 %v465, %v464
      %v467 = vmul.f32 0.5, %v466
      %v468 = vsub.f32 1.5, %v467
      %v469 = vmul.f32 %v464, %v468
      %vm470 = vweird.f32 %v413
      %vm471 = vweird.f32 %v464
      %vm472 = vmor %vm470, %vm471
      %v473 = vsel %vm472, %v464, %v469
      %v474 = vmul.f32 %v372, %v423
      %v475 = vmul.f32 %v373, %v433
      %v476 = vmul.f32 %v374, %v443
      %v477 = vmul.f32 %v375, %v453
      %v478 = vmul.f32 %v376, %v463
      %v479 = vmul.f32 %v377, %v473
      %v481 = vperm.slane %v338, 0
      %v483 = vmul.f32 %v474, %v481
      %v484 = vmul.f32 %v475, %v481
      %v485 = vmul.f32 %v476, %v481
      %v486 = vmul.f32 %v477, %v481
      %v487 = vmul.f32 %v478, %v481
      %v488 = vmul.f32 %v479, %v481
      %v490 = vperm.slane %v339, 0
      %v492 = vadd.f32 %v483, %v490
      %v493 = vadd.f32 %v484, %v490
      %v494 = vadd.f32 %v485, %v490
      %v495 = vadd.f32 %v486, %v490
      %v496 = vadd.f32 %v487, %v490
      %v497 = vadd.f32 %v488, %v490
      %v498 = vld [vmem:[%s323] sm:$0xf]
      %v499 = vld [vmem:[%s323 + $0x4] sm:$0xf]
      %v500 = vld [vmem:[%s323 + $0x8] sm:$0xf]
      %v501 = vld [vmem:[%s323 + $0xc] sm:$0xf]
      %v502 = vld [vmem:[%s323 + $0x10] sm:$0xf]
      %v503 = vld [vmem:[%s323 + $0x14] sm:$0xf]
      %v504 = vunpack.c.l.bf16 %v498
      %v505 = vunpack.c.l.bf16 %v499
      %v506 = vunpack.c.l.bf16 %v500
      %v507 = vunpack.c.l.bf16 %v501
      %v508 = vunpack.c.l.bf16 %v502
      %v509 = vunpack.c.l.bf16 %v503
      %516 = vrot.lane.b32.xlu0 %v504, 64
      %v517 = vpop.permute.xlu0 %516
      %518 = vrot.lane.b32.xlu0 %v505, 64
      %v519 = vpop.permute.xlu0 %518
      %520 = vrot.lane.b32.xlu0 %v506, 64
      %v521 = vpop.permute.xlu0 %520
      %522 = vrot.lane.b32.xlu0 %v507, 64
      %v523 = vpop.permute.xlu0 %522
      %524 = vrot.lane.b32.xlu0 %v508, 64
      %v525 = vpop.permute.xlu0 %524
      %526 = vrot.lane.b32.xlu0 %v509, 64
      %v527 = vpop.permute.xlu0 %526
      %v534 = vsel %vm340, %v492, %v517
      %v535 = vsel %vm340, %v493, %v519
      %v536 = vsel %vm340, %v494, %v521
      %v537 = vsel %vm340, %v495, %v523
      %v538 = vsel %vm340, %v496, %v525
      %v539 = vsel %vm340, %v497, %v527
      %v540 = vpack.c.bf16 %v535, %v534
      %v541 = vpack.c.bf16 %v537, %v536
      %v542 = vpack.c.bf16 %v539, %v538
      %v543 = vld [vmem:[%s4] sm:$0xf]
      %v544 = vld [vmem:[%s4 + $0x4] sm:$0xf]
      %v545 = vld [vmem:[%s4 + $0x8] sm:$0xf]
      %v546 = vld [vmem:[%s4 + $0xc] sm:$0xf]
      %v547 = vld [vmem:[%s4 + $0x10] sm:$0xf]
      %v548 = vld [vmem:[%s4 + $0x14] sm:$0xf]
      %v549 = vld [vmem:[%s4 + $0x18] sm:$0xf]
      %v550 = vld [vmem:[%s4 + $0x1c] sm:$0xf]
      %v551 = vld [vmem:[%s4 + $0x20] sm:$0xf]
      %v552 = vld [vmem:[%s4 + $0x24] sm:$0xf]
      %v553 = vld [vmem:[%s4 + $0x28] sm:$0xf]
      %v554 = vld [vmem:[%s4 + $0x2c] sm:$0xf]
      %v555 = vld [vmem:[%s4 + $0x30] sm:$0xf]
      %v556 = vld [vmem:[%s4 + $0x34] sm:$0xf]
      %v557 = vld [vmem:[%s4 + $0x38] sm:$0xf]
      %v558 = vld [vmem:[%s4 + $0x3c] sm:$0xf]
      %v559 = vld [vmem:[%s5] sm:$0x1]
      %v561 = vperm.slane %v559, 0
      %v579 = vunpack.c.l.b16 %v543
      %v580 = vunpack.c.l.b16 %v544
      %v581 = vunpack.c.l.b16 %v545
      %v582 = vunpack.c.l.b16 %v546
      %v583 = vunpack.c.l.b16 %v547
      %v584 = vunpack.c.l.b16 %v548
      %v585 = vunpack.c.l.b16 %v549
      %v586 = vunpack.c.l.b16 %v550
      %v587 = vunpack.c.l.b16 %v551
      %v588 = vunpack.c.l.b16 %v552
      %v589 = vunpack.c.l.b16 %v553
      %v590 = vunpack.c.l.b16 %v554
      %v591 = vunpack.c.l.b16 %v555
      %v592 = vunpack.c.l.b16 %v556
      %v593 = vunpack.c.l.b16 %v557
      %v594 = vunpack.c.l.b16 %v558
      %v595 = vpack.c.b16 %v580, %v579
      %v596 = vpack.c.b16 %v582, %v581
      %v597 = vpack.c.b16 %v584, %v583
      %v598 = vpack.c.b16 %v586, %v585
      %v599 = vpack.c.b16 %v588, %v587
      %v600 = vpack.c.b16 %v590, %v589
      %v601 = vpack.c.b16 %v592, %v591
      %v602 = vpack.c.b16 %v594, %v593
      %611 = vmatpush.bf16.msra.mxu0 %v602
      %612 = vmatpush.bf16.msra.mxu0 %v601
      %613 = vmatpush.bf16.msra.mxu0 %v600
      %614 = vmatpush.bf16.msra.mxu0 %v599
      %615 = vmatpush.bf16.msra.mxu0 %v598
      %616 = vmatpush.bf16.msra.mxu0 %v597
      %617 = vmatpush.bf16.msra.mxu0 %v596
      %618 = vmatpush.bf16.msra.mxu0 %v595
      %619 = vmatmul.bf16.gmra.mxu0 %v540
      %v620 = vpop.f32.mrf.mxu0
      %v621 = vadd.f32 %v561, %v620
      %v622 = vpop.f32.mrf.mxu0
      %v623 = vadd.f32 %v561, %v622
      %624 = vmatmul.bf16.gmra.mxu0 %v541
      %v625 = vpop.f32.mrf.mxu0
      %v626 = vadd.f32 %v561, %v625
      %v627 = vpop.f32.mrf.mxu0
      %v628 = vadd.f32 %v561, %v627
      %629 = vmatmul.bf16.gmra.mxu0 %v542
      %v630 = vpop.f32.mrf.mxu0
      %v631 = vadd.f32 %v561, %v630
      %v632 = vpop.f32.mrf.mxu0
      %v633 = vadd.f32 %v561, %v632
      %634 = vdwg.mxu0
      %v635 = vmax.f32 %v621, 0.0
      %v636 = vmax.f32 %v623, 0.0
      %v637 = vmax.f32 %v626, 0.0
      %v638 = vmax.f32 %v628, 0.0
      %v639 = vmax.f32 %v631, 0.0
      %v640 = vmax.f32 %v633, 0.0
      %v641 = vpack.c.bf16 %v636, %v635
      %v642 = vpack.c.bf16 %v638, %v637
      %v643 = vpack.c.bf16 %v640, %v639
      %v644 = vld [vmem:[%s6] sm:$0xf]
      %v645 = vld [vmem:[%s6 + $0x4] sm:$0xf]
      %v646 = vld [vmem:[%s6 + $0x8] sm:$0xf]
      %v647 = vld [vmem:[%s6 + $0xc] sm:$0xf]
      %v648 = vld [vmem:[%s6 + $0x10] sm:$0xf]
      %v649 = vld [vmem:[%s6 + $0x14] sm:$0xf]
      %v650 = vld [vmem:[%s6 + $0x18] sm:$0xf]
      %v651 = vld [vmem:[%s6 + $0x1c] sm:$0xf]
      %v652 = vld [vmem:[%s7] sm:$0x1]
      %v654 = vperm.slane %v652, 0
      %v664 = vunpack.c.l.b16 %v644
      %v665 = vunpack.c.l.b16 %v645
      %v666 = vunpack.c.l.b16 %v646
      %v667 = vunpack.c.l.b16 %v647
      %v668 = vunpack.c.l.b16 %v648
      %v669 = vunpack.c.l.b16 %v649
      %v670 = vunpack.c.l.b16 %v650
      %v671 = vunpack.c.l.b16 %v651
      %v672 = vpack.c.b16 %v665, %v664
      %v673 = vpack.c.b16 %v667, %v666
      %v674 = vpack.c.b16 %v669, %v668
      %v675 = vpack.c.b16 %v671, %v670
      %v681 = vsel %vm340, %v641, 0
      %v684 = vsel %vm340, %v642, 0
      %v687 = vsel %vm340, %v643, 0
      %689 = vmatpush.bf16.msra.mxu0 0
      %690 = vmatpush.bf16.msra.mxu0 0
      %691 = vmatpush.bf16.msra.mxu0 0
      %692 = vmatpush.bf16.msra.mxu0 0
      %693 = vmatpush.bf16.msra.mxu0 %v675
      %694 = vmatpush.bf16.msra.mxu0 %v674
      %695 = vmatpush.bf16.msra.mxu0 %v673
      %696 = vmatpush.bf16.msra.mxu0 %v672
      %697 = vmatmul.bf16.gmra.mxu0 %v681
      %v698 = vpop.f32.mrf.mxu0
      %v699 = vadd.f32 %v654, %v698
      %v700 = vpop.f32.mrf.mxu0
      %v701 = vadd.f32 %v654, %v700
      %702 = vmatmul.bf16.gmra.mxu0 %v684
      %v703 = vpop.f32.mrf.mxu0
      %v704 = vadd.f32 %v654, %v703
      %v705 = vpop.f32.mrf.mxu0
      %v706 = vadd.f32 %v654, %v705
      %707 = vmatmul.bf16.gmra.mxu0 %v687
      %v708 = vpop.f32.mrf.mxu0
      %v709 = vadd.f32 %v654, %v708
      %v710 = vpop.f32.mrf.mxu0
      %v711 = vadd.f32 %v654, %v710
      %712 = vdwg.mxu0
      %v713 = vpack.c.bf16 %v699, %v699
      %v714 = vpack.c.bf16 %v701, %v701
      %v715 = vpack.c.bf16 %v704, %v704
      %v716 = vpack.c.bf16 %v706, %v706
      %v717 = vpack.c.bf16 %v709, %v709
      %v718 = vpack.c.bf16 %v711, %v711
      %vm719 = vcmask 519168
      %720 = vst.msk [vmem:[%s329] sm:$0xf] %vm719, %v713
      %721 = vst.msk [vmem:[%s329 + $0x4] sm:$0xf] %vm719, %v714
      %722 = vst.msk [vmem:[%s329 + $0x8] sm:$0xf] %vm719, %v715
      %723 = vst.msk [vmem:[%s329 + $0xc] sm:$0xf] %vm719, %v716
      %724 = vst.msk [vmem:[%s329 + $0x10] sm:$0xf] %vm719, %v717
      %725 = vst.msk [vmem:[%s329 + $0x14] sm:$0xf] %vm719, %v718
      %s726 = smul.u32 6, %s19
      %p727 = scmp.lt.s32.totalorder %s726, 11
      %s728 = scalar_select %p727, %s726, 11
      %s729 = smul.addr %s728, 4
      %s730 = scalar_lea.vmem %s8, %s729
      // Predicated region
      $region53: #{gnn_forward.15} parent=51 // pred_check
        %p731 = pneg %p215
      $region54: #{gnn_forward.15} parent=51 // pred_check_branch
        %733 = sbr.rel (%p731) target = $region56
      $region55: #{gnn_forward.15} parent=51 // pred_region
        %s734 = smul.u32 6, %s19
      $region56: #{gnn_forward.15} parent=51 // pred_fallthru
        _
    $region52: #{gnn_forward.15} parent=5 // pred_fallthru
      _
    %p735 = scmp.le.s32.totalorder 2, %s14
    // Predicated region
    $region57: #{gnn_forward.15} parent=5 // pred_check
      %p736 = pneg %p735
    $region58: #{gnn_forward.15} parent=5 // pred_check_branch
      %738 = sbr.rel (%p736) target = $region60
    $region59: #{gnn_forward.15} parent=5 // pred_region
      %s739 = ssub.s32 %s14, 2
      // Predicated region
      $region61: #{gnn_forward.15} parent=59 // pred_check
        %p740 = pneg %p221
      $region62: #{gnn_forward.15} parent=59 // pred_check_branch
        %742 = sbr.rel (%p740) target = $region64
      $region63: #{gnn_forward.15} parent=59 // pred_region
        %s743 = smul.u32 6, %s20
        %p744 = scmp.lt.s32.totalorder %s743, 11
        %s745 = scalar_select %p744, %s743, 11
        %s746 = smul.addr %s745, 4
        %s747 = scalar_lea.vmem %s8, %s746
      $region64: #{gnn_forward.15} parent=59 // pred_fallthru
        _
    $region60: #{gnn_forward.15} parent=5 // pred_fallthru
      _
  $region6: #{gnn_forward.15} parent=0 // loop_footer
    %s18 = sadd.s32 1, %s14
  $region7: #{gnn_forward.15} parent=0 // loop_footer_branch
    %13 = sbr.rel target = $region3
  $region8: #{gnn_forward.15} parent=0 // loop_exit
    _

// kernel: gnn_forward.19
$region0: #{gnn_forward.19}
  #allocation0 [shape = 'u32[]', space=smem, size = 0x4, offset = 0x4, fixed_abs, tag = 'smem constant byte address 0x4 - core index']
  #allocation1 [shape = 'u32[72,128]{1,0:T(1,128)}', space=vmem, size = 0x9000, scoped, tag = 'internal scratch']
  %s0 = inlined_call_operand.vmem [shape: f32[96,64], index: 0, kind: input, shape index: {}]
  %s1 = inlined_call_operand.vmem [shape: bf16[96,64], index: 1, kind: input, shape index: {}]
  %s2 = inlined_call_operand.vmem [shape: f32[1,64], index: 2, kind: input, shape index: {}]
  %s3 = inlined_call_operand.vmem [shape: f32[1,64], index: 3, kind: input, shape index: {}]
  %s4 = inlined_call_operand.vmem [shape: bf16[128,64], index: 4, kind: input, shape index: {}]
  %s5 = inlined_call_operand.vmem [shape: f32[1,64], index: 5, kind: input, shape index: {}]
  %s6 = inlined_call_operand.vmem [shape: bf16[64,64], index: 6, kind: input, shape index: {}]
  %s7 = inlined_call_operand.vmem [shape: f32[1,64], index: 7, kind: input, shape index: {}]
  %s8 = inlined_call_operand.vmem [shape: bf16[64,64], index: 8, kind: input, shape index: {}]
  %s9 = inlined_call_operand.vmem [shape: f32[1,64], index: 9, kind: input, shape index: {}]
  %s10 = inlined_call_operand.vmem [shape: bf16[96,64], index: 10, kind: output, shape index: {}]
  %s11 = sld [smem:[#allocation0]]
  $region73: #{gnn_forward.19} parent=0
    _
  %s13 = ssub.s32 1, %s11
  %s14 = scalar_select 0, %s13, %s11
  loop: start=0, step=1, limit=4
  $region2: #{gnn_forward.19} parent=0 // loop_pre_header
    _
  $region3: #{gnn_forward.19} parent=0 // loop_header
    %s16 = sphi 0, %s20
    %p17 = scmp.ge.s32.totalorder %s16, 4
    %s26 = sphi 0, %s28
    %s29 = sphi 0, %s26
    %s30 = sphi 0, %s29
    %s46 = sphi 0, %s30
    %s52 = sphi 0, %s54
    %s55 = sphi 0, %s52
    %s56 = sphi 0, %s55
    %s72 = sphi 0, %s56
    %s76 = sphi 0, %s76
    %s78 = sphi 0, %s76
    %s79 = sphi 0, %s78
    %s93 = sphi 0, %s79
    %s97 = sphi 0, %s97
    %s99 = sphi 0, %s97
    %s100 = sphi 0, %s99
    %s114 = sphi 0, %s100
    %s118 = sphi 0, %s118
    %s120 = sphi 0, %s118
    %s121 = sphi 0, %s120
    %s135 = sphi 0, %s121
    %s139 = sphi 0, %s139
    %s141 = sphi 0, %s139
    %s142 = sphi 0, %s141
    %s156 = sphi 0, %s142
    %s160 = sphi 0, %s160
    %s162 = sphi 0, %s160
    %s163 = sphi 0, %s162
    %s177 = sphi 0, %s163
    %s181 = sphi 0, %s181
    %s183 = sphi 0, %s181
    %s184 = sphi 0, %s183
    %s198 = sphi 0, %s184
    %s202 = sphi 0, %s202
    %s204 = sphi 0, %s202
    %s205 = sphi 0, %s204
    %s219 = sphi 0, %s205
    %s223 = sphi 0, %s223
    %s225 = sphi 0, %s223
    %s226 = sphi 0, %s225
    %s240 = sphi 0, %s226
    %s246 = sphi 0, %s248
    %s249 = sphi 0, %s246
    %s250 = sphi 0, %s249
    %s266 = sphi 0, %s250
  $region4: #{gnn_forward.19} parent=0 // loop_header_branch
    %19 = sbr.rel (%p17) target = $region8
  $region5: #{gnn_forward.19} parent=0 // loop_body
    %s21 = ssub.s32 %s16, 1
    %s22 = ssub.s32 %s16, 2
    %s23 = sadd.s32 %s16, 1
    %s24 = ssub.s32 %s16, %s23
    %p25 = scmp.eq.s32.totalorder %s24, 0
    %s27 = sadd.s32 %s26, 1
    %s28 = scalar_select %p25, %s26, %s27
    %p31 = pneg %p25
    %p32 = scmp.eq.s32.totalorder %s16, 1
    %p33 = por %p31, %p32
    %p34 = scmp.ne.s32.totalorder %s26, %s29
    %p35 = scmp.eq.s32.totalorder %s16, 0
    %p36 = por %p34, %p35
    %p37 = scmp.ne.s32.totalorder %s26, %s29
    %p38 = scmp.eq.s32.totalorder %s21, 1
    %p39 = por %p37, %p38
    %p40 = scmp.ne.s32.totalorder %s29, %s30
    %p41 = scmp.eq.s32.totalorder %s21, 0
    %p42 = por %p40, %p41
    %p43 = scmp.ne.s32.totalorder %s29, %s30
    %p44 = scmp.eq.s32.totalorder %s22, 1
    %p45 = por %p43, %p44
    %p47 = scmp.ne.s32.totalorder %s30, %s46
    %p48 = scmp.eq.s32.totalorder %s22, 0
    %p49 = por %p47, %p48
    %s50 = ssub.s32 %s16, %s23
    %p51 = scmp.eq.s32.totalorder %s50, 0
    %s53 = sadd.s32 %s52, 1
    %s54 = scalar_select %p51, %s52, %s53
    %p57 = pneg %p51
    %p58 = scmp.eq.s32.totalorder %s16, 1
    %p59 = por %p57, %p58
    %p60 = scmp.ne.s32.totalorder %s52, %s55
    %p61 = scmp.eq.s32.totalorder %s16, 0
    %p62 = por %p60, %p61
    %p63 = scmp.ne.s32.totalorder %s52, %s55
    %p64 = scmp.eq.s32.totalorder %s21, 1
    %p65 = por %p63, %p64
    %p66 = scmp.ne.s32.totalorder %s55, %s56
    %p67 = scmp.eq.s32.totalorder %s21, 0
    %p68 = por %p66, %p67
    %p69 = scmp.ne.s32.totalorder %s55, %s56
    %p70 = scmp.eq.s32.totalorder %s22, 1
    %p71 = por %p69, %p70
    %p73 = scmp.ne.s32.totalorder %s56, %s72
    %p74 = scmp.eq.s32.totalorder %s22, 0
    %p75 = por %p73, %p74
    %s77 = sadd.s32 %s76, 1
    %p80 = scmp.eq.s32.totalorder %s16, 1
    %p81 = scmp.ne.s32.totalorder %s76, %s78
    %p82 = scmp.eq.s32.totalorder %s16, 0
    %p83 = por %p81, %p82
    %p84 = scmp.ne.s32.totalorder %s76, %s78
    %p85 = scmp.eq.s32.totalorder %s21, 1
    %p86 = por %p84, %p85
    %p87 = scmp.ne.s32.totalorder %s78, %s79
    %p88 = scmp.eq.s32.totalorder %s21, 0
    %p89 = por %p87, %p88
    %p90 = scmp.ne.s32.totalorder %s78, %s79
    %p91 = scmp.eq.s32.totalorder %s22, 1
    %p92 = por %p90, %p91
    %p94 = scmp.ne.s32.totalorder %s79, %s93
    %p95 = scmp.eq.s32.totalorder %s22, 0
    %p96 = por %p94, %p95
    %s98 = sadd.s32 %s97, 1
    %p101 = scmp.eq.s32.totalorder %s16, 1
    %p102 = scmp.ne.s32.totalorder %s97, %s99
    %p103 = scmp.eq.s32.totalorder %s16, 0
    %p104 = por %p102, %p103
    %p105 = scmp.ne.s32.totalorder %s97, %s99
    %p106 = scmp.eq.s32.totalorder %s21, 1
    %p107 = por %p105, %p106
    %p108 = scmp.ne.s32.totalorder %s99, %s100
    %p109 = scmp.eq.s32.totalorder %s21, 0
    %p110 = por %p108, %p109
    %p111 = scmp.ne.s32.totalorder %s99, %s100
    %p112 = scmp.eq.s32.totalorder %s22, 1
    %p113 = por %p111, %p112
    %p115 = scmp.ne.s32.totalorder %s100, %s114
    %p116 = scmp.eq.s32.totalorder %s22, 0
    %p117 = por %p115, %p116
    %s119 = sadd.s32 %s118, 1
    %p122 = scmp.eq.s32.totalorder %s16, 1
    %p123 = scmp.ne.s32.totalorder %s118, %s120
    %p124 = scmp.eq.s32.totalorder %s16, 0
    %p125 = por %p123, %p124
    %p126 = scmp.ne.s32.totalorder %s118, %s120
    %p127 = scmp.eq.s32.totalorder %s21, 1
    %p128 = por %p126, %p127
    %p129 = scmp.ne.s32.totalorder %s120, %s121
    %p130 = scmp.eq.s32.totalorder %s21, 0
    %p131 = por %p129, %p130
    %p132 = scmp.ne.s32.totalorder %s120, %s121
    %p133 = scmp.eq.s32.totalorder %s22, 1
    %p134 = por %p132, %p133
    %p136 = scmp.ne.s32.totalorder %s121, %s135
    %p137 = scmp.eq.s32.totalorder %s22, 0
    %p138 = por %p136, %p137
    %s140 = sadd.s32 %s139, 1
    %p143 = scmp.eq.s32.totalorder %s16, 1
    %p144 = scmp.ne.s32.totalorder %s139, %s141
    %p145 = scmp.eq.s32.totalorder %s16, 0
    %p146 = por %p144, %p145
    %p147 = scmp.ne.s32.totalorder %s139, %s141
    %p148 = scmp.eq.s32.totalorder %s21, 1
    %p149 = por %p147, %p148
    %p150 = scmp.ne.s32.totalorder %s141, %s142
    %p151 = scmp.eq.s32.totalorder %s21, 0
    %p152 = por %p150, %p151
    %p153 = scmp.ne.s32.totalorder %s141, %s142
    %p154 = scmp.eq.s32.totalorder %s22, 1
    %p155 = por %p153, %p154
    %p157 = scmp.ne.s32.totalorder %s142, %s156
    %p158 = scmp.eq.s32.totalorder %s22, 0
    %p159 = por %p157, %p158
    %s161 = sadd.s32 %s160, 1
    %p164 = scmp.eq.s32.totalorder %s16, 1
    %p165 = scmp.ne.s32.totalorder %s160, %s162
    %p166 = scmp.eq.s32.totalorder %s16, 0
    %p167 = por %p165, %p166
    %p168 = scmp.ne.s32.totalorder %s160, %s162
    %p169 = scmp.eq.s32.totalorder %s21, 1
    %p170 = por %p168, %p169
    %p171 = scmp.ne.s32.totalorder %s162, %s163
    %p172 = scmp.eq.s32.totalorder %s21, 0
    %p173 = por %p171, %p172
    %p174 = scmp.ne.s32.totalorder %s162, %s163
    %p175 = scmp.eq.s32.totalorder %s22, 1
    %p176 = por %p174, %p175
    %p178 = scmp.ne.s32.totalorder %s163, %s177
    %p179 = scmp.eq.s32.totalorder %s22, 0
    %p180 = por %p178, %p179
    %s182 = sadd.s32 %s181, 1
    %p185 = scmp.eq.s32.totalorder %s16, 1
    %p186 = scmp.ne.s32.totalorder %s181, %s183
    %p187 = scmp.eq.s32.totalorder %s16, 0
    %p188 = por %p186, %p187
    %p189 = scmp.ne.s32.totalorder %s181, %s183
    %p190 = scmp.eq.s32.totalorder %s21, 1
    %p191 = por %p189, %p190
    %p192 = scmp.ne.s32.totalorder %s183, %s184
    %p193 = scmp.eq.s32.totalorder %s21, 0
    %p194 = por %p192, %p193
    %p195 = scmp.ne.s32.totalorder %s183, %s184
    %p196 = scmp.eq.s32.totalorder %s22, 1
    %p197 = por %p195, %p196
    %p199 = scmp.ne.s32.totalorder %s184, %s198
    %p200 = scmp.eq.s32.totalorder %s22, 0
    %p201 = por %p199, %p200
    %s203 = sadd.s32 %s202, 1
    %p206 = scmp.eq.s32.totalorder %s16, 1
    %p207 = scmp.ne.s32.totalorder %s202, %s204
    %p208 = scmp.eq.s32.totalorder %s16, 0
    %p209 = por %p207, %p208
    %p210 = scmp.ne.s32.totalorder %s202, %s204
    %p211 = scmp.eq.s32.totalorder %s21, 1
    %p212 = por %p210, %p211
    %p213 = scmp.ne.s32.totalorder %s204, %s205
    %p214 = scmp.eq.s32.totalorder %s21, 0
    %p215 = por %p213, %p214
    %p216 = scmp.ne.s32.totalorder %s204, %s205
    %p217 = scmp.eq.s32.totalorder %s22, 1
    %p218 = por %p216, %p217
    %p220 = scmp.ne.s32.totalorder %s205, %s219
    %p221 = scmp.eq.s32.totalorder %s22, 0
    %p222 = por %p220, %p221
    %s224 = sadd.s32 %s223, 1
    %p227 = scmp.eq.s32.totalorder %s16, 1
    %p228 = scmp.ne.s32.totalorder %s223, %s225
    %p229 = scmp.eq.s32.totalorder %s16, 0
    %p230 = por %p228, %p229
    %p231 = scmp.ne.s32.totalorder %s223, %s225
    %p232 = scmp.eq.s32.totalorder %s21, 1
    %p233 = por %p231, %p232
    %p234 = scmp.ne.s32.totalorder %s225, %s226
    %p235 = scmp.eq.s32.totalorder %s21, 0
    %p236 = por %p234, %p235
    %p237 = scmp.ne.s32.totalorder %s225, %s226
    %p238 = scmp.eq.s32.totalorder %s22, 1
    %p239 = por %p237, %p238
    %p241 = scmp.ne.s32.totalorder %s226, %s240
    %p242 = scmp.eq.s32.totalorder %s22, 0
    %p243 = por %p241, %p242
    %s244 = ssub.s32 %s16, %s23
    %p245 = scmp.eq.s32.totalorder %s244, 0
    %s247 = sadd.s32 %s246, 1
    %s248 = scalar_select %p245, %s246, %s247
    %p251 = pneg %p245
    %p252 = scmp.eq.s32.totalorder %s16, 1
    %p253 = por %p251, %p252
    %p254 = scmp.ne.s32.totalorder %s246, %s249
    %p255 = scmp.eq.s32.totalorder %s16, 0
    %p256 = por %p254, %p255
    %p257 = scmp.ne.s32.totalorder %s246, %s249
    %p258 = scmp.eq.s32.totalorder %s21, 1
    %p259 = por %p257, %p258
    %p260 = scmp.ne.s32.totalorder %s249, %s250
    %p261 = scmp.eq.s32.totalorder %s21, 0
    %p262 = por %p260, %p261
    %p263 = scmp.ne.s32.totalorder %s249, %s250
    %p264 = scmp.eq.s32.totalorder %s22, 1
    %p265 = por %p263, %p264
    %p267 = scmp.ne.s32.totalorder %s250, %s266
    %p268 = scmp.eq.s32.totalorder %s22, 0
    %p269 = por %p267, %p268
    %p270 = scmp.le.s32.totalorder 1, %s16
    %p271 = scmp.lt.s32.totalorder %s16, 3
    %p272 = pnand %p270, %p271
    %p273 = pneg %p272
    // Predicated region
    $region9: #{gnn_forward.19} parent=5 // pred_check
      _
    $region10: #{gnn_forward.19} parent=5 // pred_check_branch
      %275 = sbr.rel (%p272) target = $region12
    $region11: #{gnn_forward.19} parent=5 // pred_region
      %s276 = ssub.s32 %s16, 1
      // Predicated region
      $region13: #{gnn_forward.19} parent=11 // pred_check
        %p277 = pneg %p89
      $region14: #{gnn_forward.19} parent=11 // pred_check_branch
        %279 = sbr.rel (%p277) target = $region16
      $region15: #{gnn_forward.19} parent=11 // pred_region
        _
      $region16: #{gnn_forward.19} parent=11 // pred_fallthru
        _
      // Predicated region
      $region17: #{gnn_forward.19} parent=11 // pred_check
        %p280 = pneg %p110
      $region18: #{gnn_forward.19} parent=11 // pred_check_branch
        %282 = sbr.rel (%p280) target = $region20
      $region19: #{gnn_forward.19} parent=11 // pred_region
        _
      $region20: #{gnn_forward.19} parent=11 // pred_fallthru
        _
      // Predicated region
      $region21: #{gnn_forward.19} parent=11 // pred_check
        %p283 = pneg %p131
      $region22: #{gnn_forward.19} parent=11 // pred_check_branch
        %285 = sbr.rel (%p283) target = $region24
      $region23: #{gnn_forward.19} parent=11 // pred_region
        _
      $region24: #{gnn_forward.19} parent=11 // pred_fallthru
        _
      // Predicated region
      $region25: #{gnn_forward.19} parent=11 // pred_check
        %p286 = pneg %p152
      $region26: #{gnn_forward.19} parent=11 // pred_check_branch
        %288 = sbr.rel (%p286) target = $region28
      $region27: #{gnn_forward.19} parent=11 // pred_region
        _
      $region28: #{gnn_forward.19} parent=11 // pred_fallthru
        _
      // Predicated region
      $region29: #{gnn_forward.19} parent=11 // pred_check
        %p289 = pneg %p173
      $region30: #{gnn_forward.19} parent=11 // pred_check_branch
        %291 = sbr.rel (%p289) target = $region32
      $region31: #{gnn_forward.19} parent=11 // pred_region
        _
      $region32: #{gnn_forward.19} parent=11 // pred_fallthru
        _
      // Predicated region
      $region33: #{gnn_forward.19} parent=11 // pred_check
        %p292 = pneg %p194
      $region34: #{gnn_forward.19} parent=11 // pred_check_branch
        %294 = sbr.rel (%p292) target = $region36
      $region35: #{gnn_forward.19} parent=11 // pred_region
        _
      $region36: #{gnn_forward.19} parent=11 // pred_fallthru
        _
      // Predicated region
      $region37: #{gnn_forward.19} parent=11 // pred_check
        %p295 = pneg %p215
      $region38: #{gnn_forward.19} parent=11 // pred_check_branch
        %297 = sbr.rel (%p295) target = $region40
      $region39: #{gnn_forward.19} parent=11 // pred_region
        _
      $region40: #{gnn_forward.19} parent=11 // pred_fallthru
        _
      // Predicated region
      $region41: #{gnn_forward.19} parent=11 // pred_check
        %p298 = pneg %p236
      $region42: #{gnn_forward.19} parent=11 // pred_check_branch
        %300 = sbr.rel (%p298) target = $region44
      $region43: #{gnn_forward.19} parent=11 // pred_region
        _
      $region44: #{gnn_forward.19} parent=11 // pred_fallthru
        _
    $region12: #{gnn_forward.19} parent=5 // pred_fallthru
      _
    %p301 = scmp.lt.s32.totalorder %s16, 2
    // Predicated region
    $region45: #{gnn_forward.19} parent=5 // pred_check
      %p302 = pneg %p301
    $region46: #{gnn_forward.19} parent=5 // pred_check_branch
      %304 = sbr.rel (%p302) target = $region48
    $region47: #{gnn_forward.19} parent=5 // pred_region
      // Predicated region
      $region49: #{gnn_forward.19} parent=47 // pred_check
        %p305 = pneg %p36
      $region50: #{gnn_forward.19} parent=47 // pred_check_branch
        %307 = sbr.rel (%p305) target = $region52
      $region51: #{gnn_forward.19} parent=47 // pred_region
        %s308 = smul.u32 6, %s16
        %p309 = scmp.lt.s32.totalorder %s308, 11
        %s310 = scalar_select %p309, %s308, 11
        %s311 = smul.addr %s310, 8
        %s312 = scalar_lea.vmem %s0, %s311
        %s313 = smul.u32 6, %s16
      $region52: #{gnn_forward.19} parent=47 // pred_fallthru
        _
      // Predicated region
      $region53: #{gnn_forward.19} parent=47 // pred_check
        %p314 = pneg %p62
      $region54: #{gnn_forward.19} parent=47 // pred_check_branch
        %316 = sbr.rel (%p314) target = $region56
      $region55: #{gnn_forward.19} parent=47 // pred_region
        %s317 = smul.u32 6, %s16
        %p318 = scmp.lt.s32.totalorder %s317, 11
        %s319 = scalar_select %p318, %s317, 11
        %s320 = smul.addr %s319, 4
        %s321 = scalar_lea.vmem %s1, %s320
        %s322 = smul.u32 6, %s16
      $region56: #{gnn_forward.19} parent=47 // pred_fallthru
        _
    $region48: #{gnn_forward.19} parent=5 // pred_fallthru
      _
    %p323 = scmp.le.s32.totalorder 1, %s16
    %p324 = scmp.lt.s32.totalorder %s16, 3
    %p325 = pnand %p323, %p324
    %p326 = pneg %p325
    // Predicated region
    $region57: #{gnn_forward.19} parent=5 // pred_check
      _
    $region58: #{gnn_forward.19} parent=5 // pred_check_branch
      %328 = sbr.rel (%p325) target = $region60
    $region59: #{gnn_forward.19} parent=5 // pred_region
      %s329 = ssub.s32 %s16, 1
      %s330 = smul.u32 6, %s21
      %p331 = scmp.lt.s32.totalorder %s330, 11
      %s332 = scalar_select %p331, %s330, 11
      %s333 = smul.addr %s332, 8
      %s334 = scalar_lea.vmem %s0, %s333
      %p335 = pneg %p42
      %p336 = pneg %p39
      %s337 = smul.u32 6, %s21
      %p338 = scmp.lt.s32.totalorder %s337, 11
      %s339 = scalar_select %p338, %s337, 11
      %s340 = smul.addr %s339, 4
      %s341 = scalar_lea.vmem %s1, %s340
      %p342 = pneg %p68
      %p343 = pneg %p65
      %p344 = pneg %p89
      %p345 = pneg %p86
      %p346 = pneg %p110
      %p347 = pneg %p107
      %p348 = pneg %p131
      %p349 = pneg %p128
      %p350 = pneg %p152
      %p351 = pneg %p149
      %p352 = pneg %p173
      %p353 = pneg %p170
      %p354 = pneg %p194
      %p355 = pneg %p191
      %p356 = pneg %p215
      %p357 = pneg %p212
      %p358 = pneg %p236
      %p359 = pneg %p233
      %p360 = pneg %p262
      %p361 = pneg %p259
      %s362 = smul.u32 6, %s21
      %p363 = scmp.lt.s32.totalorder %s362, 11
      %s364 = scalar_select %p363, %s362, 11
      %s365 = smul.addr %s364, 4
      %s366 = scalar_lea.vmem %s10, %s365
      %s367 = smul.u32 6, %s21
      %p368 = scmp.lt.s32.totalorder %s367, 11
      %s369 = scalar_select %p368, %s367, 11
      %s370 = smul.addr %s369, 8
      %s371 = scalar_lea.vmem %s0, %s370
      %s372 = smul.u32 6, %s21
      %s373 = smul.u32 6, %s21
      %p374 = scmp.lt.s32.totalorder %s373, 11
      %s375 = scalar_select %p374, %s373, 11
      %s376 = smul.addr %s375, 4
      %s377 = scalar_lea.vmem %s1, %s376
      %s378 = smul.u32 6, %s21
      %s379 = smul.u32 6, %s21
      %p380 = scmp.lt.s32.totalorder %s379, 11
      %s381 = scalar_select %p380, %s379, 11
      %s382 = smul.addr %s381, 4
      %s383 = scalar_lea.vmem %s10, %s382
      %s384 = smul.u32 6, %s21
      %v386 = vld [vmem:[%s371] sm:$0xff]
      %v387 = vld [vmem:[%s371 + $0x8] sm:$0xff]
      %v388 = vld [vmem:[%s371 + $0x10] sm:$0xff]
      %v389 = vld [vmem:[%s371 + $0x18] sm:$0xff]
      %v390 = vld [vmem:[%s371 + $0x20] sm:$0xff]
      %v391 = vld [vmem:[%s371 + $0x28] sm:$0xff]
      %v392 = vld [vmem:[%s2] sm:$0x1]
      %v393 = vld [vmem:[%s3] sm:$0x1]
      %vm394 = vcmask 523264
      %v395 = vsel %vm394, %v386, 0.0
      %396 = vadd.xlane.f32.xlu0 %v395
      %v397 = vpop.xlane.xlu0 %396
      %v398 = vsel %vm394, %v387, 0.0
      %399 = vadd.xlane.f32.xlu0 %v398
      %v400 = vpop.xlane.xlu0 %399
      %v401 = vsel %vm394, %v388, 0.0
      %402 = vadd.xlane.f32.xlu0 %v401
      %v403 = vpop.xlane.xlu0 %402
      %v404 = vsel %vm394, %v389, 0.0
      %405 = vadd.xlane.f32.xlu0 %v404
      %v406 = vpop.xlane.xlu0 %405
      %v407 = vsel %vm394, %v390, 0.0
      %408 = vadd.xlane.f32.xlu0 %v407
      %v409 = vpop.xlane.xlu0 %408
      %v410 = vsel %vm394, %v391, 0.0
      %411 = vadd.xlane.f32.xlu0 %v410
      %v412 = vpop.xlane.xlu0 %411
      %v413 = vrcp.pop 64.0
      %v414 = vmul.f32 64.0, %v413
      %v415 = vsub.f32 1.0, %v414
      %v416 = vmul.f32 %v413, %v415
      %v417 = vadd.f32 %v413, %v416
      %vm418 = vweird.f32 %v413
      %v419 = vsel %vm418, %v413, %v417
      %v420 = vmul.f32 %v397, %v419
      %v421 = vmul.f32 %v400, %v419
      %v422 = vmul.f32 %v403, %v419
      %v423 = vmul.f32 %v406, %v419
      %v424 = vmul.f32 %v409, %v419
      %v425 = vmul.f32 %v412, %v419
      %v426 = vsub.f32 %v386, %v420
      %v427 = vsub.f32 %v387, %v421
      %v428 = vsub.f32 %v388, %v422
      %v429 = vsub.f32 %v389, %v423
      %v430 = vsub.f32 %v390, %v424
      %v431 = vsub.f32 %v391, %v425
      %v432 = vmul.f32 %v426, %v426
      %v433 = vmul.f32 %v427, %v427
      %v434 = vmul.f32 %v428, %v428
      %v435 = vmul.f32 %v429, %v429
      %v436 = vmul.f32 %v430, %v430
      %v437 = vmul.f32 %v431, %v431
      %v438 = vsel %vm394, %v432, 0.0
      %439 = vadd.xlane.f32.xlu0 %v438
      %v440 = vpop.xlane.xlu0 %439
      %v441 = vsel %vm394, %v433, 0.0
      %442 = vadd.xlane.f32.xlu0 %v441
      %v443 = vpop.xlane.xlu0 %442
      %v444 = vsel %vm394, %v434, 0.0
      %445 = vadd.xlane.f32.xlu0 %v444
      %v446 = vpop.xlane.xlu0 %445
      %v447 = vsel %vm394, %v435, 0.0
      %448 = vadd.xlane.f32.xlu0 %v447
      %v449 = vpop.xlane.xlu0 %448
      %v450 = vsel %vm394, %v436, 0.0
      %451 = vadd.xlane.f32.xlu0 %v450
      %v452 = vpop.xlane.xlu0 %451
      %v453 = vsel %vm394, %v437, 0.0
      %454 = vadd.xlane.f32.xlu0 %v453
      %v455 = vpop.xlane.xlu0 %454
      %v456 = vmul.f32 %v440, %v419
      %v457 = vmul.f32 %v443, %v419
      %v458 = vmul.f32 %v446, %v419
      %v459 = vmul.f32 %v449, %v419
      %v460 = vmul.f32 %v452, %v419
      %v461 = vmul.f32 %v455, %v419
      %v462 = vadd.f32 %v456, 1e-05
      %v463 = vadd.f32 %v457, 1e-05
      %v464 = vadd.f32 %v458, 1e-05
      %v465 = vadd.f32 %v459, 1e-05
      %v466 = vadd.f32 %v460, 1e-05
      %v467 = vadd.f32 %v461, 1e-05
      %v468 = vrsqrt.pop %v462
      %v469 = vmul.f32 %v468, %v462
      %v470 = vmul.f32 %v469, %v468
      %v471 = vmul.f32 0.5, %v470
      %v472 = vsub.f32 1.5, %v471
      %v473 = vmul.f32 %v468, %v472
      %vm474 = vweird.f32 %v462
      %vm475 = vweird.f32 %v468
      %vm476 = vmor %vm474, %vm475
      %v477 = vsel %vm476, %v468, %v473
      %v478 = vrsqrt.pop %v463
      %v479 = vmul.f32 %v478, %v463
      %v480 = vmul.f32 %v479, %v478
      %v481 = vmul.f32 0.5, %v480
      %v482 = vsub.f32 1.5, %v481
      %v483 = vmul.f32 %v478, %v482
      %vm484 = vweird.f32 %v463
      %vm485 = vweird.f32 %v478
      %vm486 = vmor %vm484, %vm485
      %v487 = vsel %vm486, %v478, %v483
      %v488 = vrsqrt.pop %v464
      %v489 = vmul.f32 %v488, %v464
      %v490 = vmul.f32 %v489, %v488
      %v491 = vmul.f32 0.5, %v490
      %v492 = vsub.f32 1.5, %v491
      %v493 = vmul.f32 %v488, %v492
      %vm494 = vweird.f32 %v464
      %vm495 = vweird.f32 %v488
      %vm496 = vmor %vm494, %vm495
      %v497 = vsel %vm496, %v488, %v493
      %v498 = vrsqrt.pop %v465
      %v499 = vmul.f32 %v498, %v465
      %v500 = vmul.f32 %v499, %v498
      %v501 = vmul.f32 0.5, %v500
      %v502 = vsub.f32 1.5, %v501
      %v503 = vmul.f32 %v498, %v502
      %vm504 = vweird.f32 %v465
      %vm505 = vweird.f32 %v498
      %vm506 = vmor %vm504, %vm505
      %v507 = vsel %vm506, %v498, %v503
      %v508 = vrsqrt.pop %v466
      %v509 = vmul.f32 %v508, %v466
      %v510 = vmul.f32 %v509, %v508
      %v511 = vmul.f32 0.5, %v510
      %v512 = vsub.f32 1.5, %v511
      %v513 = vmul.f32 %v508, %v512
      %vm514 = vweird.f32 %v466
      %vm515 = vweird.f32 %v508
      %vm516 = vmor %vm514, %vm515
      %v517 = vsel %vm516, %v508, %v513
      %v518 = vrsqrt.pop %v467
      %v519 = vmul.f32 %v518, %v467
      %v520 = vmul.f32 %v519, %v518
      %v521 = vmul.f32 0.5, %v520
      %v522 = vsub.f32 1.5, %v521
      %v523 = vmul.f32 %v518, %v522
      %vm524 = vweird.f32 %v467
      %vm525 = vweird.f32 %v518
      %vm526 = vmor %vm524, %vm525
      %v527 = vsel %vm526, %v518, %v523
      %v528 = vmul.f32 %v426, %v477
      %v529 = vmul.f32 %v427, %v487
      %v530 = vmul.f32 %v428, %v497
      %v531 = vmul.f32 %v429, %v507
      %v532 = vmul.f32 %v430, %v517
      %v533 = vmul.f32 %v431, %v527
      %v535 = vperm.slane %v392, 0
      %v537 = vmul.f32 %v528, %v535
      %v538 = vmul.f32 %v529, %v535
      %v539 = vmul.f32 %v530, %v535
      %v540 = vmul.f32 %v531, %v535
      %v541 = vmul.f32 %v532, %v535
      %v542 = vmul.f32 %v533, %v535
      %v544 = vperm.slane %v393, 0
      %v546 = vadd.f32 %v537, %v544
      %v547 = vadd.f32 %v538, %v544
      %v548 = vadd.f32 %v539, %v544
      %v549 = vadd.f32 %v540, %v544
      %v550 = vadd.f32 %v541, %v544
      %v551 = vadd.f32 %v542, %v544
      %v552 = vld [vmem:[%s377] sm:$0xf]
      %v553 = vld [vmem:[%s377 + $0x4] sm:$0xf]
      %v554 = vld [vmem:[%s377 + $0x8] sm:$0xf]
      %v555 = vld [vmem:[%s377 + $0xc] sm:$0xf]
      %v556 = vld [vmem:[%s377 + $0x10] sm:$0xf]
      %v557 = vld [vmem:[%s377 + $0x14] sm:$0xf]
      %v558 = vunpack.c.l.bf16 %v552
      %v559 = vunpack.c.l.bf16 %v553
      %v560 = vunpack.c.l.bf16 %v554
      %v561 = vunpack.c.l.bf16 %v555
      %v562 = vunpack.c.l.bf16 %v556
      %v563 = vunpack.c.l.bf16 %v557
      %570 = vrot.lane.b32.xlu0 %v558, 64
      %v571 = vpop.permute.xlu0 %570
      %572 = vrot.lane.b32.xlu0 %v559, 64
      %v573 = vpop.permute.xlu0 %572
      %574 = vrot.lane.b32.xlu0 %v560, 64
      %v575 = vpop.permute.xlu0 %574
      %576 = vrot.lane.b32.xlu0 %v561, 64
      %v577 = vpop.permute.xlu0 %576
      %578 = vrot.lane.b32.xlu0 %v562, 64
      %v579 = vpop.permute.xlu0 %578
      %580 = vrot.lane.b32.xlu0 %v563, 64
      %v581 = vpop.permute.xlu0 %580
      %v588 = vsel %vm394, %v546, %v571
      %v589 = vsel %vm394, %v547, %v573
      %v590 = vsel %vm394, %v548, %v575
      %v591 = vsel %vm394, %v549, %v577
      %v592 = vsel %vm394, %v550, %v579
      %v593 = vsel %vm394, %v551, %v581
      %v594 = vpack.c.bf16 %v589, %v588
      %v595 = vpack.c.bf16 %v591, %v590
      %v596 = vpack.c.bf16 %v593, %v592
      %v597 = vld [vmem:[%s4] sm:$0xf]
      %v598 = vld [vmem:[%s4 + $0x4] sm:$0xf]
      %v599 = vld [vmem:[%s4 + $0x8] sm:$0xf]
      %v600 = vld [vmem:[%s4 + $0xc] sm:$0xf]
      %v601 = vld [vmem:[%s4 + $0x10] sm:$0xf]
      %v602 = vld [vmem:[%s4 + $0x14] sm:$0xf]
      %v603 = vld [vmem:[%s4 + $0x18] sm:$0xf]
      %v604 = vld [vmem:[%s4 + $0x1c] sm:$0xf]
      %v605 = vld [vmem:[%s4 + $0x20] sm:$0xf]
      %v606 = vld [vmem:[%s4 + $0x24] sm:$0xf]
      %v607 = vld [vmem:[%s4 + $0x28] sm:$0xf]
      %v608 = vld [vmem:[%s4 + $0x2c] sm:$0xf]
      %v609 = vld [vmem:[%s4 + $0x30] sm:$0xf]
      %v610 = vld [vmem:[%s4 + $0x34] sm:$0xf]
      %v611 = vld [vmem:[%s4 + $0x38] sm:$0xf]
      %v612 = vld [vmem:[%s4 + $0x3c] sm:$0xf]
      %v613 = vld [vmem:[%s5] sm:$0x1]
      %v615 = vperm.slane %v613, 0
      %v633 = vunpack.c.l.b16 %v597
      %v634 = vunpack.c.l.b16 %v598
      %v635 = vunpack.c.l.b16 %v599
      %v636 = vunpack.c.l.b16 %v600
      %v637 = vunpack.c.l.b16 %v601
      %v638 = vunpack.c.l.b16 %v602
      %v639 = vunpack.c.l.b16 %v603
      %v640 = vunpack.c.l.b16 %v604
      %v641 = vunpack.c.l.b16 %v605
      %v642 = vunpack.c.l.b16 %v606
      %v643 = vunpack.c.l.b16 %v607
      %v644 = vunpack.c.l.b16 %v608
      %v645 = vunpack.c.l.b16 %v609
      %v646 = vunpack.c.l.b16 %v610
      %v647 = vunpack.c.l.b16 %v611
      %v648 = vunpack.c.l.b16 %v612
      %v649 = vpack.c.b16 %v634, %v633
      %v650 = vpack.c.b16 %v636, %v635
      %v651 = vpack.c.b16 %v638, %v637
      %v652 = vpack.c.b16 %v640, %v639
      %v653 = vpack.c.b16 %v642, %v641
      %v654 = vpack.c.b16 %v644, %v643
      %v655 = vpack.c.b16 %v646, %v645
      %v656 = vpack.c.b16 %v648, %v647
      %665 = vmatpush.bf16.msra.mxu0 %v656
      %666 = vmatpush.bf16.msra.mxu0 %v655
      %667 = vmatpush.bf16.msra.mxu0 %v654
      %668 = vmatpush.bf16.msra.mxu0 %v653
      %669 = vmatpush.bf16.msra.mxu0 %v652
      %670 = vmatpush.bf16.msra.mxu0 %v651
      %671 = vmatpush.bf16.msra.mxu0 %v650
      %672 = vmatpush.bf16.msra.mxu0 %v649
      %673 = vmatmul.bf16.gmra.mxu0 %v594
      %v674 = vpop.f32.mrf.mxu0
      %v675 = vadd.f32 %v615, %v674
      %v676 = vpop.f32.mrf.mxu0
      %v677 = vadd.f32 %v615, %v676
      %678 = vmatmul.bf16.gmra.mxu0 %v595
      %v679 = vpop.f32.mrf.mxu0
      %v680 = vadd.f32 %v615, %v679
      %v681 = vpop.f32.mrf.mxu0
      %v682 = vadd.f32 %v615, %v681
      %683 = vmatmul.bf16.gmra.mxu0 %v596
      %v684 = vpop.f32.mrf.mxu0
      %v685 = vadd.f32 %v615, %v684
      %v686 = vpop.f32.mrf.mxu0
      %v687 = vadd.f32 %v615, %v686
      %688 = vdwg.mxu0
      %v689 = vmax.f32 %v675, 0.0
      %v690 = vmax.f32 %v677, 0.0
      %v691 = vmax.f32 %v680, 0.0
      %v692 = vmax.f32 %v682, 0.0
      %v693 = vmax.f32 %v685, 0.0
      %v694 = vmax.f32 %v687, 0.0
      %v695 = vpack.c.bf16 %v690, %v689
      %v696 = vpack.c.bf16 %v692, %v691
      %v697 = vpack.c.bf16 %v694, %v693
      %v698 = vld [vmem:[%s6] sm:$0xf]
      %v699 = vld [vmem:[%s6 + $0x4] sm:$0xf]
      %v700 = vld [vmem:[%s6 + $0x8] sm:$0xf]
      %v701 = vld [vmem:[%s6 + $0xc] sm:$0xf]
      %v702 = vld [vmem:[%s6 + $0x10] sm:$0xf]
      %v703 = vld [vmem:[%s6 + $0x14] sm:$0xf]
      %v704 = vld [vmem:[%s6 + $0x18] sm:$0xf]
      %v705 = vld [vmem:[%s6 + $0x1c] sm:$0xf]
      %v706 = vld [vmem:[%s7] sm:$0x1]
      %v708 = vperm.slane %v706, 0
      %v718 = vunpack.c.l.b16 %v698
      %v719 = vunpack.c.l.b16 %v699
      %v720 = vunpack.c.l.b16 %v700
      %v721 = vunpack.c.l.b16 %v701
      %v722 = vunpack.c.l.b16 %v702
      %v723 = vunpack.c.l.b16 %v703
      %v724 = vunpack.c.l.b16 %v704
      %v725 = vunpack.c.l.b16 %v705
      %v726 = vpack.c.b16 %v719, %v718
      %v727 = vpack.c.b16 %v721, %v720
      %v728 = vpack.c.b16 %v723, %v722
      %v729 = vpack.c.b16 %v725, %v724
      %v735 = vsel %vm394, %v695, 0
      %v738 = vsel %vm394, %v696, 0
      %v741 = vsel %vm394, %v697, 0
      %743 = vmatpush.bf16.msra.mxu0 0
      %744 = vmatpush.bf16.msra.mxu0 0
      %745 = vmatpush.bf16.msra.mxu0 0
      %746 = vmatpush.bf16.msra.mxu0 0
      %747 = vmatpush.bf16.msra.mxu0 %v729
      %748 = vmatpush.bf16.msra.mxu0 %v728
      %749 = vmatpush.bf16.msra.mxu0 %v727
      %750 = vmatpush.bf16.msra.mxu0 %v726
      %751 = vmatmul.bf16.gmra.mxu0 %v735
      %v752 = vpop.f32.mrf.mxu0
      %v753 = vadd.f32 %v708, %v752
      %v754 = vpop.f32.mrf.mxu0
      %v755 = vadd.f32 %v708, %v754
      %756 = vmatmul.bf16.gmra.mxu0 %v738
      %v757 = vpop.f32.mrf.mxu0
      %v758 = vadd.f32 %v708, %v757
      %v759 = vpop.f32.mrf.mxu0
      %v760 = vadd.f32 %v708, %v759
      %761 = vmatmul.bf16.gmra.mxu0 %v741
      %v762 = vpop.f32.mrf.mxu0
      %v763 = vadd.f32 %v708, %v762
      %v764 = vpop.f32.mrf.mxu0
      %v765 = vadd.f32 %v708, %v764
      %766 = vdwg.mxu0
      %v767 = vpack.c.bf16 %v755, %v753
      %v768 = vpack.c.bf16 %v760, %v758
      %v769 = vpack.c.bf16 %v765, %v763
      %v770 = vld [vmem:[%s8] sm:$0xf]
      %v771 = vld [vmem:[%s8 + $0x4] sm:$0xf]
      %v772 = vld [vmem:[%s8 + $0x8] sm:$0xf]
      %v773 = vld [vmem:[%s8 + $0xc] sm:$0xf]
      %v774 = vld [vmem:[%s8 + $0x10] sm:$0xf]
      %v775 = vld [vmem:[%s8 + $0x14] sm:$0xf]
      %v776 = vld [vmem:[%s8 + $0x18] sm:$0xf]
      %v777 = vld [vmem:[%s8 + $0x1c] sm:$0xf]
      %v778 = vld [vmem:[%s9] sm:$0x1]
      %v780 = vperm.slane %v778, 0
      %v790 = vunpack.c.l.b16 %v770
      %v791 = vunpack.c.l.b16 %v771
      %v792 = vunpack.c.l.b16 %v772
      %v793 = vunpack.c.l.b16 %v773
      %v794 = vunpack.c.l.b16 %v774
      %v795 = vunpack.c.l.b16 %v775
      %v796 = vunpack.c.l.b16 %v776
      %v797 = vunpack.c.l.b16 %v777
      %v798 = vpack.c.b16 %v791, %v790
      %v799 = vpack.c.b16 %v793, %v792
      %v800 = vpack.c.b16 %v795, %v794
      %v801 = vpack.c.b16 %v797, %v796
      %v807 = vsel %vm394, %v767, 0
      %v810 = vsel %vm394, %v768, 0
      %v813 = vsel %vm394, %v769, 0
      %815 = vmatpush.bf16.msra.mxu0 0
      %816 = vmatpush.bf16.msra.mxu0 0
      %817 = vmatpush.bf16.msra.mxu0 0
      %818 = vmatpush.bf16.msra.mxu0 0
      %819 = vmatpush.bf16.msra.mxu0 %v801
      %820 = vmatpush.bf16.msra.mxu0 %v800
      %821 = vmatpush.bf16.msra.mxu0 %v799
      %822 = vmatpush.bf16.msra.mxu0 %v798
      %823 = vmatmul.bf16.gmra.mxu0 %v807
      %v824 = vpop.f32.mrf.mxu0
      %v825 = vadd.f32 %v780, %v824
      %v826 = vpop.f32.mrf.mxu0
      %v827 = vadd.f32 %v780, %v826
      %828 = vmatmul.bf16.gmra.mxu0 %v810
      %v829 = vpop.f32.mrf.mxu0
      %v830 = vadd.f32 %v780, %v829
      %v831 = vpop.f32.mrf.mxu0
      %v832 = vadd.f32 %v780, %v831
      %833 = vmatmul.bf16.gmra.mxu0 %v813
      %v834 = vpop.f32.mrf.mxu0
      %v835 = vadd.f32 %v780, %v834
      %v836 = vpop.f32.mrf.mxu0
      %v837 = vadd.f32 %v780, %v836
      %838 = vdwg.mxu0
      %v839 = vmax.f32 %v825, 0.0
      %v840 = vmax.f32 %v827, 0.0
      %v841 = vmax.f32 %v830, 0.0
      %v842 = vmax.f32 %v832, 0.0
      %v843 = vmax.f32 %v835, 0.0
      %v844 = vmax.f32 %v837, 0.0
      %v845 = vpack.c.bf16 %v839, %v839
      %v846 = vpack.c.bf16 %v840, %v840
      %v847 = vpack.c.bf16 %v841, %v841
      %v848 = vpack.c.bf16 %v842, %v842
      %v849 = vpack.c.bf16 %v843, %v843
      %v850 = vpack.c.bf16 %v844, %v844
      %vm851 = vcmask 519168
      %852 = vst.msk [vmem:[%s383] sm:$0xf] %vm851, %v845
      %853 = vst.msk [vmem:[%s383 + $0x4] sm:$0xf] %vm851, %v846
      %854 = vst.msk [vmem:[%s383 + $0x8] sm:$0xf] %vm851, %v847
      %855 = vst.msk [vmem:[%s383 + $0xc] sm:$0xf] %vm851, %v848
      %856 = vst.msk [vmem:[%s383 + $0x10] sm:$0xf] %vm851, %v849
      %857 = vst.msk [vmem:[%s383 + $0x14] sm:$0xf] %vm851, %v850
      %s858 = smul.u32 6, %s21
      %p859 = scmp.lt.s32.totalorder %s858, 11
      %s860 = scalar_select %p859, %s858, 11
      %s861 = smul.addr %s860, 4
      %s862 = scalar_lea.vmem %s10, %s861
      // Predicated region
      $region61: #{gnn_forward.19} parent=59 // pred_check
        %p863 = pneg %p259
      $region62: #{gnn_forward.19} parent=59 // pred_check_branch
        %865 = sbr.rel (%p863) target = $region64
      $region63: #{gnn_forward.19} parent=59 // pred_region
        %s866 = smul.u32 6, %s21
      $region64: #{gnn_forward.19} parent=59 // pred_fallthru
        _
    $region60: #{gnn_forward.19} parent=5 // pred_fallthru
      _
    %p867 = scmp.le.s32.totalorder 2, %s16
    // Predicated region
    $region65: #{gnn_forward.19} parent=5 // pred_check
      %p868 = pneg %p867
    $region66: #{gnn_forward.19} parent=5 // pred_check_branch
      %870 = sbr.rel (%p868) target = $region68
    $region67: #{gnn_forward.19} parent=5 // pred_region
      %s871 = ssub.s32 %s16, 2
      // Predicated region
      $region69: #{gnn_forward.19} parent=67 // pred_check
        %p872 = pneg %p265
      $region70: #{gnn_forward.19} parent=67 // pred_check_branch
        %874 = sbr.rel (%p872) target = $region72
      $region71: #{gnn_forward.19} parent=67 // pred_region
        %s875 = smul.u32 6, %s22
        %p876 = scmp.lt.s32.totalorder %s875, 11
        %s877 = scalar_select %p876, %s875, 11
        %s878 = smul.addr %s877, 4
        %s879 = scalar_lea.vmem %s10, %s878
      $region72: #{gnn_forward.19} parent=67 // pred_fallthru
        _
    $region68: #{gnn_forward.19} parent=5 // pred_fallthru
      _
  $region6: #{gnn_forward.19} parent=0 // loop_footer
    %s20 = sadd.s32 1, %s16
  $region7: #{gnn_forward.19} parent=0 // loop_footer_branch
    %15 = sbr.rel target = $region3
  $region8: #{gnn_forward.19} parent=0 // loop_exit
    _

</llo_original>
